<compile_context>
chip_gen: v7x
topology: tpu7x:2x2x1
jax: 0.10.0
libtpu: 0.0.40
codegen_flags: <defaults>
</compile_context>

<pallas_src>
import functools

import jax
import jax.numpy as jnp
from jax.experimental import pallas as pl
from jax.experimental.pallas import tpu as pltpu

_LANE = 128
_HIDDEN = 128  # fixed intermediate channel count of the PyTorch module


def _round_up(x, m):
    return ((x + m - 1) // m) * m


# ---------------------------------------------------------------------------
# Fused kernel: per batch image
#   hidden = PReLU(patches @ w1 + b1) * interior_mask          (bf16, in VMEM)
#   out    = PReLU(sum_{9 taps} shift(hidden) @ w2[tap] + b2)  (stored to HBM)
# The hidden is stored flat over the zero-padded (H+2, W+2) grid (+2 guard
# rows), so a conv2 tap (dy,dx) is a single flat row shift of dy*(W+2)+dx.
# ---------------------------------------------------------------------------
def _double_conv_kernel(p_ref, mask_ref, w1_ref, b1_ref, w2_ref, b2_ref,
                        a_ref, o_ref, hid_ref, *, wp2):
    # p_ref:    (1, Lp, Kp)    bf16  im2col patches over the padded hidden grid
    # mask_ref: (Lp, 1)        f32   1.0 on interior rows, 0.0 on ring/guards
    # w1_ref:   (Kp, 128)      bf16
    # b1_ref:   (1, 128)       f32
    # w2_ref:   (9, 128, Coutp) bf16
    # b2_ref:   (1, Coutp)     f32
    # a_ref:    (2,)           f32 in SMEM  (alpha1, alpha2)
    # o_ref:    (1, hw2, Coutp)             hw2 = H*(W+2); junk cols sliced later
    # hid_ref:  (Lp, 128)      bf16 VMEM scratch (the fused hidden activation)
    hw2 = o_ref.shape[1]

    # ---- conv1 + PReLU -> padded/flat hidden in VMEM -------------------
    h = jnp.dot(p_ref[0], w1_ref[...], preferred_element_type=jnp.float32)
    h = h + b1_ref[...]
    a1 = a_ref[0]
    h = jnp.where(h > 0, h, a1 * h)          # PReLU (f32 epilogue)
    h = h * mask_ref[...]                    # zero the padding ring + guards
    hid_ref[...] = h.astype(hid_ref.dtype)

    # ---- conv2: 9 shifted accumulating matmuls, bias folded in ---------
    acc = jnp.dot(hid_ref[pl.ds(0, hw2), :], w2_ref[0],
                  preferred_element_type=jnp.float32)
    for t in range(1, 9):
        shift = (t // 3) * wp2 + (t % 3)
        acc = acc + jnp.dot(hid_ref[pl.ds(shift, hw2), :], w2_ref[t],
                            preferred_element_type=jnp.float32)
    acc = acc + b2_ref[...]
    a2 = a_ref[1]
    acc = jnp.where(acc > 0, acc, a2 * acc)  # PReLU (f32 epilogue)
    o_ref[0] = acc.astype(o_ref.dtype)


def double_conv_fused(x_nhwc, w1, b1, a1, w2, b2, a2, *,
                      out_dtype=jnp.float32):
    """Fused 3x3 conv(Cin->128)+PReLU -> 3x3 conv(128->Cout)+PReLU (NHWC)."""
    N, H, W, Cin = x_nhwc.shape
    assert w1.shape == (3, 3, Cin, _HIDDEN)
    Cout = w2.shape[-1]
    assert w2.shape == (3, 3, _HIDDEN, Cout)

    wp2 = W + 2
    Lh = (H + 2) * wp2                  # flat rows of the padded hidden grid
    Lp = _round_up(Lh + 2, 8)           # + 2 guard rows for the shifted reads
    hw2 = H * wp2                       # conv2 output rows (incl. junk cols)
    Kp = _round_up(9 * Cin, _LANE)      # lane-pad conv1 contraction dim
    Coutp = _round_up(Cout, _LANE)      # lane-pad output channels

    # im2col over the padded hidden grid: double-pad the (small-Cin) input and
    # take the 9 shifted views.  Cheap: the input is the smallest tensor here.
    xb = x_nhwc.astype(jnp.bfloat16)
    xp2 = jnp.pad(xb, ((0, 0), (2, 2), (2, 2), (0, 0)))
    cols = [xp2[:, dy:dy + H + 2, dx:dx + W + 2, :]
            for dy in range(3) for dx in range(3)]
    patches = jnp.concatenate(cols, axis=-1).reshape(N, Lh, 9 * Cin)
    patches = jnp.pad(patches, ((0, 0), (0, Lp - Lh), (0, Kp - 9 * Cin)))

    # Interior mask over the padded hidden grid (ring + guard rows -> 0).
    r = jnp.arange(Lp)
    hh, ww = r // wp2, r % wp2
    interior = (hh >= 1) & (hh <= H) & (ww >= 1) & (ww <= W)
    mask = interior.astype(jnp.float32).reshape(Lp, 1)

    w1m = jnp.pad(w1.reshape(9 * Cin, _HIDDEN),
                  ((0, Kp - 9 * Cin), (0, 0))).astype(jnp.bfloat16)
    b1r = b1.reshape(1, _HIDDEN).astype(jnp.float32)
    w2m = jnp.pad(w2.reshape(9, _HIDDEN, Cout),
                  ((0, 0), (0, 0), (0, Coutp - Cout))).astype(jnp.bfloat16)
    b2r = jnp.pad(b2.astype(jnp.float32), (0, Coutp - Cout)).reshape(1, Coutp)
    alphas = jnp.stack([jnp.asarray(a1, jnp.float32),
                        jnp.asarray(a2, jnp.float32)])

    out_itemsize = jnp.dtype(out_dtype).itemsize
    # VMEM budget for this block layout (double-buffered in/out + scratch).
    patch_blk = Lp * Kp * 2
    out_blk = hw2 * Coutp * out_itemsize
    weights = (Kp * _HIDDEN + 9 * _HIDDEN * Coutp) * 2 + (Lp + _HIDDEN + Coutp) * 4
    acc_bytes = hw2 * Coutp * 4
    need = 2 * (patch_blk + out_blk) + Lp * _HIDDEN * 2 + weights + 2 * acc_bytes
    vmem_limit = int(min(max(need + (4 << 20), 16 << 20), 56 << 20))

    cost = pl.CostEstimate(
        flops=2 * N * Lp * Kp * _HIDDEN + 2 * N * hw2 * 9 * _HIDDEN * Coutp,
        transcendentals=0,
        bytes_accessed=(N * patch_blk + Lp * 4 + weights
                        + N * hw2 * Coutp * out_itemsize))

    kernel = functools.partial(_double_conv_kernel, wp2=wp2)

    out = pl.pallas_call(
        kernel,
        out_shape=jax.ShapeDtypeStruct((N, hw2, Coutp), out_dtype),
        grid_spec=pltpu.PrefetchScalarGridSpec(
            num_scalar_prefetch=0,
            grid=(N,),
            in_specs=[
                pl.BlockSpec((1, Lp, Kp), lambda n: (n, 0, 0)),       # patches
                pl.BlockSpec((Lp, 1), lambda n: (0, 0)),              # mask
                pl.BlockSpec((Kp, _HIDDEN), lambda n: (0, 0)),        # w1
                pl.BlockSpec((1, _HIDDEN), lambda n: (0, 0)),         # b1
                pl.BlockSpec((9, _HIDDEN, Coutp), lambda n: (0, 0, 0)),  # w2
                pl.BlockSpec((1, Coutp), lambda n: (0, 0)),           # b2
                pl.BlockSpec(memory_space=pltpu.MemorySpace.SMEM),    # alphas
            ],
            out_specs=pl.BlockSpec((1, hw2, Coutp), lambda n: (n, 0, 0)),
            scratch_shapes=[pltpu.VMEM((Lp, _HIDDEN), jnp.bfloat16)],
        ),
        compiler_params=pltpu.CompilerParams(
            dimension_semantics=("parallel",),
            vmem_limit_bytes=vmem_limit),
        cost_estimate=cost,
    )(patches, mask, w1m, b1r, w2m, b2r, alphas)

    # Drop the 2 junk width columns and the channel padding (this slice fuses
    # with the caller's NHWC->NCHW transpose).
    return out.reshape(N, H, wp2, Coutp)[:, :, :W, :Cout]


# ---------------------------------------------------------------------------
# Module wrapper (NCHW in / NCHW out, like the PyTorch DoubleConv).
# ---------------------------------------------------------------------------
class DoubleConvPallas:
    HIDDEN = _HIDDEN

    def __init__(self, input_channels, output_channels, key):
        k1, k2, k3, k4 = jax.random.split(key, 4)
        h = self.HIDDEN
        s1 = 1.0 / (input_channels * 9) ** 0.5
        s2 = 1.0 / (h * 9) ** 0.5
        # Weights stored as (kh, kw, Cin, Cout) to match the im2col /
        # shifted-matmul column order.
        self.w1 = jax.random.uniform(k1, (3, 3, input_channels, h),
                                     jnp.float32, -s1, s1)
        self.b1 = jax.random.uniform(k2, (h,), jnp.float32, -s1, s1)
        self.w2 = jax.random.uniform(k3, (3, 3, h, output_channels),
                                     jnp.float32, -s2, s2)
        self.b2 = jax.random.uniform(k4, (output_channels,), jnp.float32,
                                     -s2, s2)
        # nn.PReLU() default: one shared slope per layer, initialized to 0.25.
        self.a1 = jnp.float32(0.25)
        self.a2 = jnp.float32(0.25)

    def __call__(self, x_nchw, *, out_dtype=jnp.float32):
        x = jnp.transpose(x_nchw, (0, 2, 3, 1))                   # NHWC
        y = double_conv_fused(x, self.w1, self.b1, self.a1,
                              self.w2, self.b2, self.a2,
                              out_dtype=out_dtype)
        return jnp.transpose(y, (0, 3, 1, 2))                     # NCHW


def _reference_forward(model, x_nchw):
    """Pure-JAX f32 reference (XLA conv) for correctness checking."""
    x = jnp.transpose(x_nchw, (0, 2, 3, 1))

    def conv(x, w, b, a):
        y = jax.lax.conv_general_dilated(
            x, w, window_strides=(1, 1), padding="SAME",
            dimension_numbers=("NHWC", "HWIO", "NHWC"))
        y = y + b
        return jnp.where(y > 0, y, a * y)

    x = conv(x, model.w1, model.b1, model.a1)
    x = conv(x, model.w2, model.b2, model.a2)
    return jnp.transpose(x, (0, 3, 1, 2))


if __name__ == "__main__":
    key = jax.random.PRNGKey(0)
    k_param, k_x = jax.random.split(key)

    input_channels, output_channels = 4, 64
    N, H, W = 2, 16, 16

    model = DoubleConvPallas(input_channels, output_channels, k_param)
    x = jax.random.normal(k_x, (N, input_channels, H, W), jnp.float32)

    forward = jax.jit(lambda inp: model(inp))
    out = jax.block_until_ready(forward(x))
    assert out.shape == (N, output_channels, H, W), out.shape

    ref = jax.block_until_ready(_reference_forward(model, x))
    max_err = float(jnp.max(jnp.abs(out - ref)))
    assert jnp.allclose(out, ref, rtol=2e-2, atol=2e-2), max_err

    print("KERNEL_OK")
</pallas_src>

<mosaic_0001>
module attributes {stable_mosaic.version = 11 : i64} {
  func.func @_double_conv_kernel(%arg0: i32, %arg1: memref<1x328x128xbf16, #tpu.memory_space<vmem>>, %arg2: memref<328x1xf32, #tpu.memory_space<vmem>>, %arg3: memref<128x128xbf16, #tpu.memory_space<vmem>>, %arg4: memref<1x128xf32, #tpu.memory_space<vmem>>, %arg5: memref<9x128x128xbf16, #tpu.memory_space<vmem>>, %arg6: memref<1x128xf32, #tpu.memory_space<vmem>>, %arg7: memref<2xf32, #tpu.memory_space<smem>>, %arg8: memref<1x288x128xf32, #tpu.memory_space<vmem>>, %arg9: memref<328x128xbf16, #tpu.memory_space<vmem>>) attributes {dimension_semantics = [#tpu.dimension_semantics<parallel>], iteration_bounds = array<i64: 2>, scalar_prefetch = 0 : i64, scratch_operands = 1 : i64, tpu.core_type = #tpu.core_type<tc>, window_params = [{transform_indices = @transform_0, window_bounds = array<i64: 1, 328, 128>}, {pipeline_mode = #tpu.pipeline_mode<synchronous>, transform_indices = @transform_1, window_bounds = array<i64: 328, 1>}, {pipeline_mode = #tpu.pipeline_mode<synchronous>, transform_indices = @transform_2, window_bounds = array<i64: 128, 128>}, {pipeline_mode = #tpu.pipeline_mode<synchronous>, transform_indices = @transform_3, window_bounds = array<i64: 1, 128>}, {pipeline_mode = #tpu.pipeline_mode<synchronous>, transform_indices = @transform_4, window_bounds = array<i64: 9, 128, 128>}, {pipeline_mode = #tpu.pipeline_mode<synchronous>, transform_indices = @transform_5, window_bounds = array<i64: 1, 128>}, {transform_indices = @transform_6, window_bounds = array<i64: 2>}, {transform_indices = @transform_7, window_bounds = array<i64: 1, 288, 128>}]} {
    %c0 = arith.constant 0 : index
    %c0_0 = arith.constant 0 : index
    %c0_1 = arith.constant 0 : index
    %0 = vector.load %arg1[%c0, %c0_0, %c0_1] : memref<1x328x128xbf16, #tpu.memory_space<vmem>>, vector<1x328x128xbf16>
    %1 = vector.shape_cast %0 : vector<1x328x128xbf16> to vector<328x128xbf16>
    %c0_2 = arith.constant 0 : index
    %c0_3 = arith.constant 0 : index
    %2 = vector.load %arg3[%c0_2, %c0_3] : memref<128x128xbf16, #tpu.memory_space<vmem>>, vector<128x128xbf16>
    %cst = arith.constant dense<0.000000e+00> : vector<328x128xf32>
    %3 = tpu.matmul %1, %2, %cst {dimension_numbers = #tpu.dot_dimension_numbers<[1], [0], [0], [1], [0, 0, 1, 1], [], []>} : vector<328x128xbf16>, vector<128x128xbf16>, vector<328x128xf32> -> vector<328x128xf32>
    %c0_4 = arith.constant 0 : index
    %c0_5 = arith.constant 0 : index
    %4 = vector.load %arg4[%c0_4, %c0_5] : memref<1x128xf32, #tpu.memory_space<vmem>>, vector<1x128xf32>
    %5 = vector.broadcast %4 : vector<1x128xf32> to vector<328x128xf32>
    %6 = arith.addf %3, %5 : vector<328x128xf32>
    %c0_6 = arith.constant 0 : index
    %7 = memref.load %arg7[%c0_6] : memref<2xf32, #tpu.memory_space<smem>>
    %cst_7 = arith.constant 0.000000e+00 : f32
    %8 = vector.broadcast %cst_7 : f32 to vector<328x128xf32>
    %9 = arith.cmpf ogt, %6, %8 : vector<328x128xf32>
    %10 = vector.broadcast %7 : f32 to vector<328x128xf32>
    %11 = arith.mulf %10, %6 : vector<328x128xf32>
    %12 = arith.select %9, %6, %11 : vector<328x128xi1>, vector<328x128xf32>
    %c0_8 = arith.constant 0 : index
    %c0_9 = arith.constant 0 : index
    %13 = vector.load %arg2[%c0_8, %c0_9] : memref<328x1xf32, #tpu.memory_space<vmem>>, vector<328x1xf32>
    %14 = vector.broadcast %13 : vector<328x1xf32> to vector<328x128xf32>
    %15 = arith.mulf %12, %14 : vector<328x128xf32>
    %16 = arith.truncf %15 : vector<328x128xf32> to vector<328x128xbf16>
    %c0_10 = arith.constant 0 : index
    %c0_11 = arith.constant 0 : index
    %17 = vector.load %arg9[%c0_10, %c0_11] : memref<328x128xbf16, #tpu.memory_space<vmem>>, vector<328x128xbf16>
    tpu.vector_store %arg9[%c0_10, %c0_11], %16 {strides = array<i32>} : memref<328x128xbf16, #tpu.memory_space<vmem>>, vector<328x128xbf16>,
    %c0_12 = arith.constant 0 : index
    %c0_13 = arith.constant 0 : index
    %18 = vector.load %arg9[%c0_12, %c0_13] : memref<328x128xbf16, #tpu.memory_space<vmem>>, vector<288x128xbf16>
    %c0_14 = arith.constant 0 : index
    %c0_15 = arith.constant 0 : index
    %c0_16 = arith.constant 0 : index
    %19 = vector.load %arg5[%c0_14, %c0_15, %c0_16] : memref<9x128x128xbf16, #tpu.memory_space<vmem>>, vector<1x128x128xbf16>
    %20 = vector.shape_cast %19 : vector<1x128x128xbf16> to vector<128x128xbf16>
    %cst_17 = arith.constant dense<0.000000e+00> : vector<288x128xf32>
    %21 = tpu.matmul %18, %20, %cst_17 {dimension_numbers = #tpu.dot_dimension_numbers<[1], [0], [0], [1], [0, 0, 1, 1], [], []>} : vector<288x128xbf16>, vector<128x128xbf16>, vector<288x128xf32> -> vector<288x128xf32>
    %c1 = arith.constant 1 : index
    %c0_18 = arith.constant 0 : index
    %22 = vector.load %arg9[%c1, %c0_18] : memref<328x128xbf16, #tpu.memory_space<vmem>>, vector<288x128xbf16>
    %c1_19 = arith.constant 1 : index
    %c0_20 = arith.constant 0 : index
    %c0_21 = arith.constant 0 : index
    %23 = vector.load %arg5[%c1_19, %c0_20, %c0_21] : memref<9x128x128xbf16, #tpu.memory_space<vmem>>, vector<1x128x128xbf16>
    %24 = vector.shape_cast %23 : vector<1x128x128xbf16> to vector<128x128xbf16>
    %cst_22 = arith.constant dense<0.000000e+00> : vector<288x128xf32>
    %25 = tpu.matmul %22, %24, %cst_22 {dimension_numbers = #tpu.dot_dimension_numbers<[1], [0], [0], [1], [0, 0, 1, 1], [], []>} : vector<288x128xbf16>, vector<128x128xbf16>, vector<288x128xf32> -> vector<288x128xf32>
    %26 = arith.addf %21, %25 : vector<288x128xf32>
    %c2 = arith.constant 2 : index
    %c0_23 = arith.constant 0 : index
    %27 = vector.load %arg9[%c2, %c0_23] : memref<328x128xbf16, #tpu.memory_space<vmem>>, vector<288x128xbf16>
    %c2_24 = arith.constant 2 : index
    %c0_25 = arith.constant 0 : index
    %c0_26 = arith.constant 0 : index
    %28 = vector.load %arg5[%c2_24, %c0_25, %c0_26] : memref<9x128x128xbf16, #tpu.memory_space<vmem>>, vector<1x128x128xbf16>
    %29 = vector.shape_cast %28 : vector<1x128x128xbf16> to vector<128x128xbf16>
    %cst_27 = arith.constant dense<0.000000e+00> : vector<288x128xf32>
    %30 = tpu.matmul %27, %29, %cst_27 {dimension_numbers = #tpu.dot_dimension_numbers<[1], [0], [0], [1], [0, 0, 1, 1], [], []>} : vector<288x128xbf16>, vector<128x128xbf16>, vector<288x128xf32> -> vector<288x128xf32>
    %31 = arith.addf %26, %30 : vector<288x128xf32>
    %c18 = arith.constant 18 : index
    %c0_28 = arith.constant 0 : index
    %32 = vector.load %arg9[%c18, %c0_28] : memref<328x128xbf16, #tpu.memory_space<vmem>>, vector<288x128xbf16>
    %c3 = arith.constant 3 : index
    %c0_29 = arith.constant 0 : index
    %c0_30 = arith.constant 0 : index
    %33 = vector.load %arg5[%c3, %c0_29, %c0_30] : memref<9x128x128xbf16, #tpu.memory_space<vmem>>, vector<1x128x128xbf16>
    %34 = vector.shape_cast %33 : vector<1x128x128xbf16> to vector<128x128xbf16>
    %cst_31 = arith.constant dense<0.000000e+00> : vector<288x128xf32>
    %35 = tpu.matmul %32, %34, %cst_31 {dimension_numbers = #tpu.dot_dimension_numbers<[1], [0], [0], [1], [0, 0, 1, 1], [], []>} : vector<288x128xbf16>, vector<128x128xbf16>, vector<288x128xf32> -> vector<288x128xf32>
    %36 = arith.addf %31, %35 : vector<288x128xf32>
    %c19 = arith.constant 19 : index
    %c0_32 = arith.constant 0 : index
    %37 = vector.load %arg9[%c19, %c0_32] : memref<328x128xbf16, #tpu.memory_space<vmem>>, vector<288x128xbf16>
    %c4 = arith.constant 4 : index
    %c0_33 = arith.constant 0 : index
    %c0_34 = arith.constant 0 : index
    %38 = vector.load %arg5[%c4, %c0_33, %c0_34] : memref<9x128x128xbf16, #tpu.memory_space<vmem>>, vector<1x128x128xbf16>
    %39 = vector.shape_cast %38 : vector<1x128x128xbf16> to vector<128x128xbf16>
    %cst_35 = arith.constant dense<0.000000e+00> : vector<288x128xf32>
    %40 = tpu.matmul %37, %39, %cst_35 {dimension_numbers = #tpu.dot_dimension_numbers<[1], [0], [0], [1], [0, 0, 1, 1], [], []>} : vector<288x128xbf16>, vector<128x128xbf16>, vector<288x128xf32> -> vector<288x128xf32>
    %41 = arith.addf %36, %40 : vector<288x128xf32>
    %c20 = arith.constant 20 : index
    %c0_36 = arith.constant 0 : index
    %42 = vector.load %arg9[%c20, %c0_36] : memref<328x128xbf16, #tpu.memory_space<vmem>>, vector<288x128xbf16>
    %c5 = arith.constant 5 : index
    %c0_37 = arith.constant 0 : index
    %c0_38 = arith.constant 0 : index
    %43 = vector.load %arg5[%c5, %c0_37, %c0_38] : memref<9x128x128xbf16, #tpu.memory_space<vmem>>, vector<1x128x128xbf16>
    %44 = vector.shape_cast %43 : vector<1x128x128xbf16> to vector<128x128xbf16>
    %cst_39 = arith.constant dense<0.000000e+00> : vector<288x128xf32>
    %45 = tpu.matmul %42, %44, %cst_39 {dimension_numbers = #tpu.dot_dimension_numbers<[1], [0], [0], [1], [0, 0, 1, 1], [], []>} : vector<288x128xbf16>, vector<128x128xbf16>, vector<288x128xf32> -> vector<288x128xf32>
    %46 = arith.addf %41, %45 : vector<288x128xf32>
    %c36 = arith.constant 36 : index
    %c0_40 = arith.constant 0 : index
    %47 = vector.load %arg9[%c36, %c0_40] : memref<328x128xbf16, #tpu.memory_space<vmem>>, vector<288x128xbf16>
    %c6 = arith.constant 6 : index
    %c0_41 = arith.constant 0 : index
    %c0_42 = arith.constant 0 : index
    %48 = vector.load %arg5[%c6, %c0_41, %c0_42] : memref<9x128x128xbf16, #tpu.memory_space<vmem>>, vector<1x128x128xbf16>
    %49 = vector.shape_cast %48 : vector<1x128x128xbf16> to vector<128x128xbf16>
    %cst_43 = arith.constant dense<0.000000e+00> : vector<288x128xf32>
    %50 = tpu.matmul %47, %49, %cst_43 {dimension_numbers = #tpu.dot_dimension_numbers<[1], [0], [0], [1], [0, 0, 1, 1], [], []>} : vector<288x128xbf16>, vector<128x128xbf16>, vector<288x128xf32> -> vector<288x128xf32>
    %51 = arith.addf %46, %50 : vector<288x128xf32>
    %c37 = arith.constant 37 : index
    %c0_44 = arith.constant 0 : index
    %52 = vector.load %arg9[%c37, %c0_44] : memref<328x128xbf16, #tpu.memory_space<vmem>>, vector<288x128xbf16>
    %c7 = arith.constant 7 : index
    %c0_45 = arith.constant 0 : index
    %c0_46 = arith.constant 0 : index
    %53 = vector.load %arg5[%c7, %c0_45, %c0_46] : memref<9x128x128xbf16, #tpu.memory_space<vmem>>, vector<1x128x128xbf16>
    %54 = vector.shape_cast %53 : vector<1x128x128xbf16> to vector<128x128xbf16>
    %cst_47 = arith.constant dense<0.000000e+00> : vector<288x128xf32>
    %55 = tpu.matmul %52, %54, %cst_47 {dimension_numbers = #tpu.dot_dimension_numbers<[1], [0], [0], [1], [0, 0, 1, 1], [], []>} : vector<288x128xbf16>, vector<128x128xbf16>, vector<288x128xf32> -> vector<288x128xf32>
    %56 = arith.addf %51, %55 : vector<288x128xf32>
    %c38 = arith.constant 38 : index
    %c0_48 = arith.constant 0 : index
    %57 = vector.load %arg9[%c38, %c0_48] : memref<328x128xbf16, #tpu.memory_space<vmem>>, vector<288x128xbf16>
    %c8 = arith.constant 8 : index
    %c0_49 = arith.constant 0 : index
    %c0_50 = arith.constant 0 : index
    %58 = vector.load %arg5[%c8, %c0_49, %c0_50] : memref<9x128x128xbf16, #tpu.memory_space<vmem>>, vector<1x128x128xbf16>
    %59 = vector.shape_cast %58 : vector<1x128x128xbf16> to vector<128x128xbf16>
    %cst_51 = arith.constant dense<0.000000e+00> : vector<288x128xf32>
    %60 = tpu.matmul %57, %59, %cst_51 {dimension_numbers = #tpu.dot_dimension_numbers<[1], [0], [0], [1], [0, 0, 1, 1], [], []>} : vector<288x128xbf16>, vector<128x128xbf16>, vector<288x128xf32> -> vector<288x128xf32>
    %61 = arith.addf %56, %60 : vector<288x128xf32>
    %c0_52 = arith.constant 0 : index
    %c0_53 = arith.constant 0 : index
    %62 = vector.load %arg6[%c0_52, %c0_53] : memref<1x128xf32, #tpu.memory_space<vmem>>, vector<1x128xf32>
    %63 = vector.broadcast %62 : vector<1x128xf32> to vector<288x128xf32>
    %64 = arith.addf %61, %63 : vector<288x128xf32>
    %c1_54 = arith.constant 1 : index
    %65 = memref.load %arg7[%c1_54] : memref<2xf32, #tpu.memory_space<smem>>
    %cst_55 = arith.constant 0.000000e+00 : f32
    %66 = vector.broadcast %cst_55 : f32 to vector<288x128xf32>
    %67 = arith.cmpf ogt, %64, %66 : vector<288x128xf32>
    %68 = vector.broadcast %65 : f32 to vector<288x128xf32>
    %69 = arith.mulf %68, %64 : vector<288x128xf32>
    %70 = arith.select %67, %64, %69 : vector<288x128xi1>, vector<288x128xf32>
    %c0_56 = arith.constant 0 : index
    %c0_57 = arith.constant 0 : index
    %c0_58 = arith.constant 0 : index
    %71 = vector.load %arg8[%c0_56, %c0_57, %c0_58] : memref<1x288x128xf32, #tpu.memory_space<vmem>>, vector<1x288x128xf32>
    %72 = vector.shape_cast %71 : vector<1x288x128xf32> to vector<288x128xf32>
    %73 = vector.shape_cast %70 : vector<288x128xf32> to vector<1x288x128xf32>
    tpu.vector_store %arg8[%c0_56, %c0_57, %c0_58], %73 {strides = array<i32>} : memref<1x288x128xf32, #tpu.memory_space<vmem>>, vector<1x288x128xf32>,
    return
  }
  func.func @transform_0(%arg0: i32) -> (i32, i32, i32) {
    %c0_i32 = arith.constant 0 : i32
    %c0_i32_0 = arith.constant 0 : i32
    %c0_i32_1 = arith.constant 0 : i32
    return %arg0, %c0_i32, %c0_i32_0 : i32, i32, i32
  }
  func.func @transform_1(%arg0: i32) -> (i32, i32) {
    %c0_i32 = arith.constant 0 : i32
    %c0_i32_0 = arith.constant 0 : i32
    %c0_i32_1 = arith.constant 0 : i32
    return %c0_i32, %c0_i32_0 : i32, i32
  }
  func.func @transform_2(%arg0: i32) -> (i32, i32) {
    %c0_i32 = arith.constant 0 : i32
    %c0_i32_0 = arith.constant 0 : i32
    %c0_i32_1 = arith.constant 0 : i32
    return %c0_i32, %c0_i32_0 : i32, i32
  }
  func.func @transform_3(%arg0: i32) -> (i32, i32) {
    %c0_i32 = arith.constant 0 : i32
    %c0_i32_0 = arith.constant 0 : i32
    %c0_i32_1 = arith.constant 0 : i32
    return %c0_i32, %c0_i32_0 : i32, i32
  }
  func.func @transform_4(%arg0: i32) -> (i32, i32, i32) {
    %c0_i32 = arith.constant 0 : i32
    %c0_i32_0 = arith.constant 0 : i32
    %c0_i32_1 = arith.constant 0 : i32
    %c0_i32_2 = arith.constant 0 : i32
    return %c0_i32, %c0_i32_0, %c0_i32_1 : i32, i32, i32
  }
  func.func @transform_5(%arg0: i32) -> (i32, i32) {
    %c0_i32 = arith.constant 0 : i32
    %c0_i32_0 = arith.constant 0 : i32
    %c0_i32_1 = arith.constant 0 : i32
    return %c0_i32, %c0_i32_0 : i32, i32
  }
  func.func @transform_6(%arg0: i32) -> i32 {
    %c0_i32 = arith.constant 0 : i32
    %c0_i32_0 = arith.constant 0 : i32
    return %c0_i32 : i32
  }
  func.func @transform_7(%arg0: i32) -> (i32, i32, i32) {
    %c0_i32 = arith.constant 0 : i32
    %c0_i32_0 = arith.constant 0 : i32
    %c0_i32_1 = arith.constant 0 : i32
    return %arg0, %c0_i32, %c0_i32_0 : i32, i32, i32
  }
}

</mosaic_0001>

<llo_original>
// kernel: _lambda_.1
$region0: #{_lambda_.1}
  #allocation0 [shape = 'u32[]', space=smem, size = 0x4, offset = 0x4, fixed_abs, tag = 'smem constant byte address 0x4 - core index']
  #allocation1 [shape = 'u32[144,128]{1,0:T(1,128)}', space=vmem, size = 0x12000, scoped, tag = 'internal scratch']
  #allocation2 [shape = 'bf16[328,128]{1,0:T(8,128)(2,1)}', space=vmem, size = 0x14800, scoped, tag = 'scratch operand']
  %s0 = inlined_call_operand.vmem [shape: bf16[2,328,128], index: 0, kind: input, shape index: {}]
  %s1 = inlined_call_operand.vmem [shape: f32[328,1], index: 1, kind: input, shape index: {}]
  %s2 = inlined_call_operand.vmem [shape: bf16[128,128], index: 2, kind: input, shape index: {}]
  %s3 = inlined_call_operand.vmem [shape: f32[1,128], index: 3, kind: input, shape index: {}]
  %s4 = inlined_call_operand.vmem [shape: bf16[9,128,128], index: 4, kind: input, shape index: {}]
  %s5 = inlined_call_operand.vmem [shape: f32[1,128], index: 5, kind: input, shape index: {}]
  %s6 = inlined_call_operand.vmem [shape: f32[2], index: 6, kind: input, shape index: {}]
  %s7 = inlined_call_operand.vmem [shape: f32[2,288,128], index: 7, kind: output, shape index: {}]
  %s8 = sld [smem:[#allocation0]]
  $region65: #{_lambda_.1} parent=0
    _
  %s10 = ssub.s32 1, %s8
  %s11 = scalar_select 0, %s10, %s8
  $region1: #{_lambda_.1} parent=0
    #allocation3 [shape = 'u8[512]{0}', space=smem, size = 0x200, scoped, tag = 'input window, operand 6, single buffered']
    #allocation4 [shape = 's32[2]{0}', space=sflag, size = 0x8, scoped, tag = 'scoped memory for _lambda_.1']
    %12 = vsyncpa [#allocation4], 0
    loop: start=0, step=1, limit=4
    $region2: #{_lambda_.1} parent=1 // loop_pre_header
      _
    $region3: #{_lambda_.1} parent=1 // loop_header
      %s14 = sphi 0, %s18
      %p15 = scmp.ge.s32.totalorder %s14, 4
      %s24 = sphi 0, %s26
      %s27 = sphi 0, %s24
      %s28 = sphi 0, %s27
      %s44 = sphi 0, %s28
      %s48 = sphi 0, %s48
      %s50 = sphi 0, %s48
      %s51 = sphi 0, %s50
      %s65 = sphi 0, %s51
      %s69 = sphi 0, %s69
      %s71 = sphi 0, %s69
      %s72 = sphi 0, %s71
      %s86 = sphi 0, %s72
      %s90 = sphi 0, %s90
      %s92 = sphi 0, %s90
      %s93 = sphi 0, %s92
      %s107 = sphi 0, %s93
      %s111 = sphi 0, %s111
      %s113 = sphi 0, %s111
      %s114 = sphi 0, %s113
      %s128 = sphi 0, %s114
      %s132 = sphi 0, %s132
      %s134 = sphi 0, %s132
      %s135 = sphi 0, %s134
      %s149 = sphi 0, %s135
      %s153 = sphi 0, %s153
      %s155 = sphi 0, %s153
      %s156 = sphi 0, %s155
      %s170 = sphi 0, %s156
      %s176 = sphi 0, %s178
      %s179 = sphi 0, %s176
      %s180 = sphi 0, %s179
      %s196 = sphi 0, %s180
    $region4: #{_lambda_.1} parent=1 // loop_header_branch
      %17 = sbr.rel (%p15) target = $region8
    $region5: #{_lambda_.1} parent=1 // loop_body
      %s19 = ssub.s32 %s14, 1
      %s20 = ssub.s32 %s14, 2
      %s21 = sadd.s32 %s14, 1
      %s22 = ssub.s32 %s14, %s21
      %p23 = scmp.eq.s32.totalorder %s22, 0
      %s25 = sadd.s32 %s24, 1
      %s26 = scalar_select %p23, %s24, %s25
      %p29 = pneg %p23
      %p30 = scmp.eq.s32.totalorder %s14, 1
      %p31 = por %p29, %p30
      %p32 = scmp.ne.s32.totalorder %s24, %s27
      %p33 = scmp.eq.s32.totalorder %s14, 0
      %p34 = por %p32, %p33
      %p35 = scmp.ne.s32.totalorder %s24, %s27
      %p36 = scmp.eq.s32.totalorder %s19, 1
      %p37 = por %p35, %p36
      %p38 = scmp.ne.s32.totalorder %s27, %s28
      %p39 = scmp.eq.s32.totalorder %s19, 0
      %p40 = por %p38, %p39
      %p41 = scmp.ne.s32.totalorder %s27, %s28
      %p42 = scmp.eq.s32.totalorder %s20, 1
      %p43 = por %p41, %p42
      %p45 = scmp.ne.s32.totalorder %s28, %s44
      %p46 = scmp.eq.s32.totalorder %s20, 0
      %p47 = por %p45, %p46
      %s49 = sadd.s32 %s48, 1
      %p52 = scmp.eq.s32.totalorder %s14, 1
      %p53 = scmp.ne.s32.totalorder %s48, %s50
      %p54 = scmp.eq.s32.totalorder %s14, 0
      %p55 = por %p53, %p54
      %p56 = scmp.ne.s32.totalorder %s48, %s50
      %p57 = scmp.eq.s32.totalorder %s19, 1
      %p58 = por %p56, %p57
      %p59 = scmp.ne.s32.totalorder %s50, %s51
      %p60 = scmp.eq.s32.totalorder %s19, 0
      %p61 = por %p59, %p60
      %p62 = scmp.ne.s32.totalorder %s50, %s51
      %p63 = scmp.eq.s32.totalorder %s20, 1
      %p64 = por %p62, %p63
      %p66 = scmp.ne.s32.totalorder %s51, %s65
      %p67 = scmp.eq.s32.totalorder %s20, 0
      %p68 = por %p66, %p67
      %s70 = sadd.s32 %s69, 1
      %p73 = scmp.eq.s32.totalorder %s14, 1
      %p74 = scmp.ne.s32.totalorder %s69, %s71
      %p75 = scmp.eq.s32.totalorder %s14, 0
      %p76 = por %p74, %p75
      %p77 = scmp.ne.s32.totalorder %s69, %s71
      %p78 = scmp.eq.s32.totalorder %s19, 1
      %p79 = por %p77, %p78
      %p80 = scmp.ne.s32.totalorder %s71, %s72
      %p81 = scmp.eq.s32.totalorder %s19, 0
      %p82 = por %p80, %p81
      %p83 = scmp.ne.s32.totalorder %s71, %s72
      %p84 = scmp.eq.s32.totalorder %s20, 1
      %p85 = por %p83, %p84
      %p87 = scmp.ne.s32.totalorder %s72, %s86
      %p88 = scmp.eq.s32.totalorder %s20, 0
      %p89 = por %p87, %p88
      %s91 = sadd.s32 %s90, 1
      %p94 = scmp.eq.s32.totalorder %s14, 1
      %p95 = scmp.ne.s32.totalorder %s90, %s92
      %p96 = scmp.eq.s32.totalorder %s14, 0
      %p97 = por %p95, %p96
      %p98 = scmp.ne.s32.totalorder %s90, %s92
      %p99 = scmp.eq.s32.totalorder %s19, 1
      %p100 = por %p98, %p99
      %p101 = scmp.ne.s32.totalorder %s92, %s93
      %p102 = scmp.eq.s32.totalorder %s19, 0
      %p103 = por %p101, %p102
      %p104 = scmp.ne.s32.totalorder %s92, %s93
      %p105 = scmp.eq.s32.totalorder %s20, 1
      %p106 = por %p104, %p105
      %p108 = scmp.ne.s32.totalorder %s93, %s107
      %p109 = scmp.eq.s32.totalorder %s20, 0
      %p110 = por %p108, %p109
      %s112 = sadd.s32 %s111, 1
      %p115 = scmp.eq.s32.totalorder %s14, 1
      %p116 = scmp.ne.s32.totalorder %s111, %s113
      %p117 = scmp.eq.s32.totalorder %s14, 0
      %p118 = por %p116, %p117
      %p119 = scmp.ne.s32.totalorder %s111, %s113
      %p120 = scmp.eq.s32.totalorder %s19, 1
      %p121 = por %p119, %p120
      %p122 = scmp.ne.s32.totalorder %s113, %s114
      %p123 = scmp.eq.s32.totalorder %s19, 0
      %p124 = por %p122, %p123
      %p125 = scmp.ne.s32.totalorder %s113, %s114
      %p126 = scmp.eq.s32.totalorder %s20, 1
      %p127 = por %p125, %p126
      %p129 = scmp.ne.s32.totalorder %s114, %s128
      %p130 = scmp.eq.s32.totalorder %s20, 0
      %p131 = por %p129, %p130
      %s133 = sadd.s32 %s132, 1
      %p136 = scmp.eq.s32.totalorder %s14, 1
      %p137 = scmp.ne.s32.totalorder %s132, %s134
      %p138 = scmp.eq.s32.totalorder %s14, 0
      %p139 = por %p137, %p138
      %p140 = scmp.ne.s32.totalorder %s132, %s134
      %p141 = scmp.eq.s32.totalorder %s19, 1
      %p142 = por %p140, %p141
      %p143 = scmp.ne.s32.totalorder %s134, %s135
      %p144 = scmp.eq.s32.totalorder %s19, 0
      %p145 = por %p143, %p144
      %p146 = scmp.ne.s32.totalorder %s134, %s135
      %p147 = scmp.eq.s32.totalorder %s20, 1
      %p148 = por %p146, %p147
      %p150 = scmp.ne.s32.totalorder %s135, %s149
      %p151 = scmp.eq.s32.totalorder %s20, 0
      %p152 = por %p150, %p151
      %s154 = sadd.s32 %s153, 1
      %p157 = scmp.eq.s32.totalorder %s14, 1
      %p158 = scmp.ne.s32.totalorder %s153, %s155
      %p159 = scmp.eq.s32.totalorder %s14, 0
      %p160 = por %p158, %p159
      %p161 = scmp.ne.s32.totalorder %s153, %s155
      %p162 = scmp.eq.s32.totalorder %s19, 1
      %p163 = por %p161, %p162
      %p164 = scmp.ne.s32.totalorder %s155, %s156
      %p165 = scmp.eq.s32.totalorder %s19, 0
      %p166 = por %p164, %p165
      %p167 = scmp.ne.s32.totalorder %s155, %s156
      %p168 = scmp.eq.s32.totalorder %s20, 1
      %p169 = por %p167, %p168
      %p171 = scmp.ne.s32.totalorder %s156, %s170
      %p172 = scmp.eq.s32.totalorder %s20, 0
      %p173 = por %p171, %p172
      %s174 = ssub.s32 %s14, %s21
      %p175 = scmp.eq.s32.totalorder %s174, 0
      %s177 = sadd.s32 %s176, 1
      %s178 = scalar_select %p175, %s176, %s177
      %p181 = pneg %p175
      %p182 = scmp.eq.s32.totalorder %s14, 1
      %p183 = por %p181, %p182
      %p184 = scmp.ne.s32.totalorder %s176, %s179
      %p185 = scmp.eq.s32.totalorder %s14, 0
      %p186 = por %p184, %p185
      %p187 = scmp.ne.s32.totalorder %s176, %s179
      %p188 = scmp.eq.s32.totalorder %s19, 1
      %p189 = por %p187, %p188
      %p190 = scmp.ne.s32.totalorder %s179, %s180
      %p191 = scmp.eq.s32.totalorder %s19, 0
      %p192 = por %p190, %p191
      %p193 = scmp.ne.s32.totalorder %s179, %s180
      %p194 = scmp.eq.s32.totalorder %s20, 1
      %p195 = por %p193, %p194
      %p197 = scmp.ne.s32.totalorder %s180, %s196
      %p198 = scmp.eq.s32.totalorder %s20, 0
      %p199 = por %p197, %p198
      %p200 = scmp.le.s32.totalorder 1, %s14
      %p201 = scmp.lt.s32.totalorder %s14, 3
      %p202 = pnand %p200, %p201
      %p203 = pneg %p202
      // Predicated region
      $region9: #{_lambda_.1} parent=5 // pred_check
        _
      $region10: #{_lambda_.1} parent=5 // pred_check_branch
        %205 = sbr.rel (%p202) target = $region12
      $region11: #{_lambda_.1} parent=5 // pred_region
        %s206 = ssub.s32 %s14, 1
        // Predicated region
        $region13: #{_lambda_.1} parent=11 // pred_check
          %p207 = pneg %p61
        $region14: #{_lambda_.1} parent=11 // pred_check_branch
          %209 = sbr.rel (%p207) target = $region16
        $region15: #{_lambda_.1} parent=11 // pred_region
          _
        $region16: #{_lambda_.1} parent=11 // pred_fallthru
          _
        // Predicated region
        $region17: #{_lambda_.1} parent=11 // pred_check
          %p210 = pneg %p82
        $region18: #{_lambda_.1} parent=11 // pred_check_branch
          %212 = sbr.rel (%p210) target = $region20
        $region19: #{_lambda_.1} parent=11 // pred_region
          _
        $region20: #{_lambda_.1} parent=11 // pred_fallthru
          _
        // Predicated region
        $region21: #{_lambda_.1} parent=11 // pred_check
          %p213 = pneg %p103
        $region22: #{_lambda_.1} parent=11 // pred_check_branch
          %215 = sbr.rel (%p213) target = $region24
        $region23: #{_lambda_.1} parent=11 // pred_region
          _
        $region24: #{_lambda_.1} parent=11 // pred_fallthru
          _
        // Predicated region
        $region25: #{_lambda_.1} parent=11 // pred_check
          %p216 = pneg %p124
        $region26: #{_lambda_.1} parent=11 // pred_check_branch
          %218 = sbr.rel (%p216) target = $region28
        $region27: #{_lambda_.1} parent=11 // pred_region
          _
        $region28: #{_lambda_.1} parent=11 // pred_fallthru
          _
        // Predicated region
        $region29: #{_lambda_.1} parent=11 // pred_check
          %p219 = pneg %p145
        $region30: #{_lambda_.1} parent=11 // pred_check_branch
          %221 = sbr.rel (%p219) target = $region32
        $region31: #{_lambda_.1} parent=11 // pred_region
          _
        $region32: #{_lambda_.1} parent=11 // pred_fallthru
          _
        // Predicated region
        $region33: #{_lambda_.1} parent=11 // pred_check
          %p222 = pneg %p166
        $region34: #{_lambda_.1} parent=11 // pred_check_branch
          %224 = sbr.rel (%p222) target = $region36
        $region35: #{_lambda_.1} parent=11 // pred_region
          %s226 = ssub.s32 16, 16
          %227 = vsyncadd [#allocation4], %s226
          %s229 = sshll.u32 %s6, 4
          %s230 = int_to_ptr.vmem [resolvable:$true] %s229
          %232 = dma.vmem_to_smem %s230, 16, [#allocation3], [#allocation4]
        $region36: #{_lambda_.1} parent=11 // pred_fallthru
          _
      $region12: #{_lambda_.1} parent=5 // pred_fallthru
        _
      %p233 = scmp.lt.s32.totalorder %s14, 2
      // Predicated region
      $region37: #{_lambda_.1} parent=5 // pred_check
        %p234 = pneg %p233
      $region38: #{_lambda_.1} parent=5 // pred_check_branch
        %236 = sbr.rel (%p234) target = $region40
      $region39: #{_lambda_.1} parent=5 // pred_region
        // Predicated region
        $region41: #{_lambda_.1} parent=39 // pred_check
          %p237 = pneg %p34
        $region42: #{_lambda_.1} parent=39 // pred_check_branch
          %239 = sbr.rel (%p237) target = $region44
        $region43: #{_lambda_.1} parent=39 // pred_region
          %p240 = scmp.lt.s32.totalorder %s14, 1
          %s241 = scalar_select %p240, %s14, 1
          %s242 = smul.addr %s241, 41
          %s243 = smul.addr %s242, 4
          %s244 = scalar_lea.vmem %s0, %s243
        $region44: #{_lambda_.1} parent=39 // pred_fallthru
          _
      $region40: #{_lambda_.1} parent=5 // pred_fallthru
        _
      %p245 = scmp.le.s32.totalorder 1, %s14
      %p246 = scmp.lt.s32.totalorder %s14, 3
      %p247 = pnand %p245, %p246
      %p248 = pneg %p247
      // Predicated region
      $region45: #{_lambda_.1} parent=5 // pred_check
        _
      $region46: #{_lambda_.1} parent=5 // pred_check_branch
        %250 = sbr.rel (%p247) target = $region48
      $region47: #{_lambda_.1} parent=5 // pred_region
        %s251 = ssub.s32 %s14, 1
        // Predicated region
        $region49: #{_lambda_.1} parent=47 // pred_check
          %p252 = pneg %p166
        $region50: #{_lambda_.1} parent=47 // pred_check_branch
          %254 = sbr.rel (%p252) target = $region52
        $region51: #{_lambda_.1} parent=47 // pred_region
          %255 = dma.done [#allocation4], 16
        $region52: #{_lambda_.1} parent=47 // pred_fallthru
          _
        %256 = sfence
        %p257 = scmp.lt.s32.totalorder %s19, 1
        %s258 = scalar_select %p257, %s19, 1
        %s259 = smul.addr %s258, 41
        %s260 = smul.addr %s259, 4
        %s261 = scalar_lea.vmem %s0, %s260
        %p262 = pneg %p40
        %p263 = pneg %p37
        %p264 = pneg %p61
        %p265 = pneg %p58
        %p266 = pneg %p82
        %p267 = pneg %p79
        %p268 = pneg %p103
        %p269 = pneg %p100
        %p270 = pneg %p124
        %p271 = pneg %p121
        %p272 = pneg %p145
        %p273 = pneg %p142
        %p274 = pneg %p166
        %p275 = pneg %p163
        %p276 = pneg %p192
        %p277 = pneg %p189
        %p278 = scmp.lt.s32.totalorder %s19, 1
        %s279 = scalar_select %p278, %s19, 1
        %s280 = smul.addr %s279, 36
        %s281 = smul.addr %s280, 8
        %s282 = scalar_lea.vmem %s7, %s281
        %p283 = scmp.lt.s32.totalorder %s19, 1
        %s284 = scalar_select %p283, %s19, 1
        %s285 = smul.addr %s284, 41
        %s286 = smul.addr %s285, 4
        %s287 = scalar_lea.vmem %s0, %s286
        %p288 = scmp.lt.s32.totalorder %s19, 1
        %s289 = scalar_select %p288, %s19, 1
        %s290 = smul.addr %s289, 36
        %s291 = smul.addr %s290, 8
        %s292 = scalar_lea.vmem %s7, %s291
        %v294 = vld [vmem:[%s287] sm:$0xf]
        %v295 = vld [vmem:[%s287 + $0x4] sm:$0xf]
        %v296 = vld [vmem:[%s287 + $0x8] sm:$0xf]
        %v297 = vld [vmem:[%s287 + $0xc] sm:$0xf]
        %v298 = vld [vmem:[%s287 + $0x10] sm:$0xf]
        %v299 = vld [vmem:[%s287 + $0x14] sm:$0xf]
        %v300 = vld [vmem:[%s287 + $0x18] sm:$0xf]
        %v301 = vld [vmem:[%s287 + $0x1c] sm:$0xf]
        %v302 = vld [vmem:[%s287 + $0x20] sm:$0xf]
        %v303 = vld [vmem:[%s287 + $0x24] sm:$0xf]
        %v304 = vld [vmem:[%s287 + $0x28] sm:$0xf]
        %v305 = vld [vmem:[%s287 + $0x2c] sm:$0xf]
        %v306 = vld [vmem:[%s287 + $0x30] sm:$0xf]
        %v307 = vld [vmem:[%s287 + $0x34] sm:$0xf]
        %v308 = vld [vmem:[%s287 + $0x38] sm:$0xf]
        %v309 = vld [vmem:[%s287 + $0x3c] sm:$0xf]
        %v310 = vld [vmem:[%s287 + $0x40] sm:$0xf]
        %v311 = vld [vmem:[%s287 + $0x44] sm:$0xf]
        %v312 = vld [vmem:[%s287 + $0x48] sm:$0xf]
        %v313 = vld [vmem:[%s287 + $0x4c] sm:$0xf]
        %v314 = vld [vmem:[%s287 + $0x50] sm:$0xf]
        %v315 = vld [vmem:[%s287 + $0x54] sm:$0xf]
        %v316 = vld [vmem:[%s287 + $0x58] sm:$0xf]
        %v317 = vld [vmem:[%s287 + $0x5c] sm:$0xf]
        %v318 = vld [vmem:[%s287 + $0x60] sm:$0xf]
        %v319 = vld [vmem:[%s287 + $0x64] sm:$0xf]
        %v320 = vld [vmem:[%s287 + $0x68] sm:$0xf]
        %v321 = vld [vmem:[%s287 + $0x6c] sm:$0xf]
        %v322 = vld [vmem:[%s287 + $0x70] sm:$0xf]
        %v323 = vld [vmem:[%s287 + $0x74] sm:$0xf]
        %v324 = vld [vmem:[%s287 + $0x78] sm:$0xf]
        %v325 = vld [vmem:[%s287 + $0x7c] sm:$0xf]
        %v326 = vld [vmem:[%s287 + $0x80] sm:$0xf]
        %v327 = vld [vmem:[%s287 + $0x84] sm:$0xf]
        %v328 = vld [vmem:[%s287 + $0x88] sm:$0xf]
        %v329 = vld [vmem:[%s287 + $0x8c] sm:$0xf]
        %v330 = vld [vmem:[%s287 + $0x90] sm:$0xf]
        %v331 = vld [vmem:[%s287 + $0x94] sm:$0xf]
        %v332 = vld [vmem:[%s287 + $0x98] sm:$0xf]
        %v333 = vld [vmem:[%s287 + $0x9c] sm:$0xf]
        %v334 = vld [vmem:[%s287 + $0xa0] sm:$0xf]
        %v335 = vld [vmem:[%s2] sm:$0xf]
        %v336 = vld [vmem:[%s2 + $0x4] sm:$0xf]
        %v337 = vld [vmem:[%s2 + $0x8] sm:$0xf]
        %v338 = vld [vmem:[%s2 + $0xc] sm:$0xf]
        %v339 = vld [vmem:[%s2 + $0x10] sm:$0xf]
        %v340 = vld [vmem:[%s2 + $0x14] sm:$0xf]
        %v341 = vld [vmem:[%s2 + $0x18] sm:$0xf]
        %v342 = vld [vmem:[%s2 + $0x1c] sm:$0xf]
        %v343 = vld [vmem:[%s2 + $0x20] sm:$0xf]
        %v344 = vld [vmem:[%s2 + $0x24] sm:$0xf]
        %v345 = vld [vmem:[%s2 + $0x28] sm:$0xf]
        %v346 = vld [vmem:[%s2 + $0x2c] sm:$0xf]
        %v347 = vld [vmem:[%s2 + $0x30] sm:$0xf]
        %v348 = vld [vmem:[%s2 + $0x34] sm:$0xf]
        %v349 = vld [vmem:[%s2 + $0x38] sm:$0xf]
        %v350 = vld [vmem:[%s2 + $0x3c] sm:$0xf]
        %v351 = vld [vmem:[%s3] sm:$0x1]
        %v353 = vlaneseq
        %v354 = vshrl.u32 %v353, 7
        %v355 = vsub.s32 0, %v354
        %v356 = vrot.slane %v351, %v355
        %v399 = vunpack.c.l.b16 %v294
        %v400 = vunpack.c.l.b16 %v295
        %v401 = vunpack.c.l.b16 %v296
        %v402 = vunpack.c.l.b16 %v297
        %v403 = vunpack.c.l.b16 %v298
        %v404 = vunpack.c.l.b16 %v299
        %v405 = vunpack.c.l.b16 %v300
        %v406 = vunpack.c.l.b16 %v301
        %v407 = vunpack.c.l.b16 %v302
        %v408 = vunpack.c.l.b16 %v303
        %v409 = vunpack.c.l.b16 %v304
        %v410 = vunpack.c.l.b16 %v305
        %v411 = vunpack.c.l.b16 %v306
        %v412 = vunpack.c.l.b16 %v307
        %v413 = vunpack.c.l.b16 %v308
        %v414 = vunpack.c.l.b16 %v309
        %v415 = vunpack.c.l.b16 %v310
        %v416 = vunpack.c.l.b16 %v311
        %v417 = vunpack.c.l.b16 %v312
        %v418 = vunpack.c.l.b16 %v313
        %v419 = vunpack.c.l.b16 %v314
        %v420 = vunpack.c.l.b16 %v315
        %v421 = vunpack.c.l.b16 %v316
        %v422 = vunpack.c.l.b16 %v317
        %v423 = vunpack.c.l.b16 %v318
        %v424 = vunpack.c.l.b16 %v319
        %v425 = vunpack.c.l.b16 %v320
        %v426 = vunpack.c.l.b16 %v321
        %v427 = vunpack.c.l.b16 %v322
        %v428 = vunpack.c.l.b16 %v323
        %v429 = vunpack.c.l.b16 %v324
        %v430 = vunpack.c.l.b16 %v325
        %v431 = vunpack.c.l.b16 %v326
        %v432 = vunpack.c.l.b16 %v327
        %v433 = vunpack.c.l.b16 %v328
        %v434 = vunpack.c.l.b16 %v329
        %v435 = vunpack.c.l.b16 %v330
        %v436 = vunpack.c.l.b16 %v331
        %v437 = vunpack.c.l.b16 %v332
        %v438 = vunpack.c.l.b16 %v333
        %v439 = vunpack.c.l.b16 %v334
        %v440 = vpack.c.b16 %v400, %v399
        %v441 = vpack.c.b16 %v402, %v401
        %v442 = vpack.c.b16 %v404, %v403
        %v443 = vpack.c.b16 %v406, %v405
        %v444 = vpack.c.b16 %v408, %v407
        %v445 = vpack.c.b16 %v410, %v409
        %v446 = vpack.c.b16 %v412, %v411
        %v447 = vpack.c.b16 %v414, %v413
        %v448 = vpack.c.b16 %v416, %v415
        %v449 = vpack.c.b16 %v418, %v417
        %v450 = vpack.c.b16 %v420, %v419
        %v451 = vpack.c.b16 %v422, %v421
        %v452 = vpack.c.b16 %v424, %v423
        %v453 = vpack.c.b16 %v426, %v425
        %v454 = vpack.c.b16 %v428, %v427
        %v455 = vpack.c.b16 %v430, %v429
        %v456 = vpack.c.b16 %v432, %v431
        %v457 = vpack.c.b16 %v434, %v433
        %v458 = vpack.c.b16 %v436, %v435
        %v459 = vpack.c.b16 %v438, %v437
        %v460 = vpack.c.b16 %v439, %v439
        %v498 = vunpack.c.l.b16 %v335
        %v499 = vunpack.c.l.b16 %v336
        %v500 = vunpack.c.l.b16 %v337
        %v501 = vunpack.c.l.b16 %v338
        %v502 = vunpack.c.l.b16 %v339
        %v503 = vunpack.c.l.b16 %v340
        %v504 = vunpack.c.l.b16 %v341
        %v505 = vunpack.c.l.b16 %v342
        %v506 = vunpack.c.l.b16 %v343
        %v507 = vunpack.c.l.b16 %v344
        %v508 = vunpack.c.l.b16 %v345
        %v509 = vunpack.c.l.b16 %v346
        %v510 = vunpack.c.l.b16 %v347
        %v511 = vunpack.c.l.b16 %v348
        %v512 = vunpack.c.l.b16 %v349
        %v513 = vunpack.c.l.b16 %v350
        %v514 = vpack.c.b16 %v499, %v498
        %v515 = vpack.c.b16 %v501, %v500
        %v516 = vpack.c.b16 %v503, %v502
        %v517 = vpack.c.b16 %v505, %v504
        %v518 = vpack.c.b16 %v507, %v506
        %v519 = vpack.c.b16 %v509, %v508
        %v520 = vpack.c.b16 %v511, %v510
        %v521 = vpack.c.b16 %v513, %v512
        %530 = vmatprep.subr.bf16.mxu0 0
        %531 = vmatpush1.bf16.msra.mxu0 %v514
        %532 = vmatprep.subr.bf16.mxu0 0
        %533 = vmatpush1.bf16.msra.mxu0 %v515
        %534 = vmatprep.subr.bf16.mxu0 0
        %535 = vmatpush1.bf16.msra.mxu0 %v516
        %536 = vmatprep.subr.bf16.mxu0 0
        %537 = vmatpush1.bf16.msra.mxu0 %v517
        %538 = vmatprep.subr.bf16.mxu0 0
        %539 = vmatpush1.bf16.msra.mxu0 %v518
        %540 = vmatprep.subr.bf16.mxu0 0
        %541 = vmatpush1.bf16.msra.mxu0 %v519
        %542 = vmatprep.subr.bf16.mxu0 0
        %543 = vmatpush1.bf16.msra.mxu0 %v520
        %544 = vmatprep.subr.bf16.mxu0 0
        %545 = vmatpush1.bf16.msra.mxu0 %v521
        %546 = vmatprep.subr.bf16.mxu0 0
        %547 = vmatpush1.bf16.msra.mxu0 0
        %548 = vmatprep.subr.bf16.mxu0 0
        %549 = vmatpush1.bf16.msra.mxu0 0
        %550 = vmatprep.subr.bf16.mxu0 0
        %551 = vmatpush1.bf16.msra.mxu0 0
        %552 = vmatprep.subr.bf16.mxu0 0
        %553 = vmatpush1.bf16.msra.mxu0 0
        %554 = vmatprep.subr.bf16.mxu0 0
        %555 = vmatpush1.bf16.msra.mxu0 0
        %556 = vmatprep.subr.bf16.mxu0 0
        %557 = vmatpush1.bf16.msra.mxu0 0
        %558 = vmatprep.subr.bf16.mxu0 0
        %559 = vmatpush1.bf16.msra.mxu0 0
        %560 = vmatprep.subr.bf16.mxu0 0
        %561 = vmatpush1.bf16.msra.mxu0 0
        %562 = vmatprep.mubr.bf16.mxu0 0
        %563 = vmatmul.mubr.bf16.gmra.mrb[0].mxu0 %v440
        %v564 = vpop.f32.mrb[0].mxu0
        %v565 = vadd.f32 %v356, %v564
        %v566 = vpop.f32.mrb[0].mxu0
        %v567 = vpop.f32.mrb[0].mxu0
        %v568 = vadd.f32 %v356, %v567
        %v569 = vpop.f32.mrb[0].mxu0
        %570 = vmatprep.mubr.bf16.mxu0 0
        %571 = vmatmul.mubr.bf16.gmra.mrb[0].mxu0 %v441
        %v572 = vpop.f32.mrb[0].mxu0
        %v573 = vadd.f32 %v356, %v572
        %v574 = vpop.f32.mrb[0].mxu0
        %v575 = vpop.f32.mrb[0].mxu0
        %v576 = vadd.f32 %v356, %v575
        %v577 = vpop.f32.mrb[0].mxu0
        %578 = vmatprep.mubr.bf16.mxu0 0
        %579 = vmatmul.mubr.bf16.gmra.mrb[0].mxu0 %v442
        %v580 = vpop.f32.mrb[0].mxu0
        %v581 = vadd.f32 %v356, %v580
        %v582 = vpop.f32.mrb[0].mxu0
        %v583 = vpop.f32.mrb[0].mxu0
        %v584 = vadd.f32 %v356, %v583
        %v585 = vpop.f32.mrb[0].mxu0
        %586 = vmatprep.mubr.bf16.mxu0 0
        %587 = vmatmul.mubr.bf16.gmra.mrb[0].mxu0 %v443
        %v588 = vpop.f32.mrb[0].mxu0
        %v589 = vadd.f32 %v356, %v588
        %v590 = vpop.f32.mrb[0].mxu0
        %v591 = vpop.f32.mrb[0].mxu0
        %v592 = vadd.f32 %v356, %v591
        %v593 = vpop.f32.mrb[0].mxu0
        %594 = vmatprep.mubr.bf16.mxu0 0
        %595 = vmatmul.mubr.bf16.gmra.mrb[0].mxu0 %v444
        %v596 = vpop.f32.mrb[0].mxu0
        %v597 = vadd.f32 %v356, %v596
        %v598 = vpop.f32.mrb[0].mxu0
        %v599 = vpop.f32.mrb[0].mxu0
        %v600 = vadd.f32 %v356, %v599
        %v601 = vpop.f32.mrb[0].mxu0
        %602 = vmatprep.mubr.bf16.mxu0 0
        %603 = vmatmul.mubr.bf16.gmra.mrb[0].mxu0 %v445
        %v604 = vpop.f32.mrb[0].mxu0
        %v605 = vadd.f32 %v356, %v604
        %v606 = vpop.f32.mrb[0].mxu0
        %v607 = vpop.f32.mrb[0].mxu0
        %v608 = vadd.f32 %v356, %v607
        %v609 = vpop.f32.mrb[0].mxu0
        %610 = vmatprep.mubr.bf16.mxu0 0
        %611 = vmatmul.mubr.bf16.gmra.mrb[0].mxu0 %v446
        %v612 = vpop.f32.mrb[0].mxu0
        %v613 = vadd.f32 %v356, %v612
        %v614 = vpop.f32.mrb[0].mxu0
        %v615 = vpop.f32.mrb[0].mxu0
        %v616 = vadd.f32 %v356, %v615
        %v617 = vpop.f32.mrb[0].mxu0
        %618 = vmatprep.mubr.bf16.mxu0 0
        %619 = vmatmul.mubr.bf16.gmra.mrb[0].mxu0 %v447
        %v620 = vpop.f32.mrb[0].mxu0
        %v621 = vadd.f32 %v356, %v620
        %v622 = vpop.f32.mrb[0].mxu0
        %v623 = vpop.f32.mrb[0].mxu0
        %v624 = vadd.f32 %v356, %v623
        %v625 = vpop.f32.mrb[0].mxu0
        %626 = vmatprep.mubr.bf16.mxu0 0
        %627 = vmatmul.mubr.bf16.gmra.mrb[0].mxu0 %v448
        %v628 = vpop.f32.mrb[0].mxu0
        %v629 = vadd.f32 %v356, %v628
        %v630 = vpop.f32.mrb[0].mxu0
        %v631 = vpop.f32.mrb[0].mxu0
        %v632 = vadd.f32 %v356, %v631
        %v633 = vpop.f32.mrb[0].mxu0
        %634 = vmatprep.mubr.bf16.mxu0 0
        %635 = vmatmul.mubr.bf16.gmra.mrb[0].mxu0 %v449
        %v636 = vpop.f32.mrb[0].mxu0
        %v637 = vadd.f32 %v356, %v636
        %v638 = vpop.f32.mrb[0].mxu0
        %v639 = vpop.f32.mrb[0].mxu0
        %v640 = vadd.f32 %v356, %v639
        %v641 = vpop.f32.mrb[0].mxu0
        %642 = vmatprep.mubr.bf16.mxu0 0
        %643 = vmatmul.mubr.bf16.gmra.mrb[0].mxu0 %v450
        %v644 = vpop.f32.mrb[0].mxu0
        %v645 = vadd.f32 %v356, %v644
        %v646 = vpop.f32.mrb[0].mxu0
        %v647 = vpop.f32.mrb[0].mxu0
        %v648 = vadd.f32 %v356, %v647
        %v649 = vpop.f32.mrb[0].mxu0
        %650 = vmatprep.mubr.bf16.mxu0 0
        %651 = vmatmul.mubr.bf16.gmra.mrb[0].mxu0 %v451
        %v652 = vpop.f32.mrb[0].mxu0
        %v653 = vadd.f32 %v356, %v652
        %v654 = vpop.f32.mrb[0].mxu0
        %v655 = vpop.f32.mrb[0].mxu0
        %v656 = vadd.f32 %v356, %v655
        %v657 = vpop.f32.mrb[0].mxu0
        %658 = vmatprep.mubr.bf16.mxu0 0
        %659 = vmatmul.mubr.bf16.gmra.mrb[0].mxu0 %v452
        %v660 = vpop.f32.mrb[0].mxu0
        %v661 = vadd.f32 %v356, %v660
        %v662 = vpop.f32.mrb[0].mxu0
        %v663 = vpop.f32.mrb[0].mxu0
        %v664 = vadd.f32 %v356, %v663
        %v665 = vpop.f32.mrb[0].mxu0
        %666 = vmatprep.mubr.bf16.mxu0 0
        %667 = vmatmul.mubr.bf16.gmra.mrb[0].mxu0 %v453
        %v668 = vpop.f32.mrb[0].mxu0
        %v669 = vadd.f32 %v356, %v668
        %v670 = vpop.f32.mrb[0].mxu0
        %v671 = vpop.f32.mrb[0].mxu0
        %v672 = vadd.f32 %v356, %v671
        %v673 = vpop.f32.mrb[0].mxu0
        %674 = vmatprep.mubr.bf16.mxu0 0
        %675 = vmatmul.mubr.bf16.gmra.mrb[0].mxu0 %v454
        %v676 = vpop.f32.mrb[0].mxu0
        %v677 = vadd.f32 %v356, %v676
        %v678 = vpop.f32.mrb[0].mxu0
        %v679 = vpop.f32.mrb[0].mxu0
        %v680 = vadd.f32 %v356, %v679
        %v681 = vpop.f32.mrb[0].mxu0
        %682 = vmatprep.mubr.bf16.mxu0 0
        %683 = vmatmul.mubr.bf16.gmra.mrb[0].mxu0 %v455
        %v684 = vpop.f32.mrb[0].mxu0
        %v685 = vadd.f32 %v356, %v684
        %v686 = vpop.f32.mrb[0].mxu0
        %v687 = vpop.f32.mrb[0].mxu0
        %v688 = vadd.f32 %v356, %v687
        %v689 = vpop.f32.mrb[0].mxu0
        %690 = vmatprep.mubr.bf16.mxu0 0
        %691 = vmatmul.mubr.bf16.gmra.mrb[0].mxu0 %v456
        %v692 = vpop.f32.mrb[0].mxu0
        %v693 = vadd.f32 %v356, %v692
        %v694 = vpop.f32.mrb[0].mxu0
        %v695 = vpop.f32.mrb[0].mxu0
        %v696 = vadd.f32 %v356, %v695
        %v697 = vpop.f32.mrb[0].mxu0
        %698 = vmatprep.mubr.bf16.mxu0 0
        %699 = vmatmul.mubr.bf16.gmra.mrb[0].mxu0 %v457
        %v700 = vpop.f32.mrb[0].mxu0
        %v701 = vadd.f32 %v356, %v700
        %v702 = vpop.f32.mrb[0].mxu0
        %v703 = vpop.f32.mrb[0].mxu0
        %v704 = vadd.f32 %v356, %v703
        %v705 = vpop.f32.mrb[0].mxu0
        %706 = vmatprep.mubr.bf16.mxu0 0
        %707 = vmatmul.mubr.bf16.gmra.mrb[0].mxu0 %v458
        %v708 = vpop.f32.mrb[0].mxu0
        %v709 = vadd.f32 %v356, %v708
        %v710 = vpop.f32.mrb[0].mxu0
        %v711 = vpop.f32.mrb[0].mxu0
        %v712 = vadd.f32 %v356, %v711
        %v713 = vpop.f32.mrb[0].mxu0
        %714 = vmatprep.mubr.bf16.mxu0 0
        %715 = vmatmul.mubr.bf16.gmra.mrb[0].mxu0 %v459
        %v716 = vpop.f32.mrb[0].mxu0
        %v717 = vadd.f32 %v356, %v716
        %v718 = vpop.f32.mrb[0].mxu0
        %v719 = vpop.f32.mrb[0].mxu0
        %v720 = vadd.f32 %v356, %v719
        %v721 = vpop.f32.mrb[0].mxu0
        %722 = vmatprep.mubr.bf16.mxu0 0
        %723 = vmatmul.mubr.bf16.gmra.mrb[0].mxu0 %v460
        %v724 = vpop.f32.mrb[0].mxu0
        %v725 = vadd.f32 %v356, %v724
        %v726 = vpop.f32.mrb[0].mxu0
        %v727 = vpop.f32.mrb[0].mxu0
        %v728 = vpop.f32.mrb[0].mxu0
        %729 = vdwg.mxu0
        %s730 = sld [smem:[#allocation3]]
        %vm731 = vcmp.gt.f32.partialorder %v565, 0.0
        %vm732 = vcmp.gt.f32.partialorder %v568, 0.0
        %vm733 = vcmp.gt.f32.partialorder %v573, 0.0
        %vm734 = vcmp.gt.f32.partialorder %v576, 0.0
        %vm735 = vcmp.gt.f32.partialorder %v581, 0.0
        %vm736 = vcmp.gt.f32.partialorder %v584, 0.0
        %vm737 = vcmp.gt.f32.partialorder %v589, 0.0
        %vm738 = vcmp.gt.f32.partialorder %v592, 0.0
        %vm739 = vcmp.gt.f32.partialorder %v597, 0.0
        %vm740 = vcmp.gt.f32.partialorder %v600, 0.0
        %vm741 = vcmp.gt.f32.partialorder %v605, 0.0
        %vm742 = vcmp.gt.f32.partialorder %v608, 0.0
        %vm743 = vcmp.gt.f32.partialorder %v613, 0.0
        %vm744 = vcmp.gt.f32.partialorder %v616, 0.0
        %vm745 = vcmp.gt.f32.partialorder %v621, 0.0
        %vm746 = vcmp.gt.f32.partialorder %v624, 0.0
        %vm747 = vcmp.gt.f32.partialorder %v629, 0.0
        %vm748 = vcmp.gt.f32.partialorder %v632, 0.0
        %vm749 = vcmp.gt.f32.partialorder %v637, 0.0
        %vm750 = vcmp.gt.f32.partialorder %v640, 0.0
        %vm751 = vcmp.gt.f32.partialorder %v645, 0.0
        %vm752 = vcmp.gt.f32.partialorder %v648, 0.0
        %vm753 = vcmp.gt.f32.partialorder %v653, 0.0
        %vm754 = vcmp.gt.f32.partialorder %v656, 0.0
        %vm755 = vcmp.gt.f32.partialorder %v661, 0.0
        %vm756 = vcmp.gt.f32.partialorder %v664, 0.0
        %vm757 = vcmp.gt.f32.partialorder %v669, 0.0
        %vm758 = vcmp.gt.f32.partialorder %v672, 0.0
        %vm759 = vcmp.gt.f32.partialorder %v677, 0.0
        %vm760 = vcmp.gt.f32.partialorder %v680, 0.0
        %vm761 = vcmp.gt.f32.partialorder %v685, 0.0
        %vm762 = vcmp.gt.f32.partialorder %v688, 0.0
        %vm763 = vcmp.gt.f32.partialorder %v693, 0.0
        %vm764 = vcmp.gt.f32.partialorder %v696, 0.0
        %vm765 = vcmp.gt.f32.partialorder %v701, 0.0
        %vm766 = vcmp.gt.f32.partialorder %v704, 0.0
        %vm767 = vcmp.gt.f32.partialorder %v709, 0.0
        %vm768 = vcmp.gt.f32.partialorder %v712, 0.0
        %vm769 = vcmp.gt.f32.partialorder %v717, 0.0
        %vm770 = vcmp.gt.f32.partialorder %v720, 0.0
        %vm771 = vcmp.gt.f32.partialorder %v725, 0.0
        %v772 = vstv %s730
        %v773 = vmul.f32 %v772, %v565
        %v774 = vmul.f32 %v772, %v568
        %v775 = vmul.f32 %v772, %v573
        %v776 = vmul.f32 %v772, %v576
        %v777 = vmul.f32 %v772, %v581
        %v778 = vmul.f32 %v772, %v584
        %v779 = vmul.f32 %v772, %v589
        %v780 = vmul.f32 %v772, %v592
        %v781 = vmul.f32 %v772, %v597
        %v782 = vmul.f32 %v772, %v600
        %v783 = vmul.f32 %v772, %v605
        %v784 = vmul.f32 %v772, %v608
        %v785 = vmul.f32 %v772, %v613
        %v786 = vmul.f32 %v772, %v616
        %v787 = vmul.f32 %v772, %v621
        %v788 = vmul.f32 %v772, %v624
        %v789 = vmul.f32 %v772, %v629
        %v790 = vmul.f32 %v772, %v632
        %v791 = vmul.f32 %v772, %v637
        %v792 = vmul.f32 %v772, %v640
        %v793 = vmul.f32 %v772, %v645
        %v794 = vmul.f32 %v772, %v648
        %v795 = vmul.f32 %v772, %v653
        %v796 = vmul.f32 %v772, %v656
        %v797 = vmul.f32 %v772, %v661
        %v798 = vmul.f32 %v772, %v664
        %v799 = vmul.f32 %v772, %v669
        %v800 = vmul.f32 %v772, %v672
        %v801 = vmul.f32 %v772, %v677
        %v802 = vmul.f32 %v772, %v680
        %v803 = vmul.f32 %v772, %v685
        %v804 = vmul.f32 %v772, %v688
        %v805 = vmul.f32 %v772, %v693
        %v806 = vmul.f32 %v772, %v696
        %v807 = vmul.f32 %v772, %v701
        %v808 = vmul.f32 %v772, %v704
        %v809 = vmul.f32 %v772, %v709
        %v810 = vmul.f32 %v772, %v712
        %v811 = vmul.f32 %v772, %v717
        %v812 = vmul.f32 %v772, %v720
        %v813 = vmul.f32 %v772, %v725
        %v814 = vsel %vm731, %v565, %v773
        %v815 = vsel %vm732, %v568, %v774
        %v816 = vsel %vm733, %v573, %v775
        %v817 = vsel %vm734, %v576, %v776
        %v818 = vsel %vm735, %v581, %v777
        %v819 = vsel %vm736, %v584, %v778
        %v820 = vsel %vm737, %v589, %v779
        %v821 = vsel %vm738, %v592, %v780
        %v822 = vsel %vm739, %v597, %v781
        %v823 = vsel %vm740, %v600, %v782
        %v824 = vsel %vm741, %v605, %v783
        %v825 = vsel %vm742, %v608, %v784
        %v826 = vsel %vm743, %v613, %v785
        %v827 = vsel %vm744, %v616, %v786
        %v828 = vsel %vm745, %v621, %v787
        %v829 = vsel %vm746, %v624, %v788
        %v830 = vsel %vm747, %v629, %v789
        %v831 = vsel %vm748, %v632, %v790
        %v832 = vsel %vm749, %v637, %v791
        %v833 = vsel %vm750, %v640, %v792
        %v834 = vsel %vm751, %v645, %v793
        %v835 = vsel %vm752, %v648, %v794
        %v836 = vsel %vm753, %v653, %v795
        %v837 = vsel %vm754, %v656, %v796
        %v838 = vsel %vm755, %v661, %v797
        %v839 = vsel %vm756, %v664, %v798
        %v840 = vsel %vm757, %v669, %v799
        %v841 = vsel %vm758, %v672, %v800
        %v842 = vsel %vm759, %v677, %v801
        %v843 = vsel %vm760, %v680, %v802
        %v844 = vsel %vm761, %v685, %v803
        %v845 = vsel %vm762, %v688, %v804
        %v846 = vsel %vm763, %v693, %v805
        %v847 = vsel %vm764, %v696, %v806
        %v848 = vsel %vm765, %v701, %v807
        %v849 = vsel %vm766, %v704, %v808
        %v850 = vsel %vm767, %v709, %v809
        %v851 = vsel %vm768, %v712, %v810
        %v852 = vsel %vm769, %v717, %v811
        %v853 = vsel %vm770, %v720, %v812
        %v854 = vsel %vm771, %v725, %v813
        %v855 = vld [vmem:[%s1] sm:$0xff]
        %v856 = vld [vmem:[%s1 + $0x8] sm:$0xff]
        %v857 = vld [vmem:[%s1 + $0x10] sm:$0xff]
        %v858 = vld [vmem:[%s1 + $0x18] sm:$0xff]
        %v859 = vld [vmem:[%s1 + $0x20] sm:$0xff]
        %v860 = vld [vmem:[%s1 + $0x28] sm:$0xff]
        %v861 = vld [vmem:[%s1 + $0x30] sm:$0xff]
        %v862 = vld [vmem:[%s1 + $0x38] sm:$0xff]
        %v863 = vld [vmem:[%s1 + $0x40] sm:$0xff]
        %v864 = vld [vmem:[%s1 + $0x48] sm:$0xff]
        %v865 = vld [vmem:[%s1 + $0x50] sm:$0xff]
        %v866 = vld [vmem:[%s1 + $0x58] sm:$0xff]
        %v867 = vld [vmem:[%s1 + $0x60] sm:$0xff]
        %v868 = vld [vmem:[%s1 + $0x68] sm:$0xff]
        %v869 = vld [vmem:[%s1 + $0x70] sm:$0xff]
        %v870 = vld [vmem:[%s1 + $0x78] sm:$0xff]
        %v871 = vld [vmem:[%s1 + $0x80] sm:$0xff]
        %v872 = vld [vmem:[%s1 + $0x88] sm:$0xff]
        %v873 = vld [vmem:[%s1 + $0x90] sm:$0xff]
        %v874 = vld [vmem:[%s1 + $0x98] sm:$0xff]
        %v875 = vld [vmem:[%s1 + $0xa0] sm:$0xff]
        %v876 = vld [vmem:[%s1 + $0xa8] sm:$0xff]
        %v877 = vld [vmem:[%s1 + $0xb0] sm:$0xff]
        %v878 = vld [vmem:[%s1 + $0xb8] sm:$0xff]
        %v879 = vld [vmem:[%s1 + $0xc0] sm:$0xff]
        %v880 = vld [vmem:[%s1 + $0xc8] sm:$0xff]
        %v881 = vld [vmem:[%s1 + $0xd0] sm:$0xff]
        %v882 = vld [vmem:[%s1 + $0xd8] sm:$0xff]
        %v883 = vld [vmem:[%s1 + $0xe0] sm:$0xff]
        %v884 = vld [vmem:[%s1 + $0xe8] sm:$0xff]
        %v885 = vld [vmem:[%s1 + $0xf0] sm:$0xff]
        %v886 = vld [vmem:[%s1 + $0xf8] sm:$0xff]
        %v887 = vld [vmem:[%s1 + $0x100] sm:$0xff]
        %v888 = vld [vmem:[%s1 + $0x108] sm:$0xff]
        %v889 = vld [vmem:[%s1 + $0x110] sm:$0xff]
        %v890 = vld [vmem:[%s1 + $0x118] sm:$0xff]
        %v891 = vld [vmem:[%s1 + $0x120] sm:$0xff]
        %v892 = vld [vmem:[%s1 + $0x128] sm:$0xff]
        %v893 = vld [vmem:[%s1 + $0x130] sm:$0xff]
        %v894 = vld [vmem:[%s1 + $0x138] sm:$0xff]
        %v895 = vld [vmem:[%s1 + $0x140] sm:$0xff]
        %897 = vset.pattern.permute.xlu0 0
        %898 = vperm.xlu0 %897, %v855
        %v899 = vpop.permute.xlu0 %898
        %902 = vset.pattern.permute.xlu0 0
        %903 = vperm.xlu0 %902, %v856
        %v904 = vpop.permute.xlu0 %903
        %907 = vset.pattern.permute.xlu0 0
        %908 = vperm.xlu0 %907, %v857
        %v909 = vpop.permute.xlu0 %908
        %912 = vset.pattern.permute.xlu0 0
        %913 = vperm.xlu0 %912, %v858
        %v914 = vpop.permute.xlu0 %913
        %917 = vset.pattern.permute.xlu0 0
        %918 = vperm.xlu0 %917, %v859
        %v919 = vpop.permute.xlu0 %918
        %922 = vset.pattern.permute.xlu0 0
        %923 = vperm.xlu0 %922, %v860
        %v924 = vpop.permute.xlu0 %923
        %927 = vset.pattern.permute.xlu0 0
        %928 = vperm.xlu0 %927, %v861
        %v929 = vpop.permute.xlu0 %928
        %932 = vset.pattern.permute.xlu0 0
        %933 = vperm.xlu0 %932, %v862
        %v934 = vpop.permute.xlu0 %933
        %937 = vset.pattern.permute.xlu0 0
        %938 = vperm.xlu0 %937, %v863
        %v939 = vpop.permute.xlu0 %938
        %942 = vset.pattern.permute.xlu0 0
        %943 = vperm.xlu0 %942, %v864
        %v944 = vpop.permute.xlu0 %943
        %947 = vset.pattern.permute.xlu0 0
        %948 = vperm.xlu0 %947, %v865
        %v949 = vpop.permute.xlu0 %948
        %952 = vset.pattern.permute.xlu0 0
        %953 = vperm.xlu0 %952, %v866
        %v954 = vpop.permute.xlu0 %953
        %957 = vset.pattern.permute.xlu0 0
        %958 = vperm.xlu0 %957, %v867
        %v959 = vpop.permute.xlu0 %958
        %962 = vset.pattern.permute.xlu0 0
        %963 = vperm.xlu0 %962, %v868
        %v964 = vpop.permute.xlu0 %963
        %967 = vset.pattern.permute.xlu0 0
        %968 = vperm.xlu0 %967, %v869
        %v969 = vpop.permute.xlu0 %968
        %972 = vset.pattern.permute.xlu0 0
        %973 = vperm.xlu0 %972, %v870
        %v974 = vpop.permute.xlu0 %973
        %977 = vset.pattern.permute.xlu0 0
        %978 = vperm.xlu0 %977, %v871
        %v979 = vpop.permute.xlu0 %978
        %982 = vset.pattern.permute.xlu0 0
        %983 = vperm.xlu0 %982, %v872
        %v984 = vpop.permute.xlu0 %983
        %987 = vset.pattern.permute.xlu0 0
        %988 = vperm.xlu0 %987, %v873
        %v989 = vpop.permute.xlu0 %988
        %992 = vset.pattern.permute.xlu0 0
        %993 = vperm.xlu0 %992, %v874
        %v994 = vpop.permute.xlu0 %993
        %997 = vset.pattern.permute.xlu0 0
        %998 = vperm.xlu0 %997, %v875
        %v999 = vpop.permute.xlu0 %998
        %1002 = vset.pattern.permute.xlu0 0
        %1003 = vperm.xlu0 %1002, %v876
        %v1004 = vpop.permute.xlu0 %1003
        %1007 = vset.pattern.permute.xlu0 0
        %1008 = vperm.xlu0 %1007, %v877
        %v1009 = vpop.permute.xlu0 %1008
        %1012 = vset.pattern.permute.xlu0 0
        %1013 = vperm.xlu0 %1012, %v878
        %v1014 = vpop.permute.xlu0 %1013
        %1017 = vset.pattern.permute.xlu0 0
        %1018 = vperm.xlu0 %1017, %v879
        %v1019 = vpop.permute.xlu0 %1018
        %1022 = vset.pattern.permute.xlu0 0
        %1023 = vperm.xlu0 %1022, %v880
        %v1024 = vpop.permute.xlu0 %1023
        %1027 = vset.pattern.permute.xlu0 0
        %1028 = vperm.xlu0 %1027, %v881
        %v1029 = vpop.permute.xlu0 %1028
        %1032 = vset.pattern.permute.xlu0 0
        %1033 = vperm.xlu0 %1032, %v882
        %v1034 = vpop.permute.xlu0 %1033
        %1037 = vset.pattern.permute.xlu0 0
        %1038 = vperm.xlu0 %1037, %v883
        %v1039 = vpop.permute.xlu0 %1038
        %1042 = vset.pattern.permute.xlu0 0
        %1043 = vperm.xlu0 %1042, %v884
        %v1044 = vpop.permute.xlu0 %1043
        %1047 = vset.pattern.permute.xlu0 0
        %1048 = vperm.xlu0 %1047, %v885
        %v1049 = vpop.permute.xlu0 %1048
        %1052 = vset.pattern.permute.xlu0 0
        %1053 = vperm.xlu0 %1052, %v886
        %v1054 = vpop.permute.xlu0 %1053
        %1057 = vset.pattern.permute.xlu0 0
        %1058 = vperm.xlu0 %1057, %v887
        %v1059 = vpop.permute.xlu0 %1058
        %1062 = vset.pattern.permute.xlu0 0
        %1063 = vperm.xlu0 %1062, %v888
        %v1064 = vpop.permute.xlu0 %1063
        %1067 = vset.pattern.permute.xlu0 0
        %1068 = vperm.xlu0 %1067, %v889
        %v1069 = vpop.permute.xlu0 %1068
        %1072 = vset.pattern.permute.xlu0 0
        %1073 = vperm.xlu0 %1072, %v890
        %v1074 = vpop.permute.xlu0 %1073
        %1077 = vset.pattern.permute.xlu0 0
        %1078 = vperm.xlu0 %1077, %v891
        %v1079 = vpop.permute.xlu0 %1078
        %1082 = vset.pattern.permute.xlu0 0
        %1083 = vperm.xlu0 %1082, %v892
        %v1084 = vpop.permute.xlu0 %1083
        %1087 = vset.pattern.permute.xlu0 0
        %1088 = vperm.xlu0 %1087, %v893
        %v1089 = vpop.permute.xlu0 %1088
        %1092 = vset.pattern.permute.xlu0 0
        %1093 = vperm.xlu0 %1092, %v894
        %v1094 = vpop.permute.xlu0 %1093
        %1097 = vset.pattern.permute.xlu0 0
        %1098 = vperm.xlu0 %1097, %v895
        %v1099 = vpop.permute.xlu0 %1098
        %v1101 = vmul.f32 %v814, %v899
        %v1102 = vmul.f32 %v815, %v904
        %v1103 = vmul.f32 %v816, %v909
        %v1104 = vmul.f32 %v817, %v914
        %v1105 = vmul.f32 %v818, %v919
        %v1106 = vmul.f32 %v819, %v924
        %v1107 = vmul.f32 %v820, %v929
        %v1108 = vmul.f32 %v821, %v934
        %v1109 = vmul.f32 %v822, %v939
        %v1110 = vmul.f32 %v823, %v944
        %v1111 = vmul.f32 %v824, %v949
        %v1112 = vmul.f32 %v825, %v954
        %v1113 = vmul.f32 %v826, %v959
        %v1114 = vmul.f32 %v827, %v964
        %v1115 = vmul.f32 %v828, %v969
        %v1116 = vmul.f32 %v829, %v974
        %v1117 = vmul.f32 %v830, %v979
        %v1118 = vmul.f32 %v831, %v984
        %v1119 = vmul.f32 %v832, %v989
        %v1120 = vmul.f32 %v833, %v994
        %v1121 = vmul.f32 %v834, %v999
        %v1122 = vmul.f32 %v835, %v1004
        %v1123 = vmul.f32 %v836, %v1009
        %v1124 = vmul.f32 %v837, %v1014
        %v1125 = vmul.f32 %v838, %v1019
        %v1126 = vmul.f32 %v839, %v1024
        %v1127 = vmul.f32 %v840, %v1029
        %v1128 = vmul.f32 %v841, %v1034
        %v1129 = vmul.f32 %v842, %v1039
        %v1130 = vmul.f32 %v843, %v1044
        %v1131 = vmul.f32 %v844, %v1049
        %v1132 = vmul.f32 %v845, %v1054
        %v1133 = vmul.f32 %v846, %v1059
        %v1134 = vmul.f32 %v847, %v1064
        %v1135 = vmul.f32 %v848, %v1069
        %v1136 = vmul.f32 %v849, %v1074
        %v1137 = vmul.f32 %v850, %v1079
        %v1138 = vmul.f32 %v851, %v1084
        %v1139 = vmul.f32 %v852, %v1089
        %v1140 = vmul.f32 %v853, %v1094
        %v1141 = vmul.f32 %v854, %v1099
        %v1142 = vpack.c.bf16 %v1102, %v1101
        %v1143 = vpack.c.bf16 %v1104, %v1103
        %v1144 = vpack.c.bf16 %v1106, %v1105
        %v1145 = vpack.c.bf16 %v1108, %v1107
        %v1146 = vpack.c.bf16 %v1110, %v1109
        %v1147 = vpack.c.bf16 %v1112, %v1111
        %v1148 = vpack.c.bf16 %v1114, %v1113
        %v1149 = vpack.c.bf16 %v1116, %v1115
        %v1150 = vpack.c.bf16 %v1118, %v1117
        %v1151 = vpack.c.bf16 %v1120, %v1119
        %v1152 = vpack.c.bf16 %v1122, %v1121
        %v1153 = vpack.c.bf16 %v1124, %v1123
        %v1154 = vpack.c.bf16 %v1126, %v1125
        %v1155 = vpack.c.bf16 %v1128, %v1127
        %v1156 = vpack.c.bf16 %v1130, %v1129
        %v1157 = vpack.c.bf16 %v1132, %v1131
        %v1158 = vpack.c.bf16 %v1134, %v1133
        %v1159 = vpack.c.bf16 %v1136, %v1135
        %v1160 = vpack.c.bf16 %v1138, %v1137
        %v1161 = vpack.c.bf16 %v1140, %v1139
        %v1162 = vpack.c.bf16 %v1141, %v1141
        %v1184 = vunpack.c.l.b16 %v1142
        %v1185 = vunpack.c.h.b16 %v1142
        %v1186 = vunpack.c.l.b16 %v1143
        %v1187 = vunpack.c.h.b16 %v1143
        %v1188 = vunpack.c.l.b16 %v1144
        %v1189 = vunpack.c.h.b16 %v1144
        %v1190 = vunpack.c.l.b16 %v1145
        %v1191 = vunpack.c.h.b16 %v1145
        %v1192 = vunpack.c.l.b16 %v1146
        %v1193 = vunpack.c.h.b16 %v1146
        %v1194 = vunpack.c.l.b16 %v1147
        %v1195 = vunpack.c.h.b16 %v1147
        %v1196 = vunpack.c.l.b16 %v1148
        %v1197 = vunpack.c.h.b16 %v1148
        %v1198 = vunpack.c.l.b16 %v1149
        %v1199 = vunpack.c.h.b16 %v1149
        %v1200 = vunpack.c.l.b16 %v1150
        %v1201 = vunpack.c.h.b16 %v1150
        %v1202 = vunpack.c.l.b16 %v1151
        %v1203 = vunpack.c.h.b16 %v1151
        %v1204 = vunpack.c.l.b16 %v1152
        %v1205 = vunpack.c.h.b16 %v1152
        %v1206 = vunpack.c.l.b16 %v1153
        %v1207 = vunpack.c.h.b16 %v1153
        %v1208 = vunpack.c.l.b16 %v1154
        %v1209 = vunpack.c.h.b16 %v1154
        %v1210 = vunpack.c.l.b16 %v1155
        %v1211 = vunpack.c.h.b16 %v1155
        %v1212 = vunpack.c.l.b16 %v1156
        %v1213 = vunpack.c.h.b16 %v1156
        %v1214 = vunpack.c.l.b16 %v1157
        %v1215 = vunpack.c.h.b16 %v1157
        %v1216 = vunpack.c.l.b16 %v1158
        %v1217 = vunpack.c.h.b16 %v1158
        %v1218 = vunpack.c.l.b16 %v1159
        %v1219 = vunpack.c.h.b16 %v1159
        %v1220 = vunpack.c.l.b16 %v1160
        %v1221 = vunpack.c.h.b16 %v1160
        %v1222 = vunpack.c.l.b16 %v1161
        %v1223 = vunpack.c.h.b16 %v1161
        %v1224 = vunpack.c.l.b16 %v1162
        %v1225 = vpack.c.b16 %v1184, %v1184
        %v1226 = vpack.c.b16 %v1185, %v1185
        %v1227 = vpack.c.b16 %v1186, %v1186
        %v1228 = vpack.c.b16 %v1187, %v1187
        %v1229 = vpack.c.b16 %v1188, %v1188
        %v1230 = vpack.c.b16 %v1189, %v1189
        %v1231 = vpack.c.b16 %v1190, %v1190
        %v1232 = vpack.c.b16 %v1191, %v1191
        %v1233 = vpack.c.b16 %v1192, %v1192
        %v1234 = vpack.c.b16 %v1193, %v1193
        %v1235 = vpack.c.b16 %v1194, %v1194
        %v1236 = vpack.c.b16 %v1195, %v1195
        %v1237 = vpack.c.b16 %v1196, %v1196
        %v1238 = vpack.c.b16 %v1197, %v1197
        %v1239 = vpack.c.b16 %v1198, %v1198
        %v1240 = vpack.c.b16 %v1199, %v1199
        %v1241 = vpack.c.b16 %v1200, %v1200
        %v1242 = vpack.c.b16 %v1201, %v1201
        %v1243 = vpack.c.b16 %v1202, %v1202
        %v1244 = vpack.c.b16 %v1203, %v1203
        %v1245 = vpack.c.b16 %v1204, %v1204
        %v1246 = vpack.c.b16 %v1205, %v1205
        %v1247 = vpack.c.b16 %v1206, %v1206
        %v1248 = vpack.c.b16 %v1207, %v1207
        %v1249 = vpack.c.b16 %v1208, %v1208
        %v1250 = vpack.c.b16 %v1209, %v1209
        %v1251 = vpack.c.b16 %v1210, %v1210
        %v1252 = vpack.c.b16 %v1211, %v1211
        %v1253 = vpack.c.b16 %v1212, %v1212
        %v1254 = vpack.c.b16 %v1213, %v1213
        %v1255 = vpack.c.b16 %v1214, %v1214
        %v1256 = vpack.c.b16 %v1215, %v1215
        %v1257 = vpack.c.b16 %v1216, %v1216
        %v1258 = vpack.c.b16 %v1217, %v1217
        %v1259 = vpack.c.b16 %v1218, %v1218
        %v1260 = vpack.c.b16 %v1219, %v1219
        %v1261 = vpack.c.b16 %v1220, %v1220
        %v1262 = vpack.c.b16 %v1221, %v1221
        %v1263 = vpack.c.b16 %v1222, %v1222
        %v1264 = vpack.c.b16 %v1223, %v1223
        %v1265 = vpack.c.b16 %v1224, %v1224
        %1307 = vst [vmem:[#allocation2] sm:$0xf] %v1225
        %1308 = vst [vmem:[#allocation2 + $0x4] sm:$0xf] %v1226
        %1309 = vst [vmem:[#allocation2 + $0x8] sm:$0xf] %v1227
        %1310 = vst [vmem:[#allocation2 + $0xc] sm:$0xf] %v1228
        %1311 = vst [vmem:[#allocation2 + $0x10] sm:$0xf] %v1229
        %1312 = vst [vmem:[#allocation2 + $0x14] sm:$0xf] %v1230
        %1313 = vst [vmem:[#allocation2 + $0x18] sm:$0xf] %v1231
        %1314 = vst [vmem:[#allocation2 + $0x1c] sm:$0xf] %v1232
        %1315 = vst [vmem:[#allocation2 + $0x20] sm:$0xf] %v1233
        %1316 = vst [vmem:[#allocation2 + $0x24] sm:$0xf] %v1234
        %1317 = vst [vmem:[#allocation2 + $0x28] sm:$0xf] %v1235
        %1318 = vst [vmem:[#allocation2 + $0x2c] sm:$0xf] %v1236
        %1319 = vst [vmem:[#allocation2 + $0x30] sm:$0xf] %v1237
        %1320 = vst [vmem:[#allocation2 + $0x34] sm:$0xf] %v1238
        %1321 = vst [vmem:[#allocation2 + $0x38] sm:$0xf] %v1239
        %1322 = vst [vmem:[#allocation2 + $0x3c] sm:$0xf] %v1240
        %1323 = vst [vmem:[#allocation2 + $0x40] sm:$0xf] %v1241
        %1324 = vst [vmem:[#allocation2 + $0x44] sm:$0xf] %v1242
        %1325 = vst [vmem:[#allocation2 + $0x48] sm:$0xf] %v1243
        %1326 = vst [vmem:[#allocation2 + $0x4c] sm:$0xf] %v1244
        %1327 = vst [vmem:[#allocation2 + $0x50] sm:$0xf] %v1245
        %1328 = vst [vmem:[#allocation2 + $0x54] sm:$0xf] %v1246
        %1329 = vst [vmem:[#allocation2 + $0x58] sm:$0xf] %v1247
        %1330 = vst [vmem:[#allocation2 + $0x5c] sm:$0xf] %v1248
        %1331 = vst [vmem:[#allocation2 + $0x60] sm:$0xf] %v1249
        %1332 = vst [vmem:[#allocation2 + $0x64] sm:$0xf] %v1250
        %1333 = vst [vmem:[#allocation2 + $0x68] sm:$0xf] %v1251
        %1334 = vst [vmem:[#allocation2 + $0x6c] sm:$0xf] %v1252
        %1335 = vst [vmem:[#allocation2 + $0x70] sm:$0xf] %v1253
        %1336 = vst [vmem:[#allocation2 + $0x74] sm:$0xf] %v1254
        %1337 = vst [vmem:[#allocation2 + $0x78] sm:$0xf] %v1255
        %1338 = vst [vmem:[#allocation2 + $0x7c] sm:$0xf] %v1256
        %1339 = vst [vmem:[#allocation2 + $0x80] sm:$0xf] %v1257
        %1340 = vst [vmem:[#allocation2 + $0x84] sm:$0xf] %v1258
        %1341 = vst [vmem:[#allocation2 + $0x88] sm:$0xf] %v1259
        %1342 = vst [vmem:[#allocation2 + $0x8c] sm:$0xf] %v1260
        %1343 = vst [vmem:[#allocation2 + $0x90] sm:$0xf] %v1261
        %1344 = vst [vmem:[#allocation2 + $0x94] sm:$0xf] %v1262
        %1345 = vst [vmem:[#allocation2 + $0x98] sm:$0xf] %v1263
        %1346 = vst [vmem:[#allocation2 + $0x9c] sm:$0xf] %v1264
        %1347 = vst [vmem:[#allocation2 + $0xa0] sm:$0xf] %v1265
        %v1348 = vld [vmem:[#allocation2] sm:$0xf]
        %v1349 = vld [vmem:[#allocation2 + $0x4] sm:$0xf]
        %v1350 = vld [vmem:[#allocation2 + $0x8] sm:$0xf]
        %v1351 = vld [vmem:[#allocation2 + $0xc] sm:$0xf]
        %v1352 = vld [vmem:[#allocation2 + $0x10] sm:$0xf]
        %v1353 = vld [vmem:[#allocation2 + $0x14] sm:$0xf]
        %v1354 = vld [vmem:[#allocation2 + $0x18] sm:$0xf]
        %v1355 = vld [vmem:[#allocation2 + $0x1c] sm:$0xf]
        %v1356 = vld [vmem:[#allocation2 + $0x20] sm:$0xf]
        %v1357 = vld [vmem:[#allocation2 + $0x24] sm:$0xf]
        %v1358 = vld [vmem:[#allocation2 + $0x28] sm:$0xf]
        %v1359 = vld [vmem:[#allocation2 + $0x2c] sm:$0xf]
        %v1360 = vld [vmem:[#allocation2 + $0x30] sm:$0xf]
        %v1361 = vld [vmem:[#allocation2 + $0x34] sm:$0xf]
        %v1362 = vld [vmem:[#allocation2 + $0x38] sm:$0xf]
        %v1363 = vld [vmem:[#allocation2 + $0x3c] sm:$0xf]
        %v1364 = vld [vmem:[#allocation2 + $0x40] sm:$0xf]
        %v1365 = vld [vmem:[#allocation2 + $0x44] sm:$0xf]
        %v1366 = vld [vmem:[#allocation2 + $0x48] sm:$0xf]
        %v1367 = vld [vmem:[#allocation2 + $0x4c] sm:$0xf]
        %v1368 = vld [vmem:[#allocation2 + $0x50] sm:$0xf]
        %v1369 = vld [vmem:[#allocation2 + $0x54] sm:$0xf]
        %v1370 = vld [vmem:[#allocation2 + $0x58] sm:$0xf]
        %v1371 = vld [vmem:[#allocation2 + $0x5c] sm:$0xf]
        %v1372 = vld [vmem:[#allocation2 + $0x60] sm:$0xf]
        %v1373 = vld [vmem:[#allocation2 + $0x64] sm:$0xf]
        %v1374 = vld [vmem:[#allocation2 + $0x68] sm:$0xf]
        %v1375 = vld [vmem:[#allocation2 + $0x6c] sm:$0xf]
        %v1376 = vld [vmem:[#allocation2 + $0x70] sm:$0xf]
        %v1377 = vld [vmem:[#allocation2 + $0x74] sm:$0xf]
        %v1378 = vld [vmem:[#allocation2 + $0x78] sm:$0xf]
        %v1379 = vld [vmem:[#allocation2 + $0x7c] sm:$0xf]
        %v1380 = vld [vmem:[#allocation2 + $0x80] sm:$0xf]
        %v1381 = vld [vmem:[#allocation2 + $0x84] sm:$0xf]
        %v1382 = vld [vmem:[#allocation2 + $0x88] sm:$0xf]
        %v1383 = vld [vmem:[#allocation2 + $0x8c] sm:$0xf]
        %v1384 = vld [vmem:[%s4] sm:$0xf]
        %v1385 = vld [vmem:[%s4 + $0x4] sm:$0xf]
        %v1386 = vld [vmem:[%s4 + $0x8] sm:$0xf]
        %v1387 = vld [vmem:[%s4 + $0xc] sm:$0xf]
        %v1388 = vld [vmem:[%s4 + $0x10] sm:$0xf]
        %v1389 = vld [vmem:[%s4 + $0x14] sm:$0xf]
        %v1390 = vld [vmem:[%s4 + $0x18] sm:$0xf]
        %v1391 = vld [vmem:[%s4 + $0x1c] sm:$0xf]
        %v1392 = vld [vmem:[%s4 + $0x20] sm:$0xf]
        %v1393 = vld [vmem:[%s4 + $0x24] sm:$0xf]
        %v1394 = vld [vmem:[%s4 + $0x28] sm:$0xf]
        %v1395 = vld [vmem:[%s4 + $0x2c] sm:$0xf]
        %v1396 = vld [vmem:[%s4 + $0x30] sm:$0xf]
        %v1397 = vld [vmem:[%s4 + $0x34] sm:$0xf]
        %v1398 = vld [vmem:[%s4 + $0x38] sm:$0xf]
        %v1399 = vld [vmem:[%s4 + $0x3c] sm:$0xf]
        %v1400 = vld [vmem:[#allocation2 + $0x90] sm:$0x1]
        %s1401 = scalar_lea.vmem %s4, 64
        %v1402 = vld [vmem:[%s1401] sm:$0xf]
        %v1403 = vld [vmem:[%s1401 + $0x4] sm:$0xf]
        %v1404 = vld [vmem:[%s1401 + $0x8] sm:$0xf]
        %v1405 = vld [vmem:[%s1401 + $0xc] sm:$0xf]
        %v1406 = vld [vmem:[%s1401 + $0x10] sm:$0xf]
        %v1407 = vld [vmem:[%s1401 + $0x14] sm:$0xf]
        %v1408 = vld [vmem:[%s1401 + $0x18] sm:$0xf]
        %v1409 = vld [vmem:[%s1401 + $0x1c] sm:$0xf]
        %v1410 = vld [vmem:[%s1401 + $0x20] sm:$0xf]
        %v1411 = vld [vmem:[%s1401 + $0x24] sm:$0xf]
        %v1412 = vld [vmem:[%s1401 + $0x28] sm:$0xf]
        %v1413 = vld [vmem:[%s1401 + $0x2c] sm:$0xf]
        %v1414 = vld [vmem:[%s1401 + $0x30] sm:$0xf]
        %v1415 = vld [vmem:[%s1401 + $0x34] sm:$0xf]
        %v1416 = vld [vmem:[%s1401 + $0x38] sm:$0xf]
        %v1417 = vld [vmem:[%s1401 + $0x3c] sm:$0xf]
        %v1455 = vunpack.c.l.b16 %v1348
        %v1456 = vunpack.c.l.b16 %v1349
        %v1457 = vunpack.c.l.b16 %v1350
        %v1458 = vunpack.c.l.b16 %v1351
        %v1459 = vunpack.c.l.b16 %v1352
        %v1460 = vunpack.c.l.b16 %v1353
        %v1461 = vunpack.c.l.b16 %v1354
        %v1462 = vunpack.c.l.b16 %v1355
        %v1463 = vunpack.c.l.b16 %v1356
        %v1464 = vunpack.c.l.b16 %v1357
        %v1465 = vunpack.c.l.b16 %v1358
        %v1466 = vunpack.c.l.b16 %v1359
        %v1467 = vunpack.c.l.b16 %v1360
        %v1468 = vunpack.c.l.b16 %v1361
        %v1469 = vunpack.c.l.b16 %v1362
        %v1470 = vunpack.c.l.b16 %v1363
        %v1471 = vunpack.c.l.b16 %v1364
        %v1472 = vunpack.c.l.b16 %v1365
        %v1473 = vunpack.c.l.b16 %v1366
        %v1474 = vunpack.c.l.b16 %v1367
        %v1475 = vunpack.c.l.b16 %v1368
        %v1476 = vunpack.c.l.b16 %v1369
        %v1477 = vunpack.c.l.b16 %v1370
        %v1478 = vunpack.c.l.b16 %v1371
        %v1479 = vunpack.c.l.b16 %v1372
        %v1480 = vunpack.c.l.b16 %v1373
        %v1481 = vunpack.c.l.b16 %v1374
        %v1482 = vunpack.c.l.b16 %v1375
        %v1483 = vunpack.c.l.b16 %v1376
        %v1484 = vunpack.c.l.b16 %v1377
        %v1485 = vunpack.c.l.b16 %v1378
        %v1486 = vunpack.c.l.b16 %v1379
        %v1487 = vunpack.c.l.b16 %v1380
        %v1488 = vunpack.c.l.b16 %v1381
        %v1489 = vunpack.c.l.b16 %v1382
        %v1490 = vunpack.c.l.b16 %v1383
        %v1491 = vunpack.c.l.b16 %v1400
        %v1492 = vpack.c.b16 %v1456, %v1455
        %v1493 = vpack.c.b16 %v1458, %v1457
        %v1494 = vpack.c.b16 %v1460, %v1459
        %v1495 = vpack.c.b16 %v1462, %v1461
        %v1496 = vpack.c.b16 %v1464, %v1463
        %v1497 = vpack.c.b16 %v1466, %v1465
        %v1498 = vpack.c.b16 %v1468, %v1467
        %v1499 = vpack.c.b16 %v1470, %v1469
        %v1500 = vpack.c.b16 %v1472, %v1471
        %v1501 = vpack.c.b16 %v1474, %v1473
        %v1502 = vpack.c.b16 %v1476, %v1475
        %v1503 = vpack.c.b16 %v1478, %v1477
        %v1504 = vpack.c.b16 %v1480, %v1479
        %v1505 = vpack.c.b16 %v1482, %v1481
        %v1506 = vpack.c.b16 %v1484, %v1483
        %v1507 = vpack.c.b16 %v1486, %v1485
        %v1508 = vpack.c.b16 %v1488, %v1487
        %v1509 = vpack.c.b16 %v1490, %v1489
        %v1510 = vpack.c.b16 %v1491, %v1491
        %vm1511 = vsmask.f32 7424
        %v1513 = vshrl.u32 %v1492, 16
        %v1515 = vshll.u32 %v1492, 16
        %v1517 = vrot.slane %v1515, 1
        %v1518 = vor.u32 %v1513, %v1517
        %v1520 = vshll.u32 %v1493, 16
        %v1522 = vrot.slane %v1520, 1
        %v1523 = vsel %vm1511, %v1518, %v1522
        %v1524 = vshrl.u32 %v1493, 16
        %v1526 = vor.u32 %v1524, %v1522
        %v1528 = vshll.u32 %v1494, 16
        %v1530 = vrot.slane %v1528, 1
        %v1531 = vsel %vm1511, %v1526, %v1530
        %v1532 = vshrl.u32 %v1494, 16
        %v1534 = vor.u32 %v1532, %v1530
        %v1536 = vshll.u32 %v1495, 16
        %v1538 = vrot.slane %v1536, 1
        %v1539 = vsel %vm1511, %v1534, %v1538
        %v1540 = vshrl.u32 %v1495, 16
        %v1542 = vor.u32 %v1540, %v1538
        %v1544 = vshll.u32 %v1496, 16
        %v1546 = vrot.slane %v1544, 1
        %v1547 = vsel %vm1511, %v1542, %v1546
        %v1548 = vshrl.u32 %v1496, 16
        %v1550 = vor.u32 %v1548, %v1546
        %v1552 = vshll.u32 %v1497, 16
        %v1554 = vrot.slane %v1552, 1
        %v1555 = vsel %vm1511, %v1550, %v1554
        %v1556 = vshrl.u32 %v1497, 16
        %v1558 = vor.u32 %v1556, %v1554
        %v1560 = vshll.u32 %v1498, 16
        %v1562 = vrot.slane %v1560, 1
        %v1563 = vsel %vm1511, %v1558, %v1562
        %v1564 = vshrl.u32 %v1498, 16
        %v1566 = vor.u32 %v1564, %v1562
        %v1568 = vshll.u32 %v1499, 16
        %v1570 = vrot.slane %v1568, 1
        %v1571 = vsel %vm1511, %v1566, %v1570
        %v1572 = vshrl.u32 %v1499, 16
        %v1574 = vor.u32 %v1572, %v1570
        %v1576 = vshll.u32 %v1500, 16
        %v1578 = vrot.slane %v1576, 1
        %v1579 = vsel %vm1511, %v1574, %v1578
        %v1580 = vshrl.u32 %v1500, 16
        %v1582 = vor.u32 %v1580, %v1578
        %v1584 = vshll.u32 %v1501, 16
        %v1586 = vrot.slane %v1584, 1
        %v1587 = vsel %vm1511, %v1582, %v1586
        %v1588 = vshrl.u32 %v1501, 16
        %v1590 = vor.u32 %v1588, %v1586
        %v1592 = vshll.u32 %v1502, 16
        %v1594 = vrot.slane %v1592, 1
        %v1595 = vsel %vm1511, %v1590, %v1594
        %v1596 = vshrl.u32 %v1502, 16
        %v1598 = vor.u32 %v1596, %v1594
        %v1600 = vshll.u32 %v1503, 16
        %v1602 = vrot.slane %v1600, 1
        %v1603 = vsel %vm1511, %v1598, %v1602
        %v1604 = vshrl.u32 %v1503, 16
        %v1606 = vor.u32 %v1604, %v1602
        %v1608 = vshll.u32 %v1504, 16
        %v1610 = vrot.slane %v1608, 1
        %v1611 = vsel %vm1511, %v1606, %v1610
        %v1612 = vshrl.u32 %v1504, 16
        %v1614 = vor.u32 %v1612, %v1610
        %v1616 = vshll.u32 %v1505, 16
        %v1618 = vrot.slane %v1616, 1
        %v1619 = vsel %vm1511, %v1614, %v1618
        %v1620 = vshrl.u32 %v1505, 16
        %v1622 = vor.u32 %v1620, %v1618
        %v1624 = vshll.u32 %v1506, 16
        %v1626 = vrot.slane %v1624, 1
        %v1627 = vsel %vm1511, %v1622, %v1626
        %v1628 = vshrl.u32 %v1506, 16
        %v1630 = vor.u32 %v1628, %v1626
        %v1632 = vshll.u32 %v1507, 16
        %v1634 = vrot.slane %v1632, 1
        %v1635 = vsel %vm1511, %v1630, %v1634
        %v1636 = vshrl.u32 %v1507, 16
        %v1638 = vor.u32 %v1636, %v1634
        %v1640 = vshll.u32 %v1508, 16
        %v1642 = vrot.slane %v1640, 1
        %v1643 = vsel %vm1511, %v1638, %v1642
        %v1644 = vshrl.u32 %v1508, 16
        %v1646 = vor.u32 %v1644, %v1642
        %v1648 = vshll.u32 %v1509, 16
        %v1650 = vrot.slane %v1648, 1
        %v1651 = vsel %vm1511, %v1646, %v1650
        %v1652 = vshrl.u32 %v1509, 16
        %v1654 = vor.u32 %v1652, %v1650
        %v1656 = vshll.u32 %v1510, 16
        %v1658 = vrot.slane %v1656, 1
        %v1659 = vsel %vm1511, %v1654, %v1658
        %v1694 = vunpack.c.l.b16 %v1402
        %v1695 = vunpack.c.l.b16 %v1403
        %v1696 = vunpack.c.l.b16 %v1404
        %v1697 = vunpack.c.l.b16 %v1405
        %v1698 = vunpack.c.l.b16 %v1406
        %v1699 = vunpack.c.l.b16 %v1407
        %v1700 = vunpack.c.l.b16 %v1408
        %v1701 = vunpack.c.l.b16 %v1409
        %v1702 = vunpack.c.l.b16 %v1410
        %v1703 = vunpack.c.l.b16 %v1411
        %v1704 = vunpack.c.l.b16 %v1412
        %v1705 = vunpack.c.l.b16 %v1413
        %v1706 = vunpack.c.l.b16 %v1414
        %v1707 = vunpack.c.l.b16 %v1415
        %v1708 = vunpack.c.l.b16 %v1416
        %v1709 = vunpack.c.l.b16 %v1417
        %v1710 = vpack.c.b16 %v1695, %v1694
        %v1711 = vpack.c.b16 %v1697, %v1696
        %v1712 = vpack.c.b16 %v1699, %v1698
        %v1713 = vpack.c.b16 %v1701, %v1700
        %v1714 = vpack.c.b16 %v1703, %v1702
        %v1715 = vpack.c.b16 %v1705, %v1704
        %v1716 = vpack.c.b16 %v1707, %v1706
        %v1717 = vpack.c.b16 %v1709, %v1708
        %1726 = vmatprep.subr.bf16.mxu0 0
        %1727 = vmatpush1.bf16.msra.mxu0 %v1710
        %1728 = vmatprep.subr.bf16.mxu0 0
        %1729 = vmatpush1.bf16.msra.mxu0 %v1711
        %1730 = vmatprep.subr.bf16.mxu0 0
        %1731 = vmatpush1.bf16.msra.mxu0 %v1712
        %1732 = vmatprep.subr.bf16.mxu0 0
        %1733 = vmatpush1.bf16.msra.mxu0 %v1713
        %1734 = vmatprep.subr.bf16.mxu0 0
        %1735 = vmatpush1.bf16.msra.mxu0 %v1714
        %1736 = vmatprep.subr.bf16.mxu0 0
        %1737 = vmatpush1.bf16.msra.mxu0 %v1715
        %1738 = vmatprep.subr.bf16.mxu0 0
        %1739 = vmatpush1.bf16.msra.mxu0 %v1716
        %1740 = vmatprep.subr.bf16.mxu0 0
        %1741 = vmatpush1.bf16.msra.mxu0 %v1717
        %1742 = vmatprep.subr.bf16.mxu0 0
        %1743 = vmatpush1.bf16.msra.mxu0 0
        %1744 = vmatprep.subr.bf16.mxu0 0
        %1745 = vmatpush1.bf16.msra.mxu0 0
        %1746 = vmatprep.subr.bf16.mxu0 0
        %1747 = vmatpush1.bf16.msra.mxu0 0
        %1748 = vmatprep.subr.bf16.mxu0 0
        %1749 = vmatpush1.bf16.msra.mxu0 0
        %1750 = vmatprep.subr.bf16.mxu0 0
        %1751 = vmatpush1.bf16.msra.mxu0 0
        %1752 = vmatprep.subr.bf16.mxu0 0
        %1753 = vmatpush1.bf16.msra.mxu0 0
        %1754 = vmatprep.subr.bf16.mxu0 0
        %1755 = vmatpush1.bf16.msra.mxu0 0
        %1756 = vmatprep.subr.bf16.mxu0 0
        %1757 = vmatpush1.bf16.msra.mxu0 0
        %1758 = vmatprep.mubr.bf16.mxu0 0
        %1759 = vmatmul.mubr.bf16.gmra.mrb[0].mxu0 %v1523
        %v1760 = vpop.f32.mrb[0].mxu0
        %v1761 = vadd.f32 0.0, %v1760
        %v1762 = vpop.f32.mrb[0].mxu0
        %v1763 = vpop.f32.mrb[0].mxu0
        %v1764 = vadd.f32 0.0, %v1763
        %v1765 = vpop.f32.mrb[0].mxu0
        %1766 = vmatprep.mubr.bf16.mxu0 0
        %1767 = vmatmul.mubr.bf16.gmra.mrb[0].mxu0 %v1531
        %v1768 = vpop.f32.mrb[0].mxu0
        %v1769 = vadd.f32 0.0, %v1768
        %v1770 = vpop.f32.mrb[0].mxu0
        %v1771 = vpop.f32.mrb[0].mxu0
        %v1772 = vadd.f32 0.0, %v1771
        %v1773 = vpop.f32.mrb[0].mxu0
        %1774 = vmatprep.mubr.bf16.mxu0 0
        %1775 = vmatmul.mubr.bf16.gmra.mrb[0].mxu0 %v1539
        %v1776 = vpop.f32.mrb[0].mxu0
        %v1777 = vadd.f32 0.0, %v1776
        %v1778 = vpop.f32.mrb[0].mxu0
        %v1779 = vpop.f32.mrb[0].mxu0
        %v1780 = vadd.f32 0.0, %v1779
        %v1781 = vpop.f32.mrb[0].mxu0
        %1782 = vmatprep.mubr.bf16.mxu0 0
        %1783 = vmatmul.mubr.bf16.gmra.mrb[0].mxu0 %v1547
        %v1784 = vpop.f32.mrb[0].mxu0
        %v1785 = vadd.f32 0.0, %v1784
        %v1786 = vpop.f32.mrb[0].mxu0
        %v1787 = vpop.f32.mrb[0].mxu0
        %v1788 = vadd.f32 0.0, %v1787
        %v1789 = vpop.f32.mrb[0].mxu0
        %1790 = vmatprep.mubr.bf16.mxu0 0
        %1791 = vmatmul.mubr.bf16.gmra.mrb[0].mxu0 %v1555
        %v1792 = vpop.f32.mrb[0].mxu0
        %v1793 = vadd.f32 0.0, %v1792
        %v1794 = vpop.f32.mrb[0].mxu0
        %v1795 = vpop.f32.mrb[0].mxu0
        %v1796 = vadd.f32 0.0, %v1795
        %v1797 = vpop.f32.mrb[0].mxu0
        %1798 = vmatprep.mubr.bf16.mxu0 0
        %1799 = vmatmul.mubr.bf16.gmra.mrb[0].mxu0 %v1563
        %v1800 = vpop.f32.mrb[0].mxu0
        %v1801 = vadd.f32 0.0, %v1800
        %v1802 = vpop.f32.mrb[0].mxu0
        %v1803 = vpop.f32.mrb[0].mxu0
        %v1804 = vadd.f32 0.0, %v1803
        %v1805 = vpop.f32.mrb[0].mxu0
        %1806 = vmatprep.mubr.bf16.mxu0 0
        %1807 = vmatmul.mubr.bf16.gmra.mrb[0].mxu0 %v1571
        %v1808 = vpop.f32.mrb[0].mxu0
        %v1809 = vadd.f32 0.0, %v1808
        %v1810 = vpop.f32.mrb[0].mxu0
        %v1811 = vpop.f32.mrb[0].mxu0
        %v1812 = vadd.f32 0.0, %v1811
        %v1813 = vpop.f32.mrb[0].mxu0
        %1814 = vmatprep.mubr.bf16.mxu0 0
        %1815 = vmatmul.mubr.bf16.gmra.mrb[0].mxu0 %v1579
        %v1816 = vpop.f32.mrb[0].mxu0
        %v1817 = vadd.f32 0.0, %v1816
        %v1818 = vpop.f32.mrb[0].mxu0
        %v1819 = vpop.f32.mrb[0].mxu0
        %v1820 = vadd.f32 0.0, %v1819
        %v1821 = vpop.f32.mrb[0].mxu0
        %1822 = vmatprep.mubr.bf16.mxu0 0
        %1823 = vmatmul.mubr.bf16.gmra.mrb[0].mxu0 %v1587
        %v1824 = vpop.f32.mrb[0].mxu0
        %v1825 = vadd.f32 0.0, %v1824
        %v1826 = vpop.f32.mrb[0].mxu0
        %v1827 = vpop.f32.mrb[0].mxu0
        %v1828 = vadd.f32 0.0, %v1827
        %v1829 = vpop.f32.mrb[0].mxu0
        %1830 = vmatprep.mubr.bf16.mxu0 0
        %1831 = vmatmul.mubr.bf16.gmra.mrb[0].mxu0 %v1595
        %v1832 = vpop.f32.mrb[0].mxu0
        %v1833 = vadd.f32 0.0, %v1832
        %v1834 = vpop.f32.mrb[0].mxu0
        %v1835 = vpop.f32.mrb[0].mxu0
        %v1836 = vadd.f32 0.0, %v1835
        %v1837 = vpop.f32.mrb[0].mxu0
        %1838 = vmatprep.mubr.bf16.mxu0 0
        %1839 = vmatmul.mubr.bf16.gmra.mrb[0].mxu0 %v1603
        %v1840 = vpop.f32.mrb[0].mxu0
        %v1841 = vadd.f32 0.0, %v1840
        %v1842 = vpop.f32.mrb[0].mxu0
        %v1843 = vpop.f32.mrb[0].mxu0
        %v1844 = vadd.f32 0.0, %v1843
        %v1845 = vpop.f32.mrb[0].mxu0
        %1846 = vmatprep.mubr.bf16.mxu0 0
        %1847 = vmatmul.mubr.bf16.gmra.mrb[0].mxu0 %v1611
        %v1848 = vpop.f32.mrb[0].mxu0
        %v1849 = vadd.f32 0.0, %v1848
        %v1850 = vpop.f32.mrb[0].mxu0
        %v1851 = vpop.f32.mrb[0].mxu0
        %v1852 = vadd.f32 0.0, %v1851
        %v1853 = vpop.f32.mrb[0].mxu0
        %1854 = vmatprep.mubr.bf16.mxu0 0
        %1855 = vmatmul.mubr.bf16.gmra.mrb[0].mxu0 %v1619
        %v1856 = vpop.f32.mrb[0].mxu0
        %v1857 = vadd.f32 0.0, %v1856
        %v1858 = vpop.f32.mrb[0].mxu0
        %v1859 = vpop.f32.mrb[0].mxu0
        %v1860 = vadd.f32 0.0, %v1859
        %v1861 = vpop.f32.mrb[0].mxu0
        %1862 = vmatprep.mubr.bf16.mxu0 0
        %1863 = vmatmul.mubr.bf16.gmra.mrb[0].mxu0 %v1627
        %v1864 = vpop.f32.mrb[0].mxu0
        %v1865 = vadd.f32 0.0, %v1864
        %v1866 = vpop.f32.mrb[0].mxu0
        %v1867 = vpop.f32.mrb[0].mxu0
        %v1868 = vadd.f32 0.0, %v1867
        %v1869 = vpop.f32.mrb[0].mxu0
        %1870 = vmatprep.mubr.bf16.mxu0 0
        %1871 = vmatmul.mubr.bf16.gmra.mrb[0].mxu0 %v1635
        %v1872 = vpop.f32.mrb[0].mxu0
        %v1873 = vadd.f32 0.0, %v1872
        %v1874 = vpop.f32.mrb[0].mxu0
        %v1875 = vpop.f32.mrb[0].mxu0
        %v1876 = vadd.f32 0.0, %v1875
        %v1877 = vpop.f32.mrb[0].mxu0
        %1878 = vmatprep.mubr.bf16.mxu0 0
        %1879 = vmatmul.mubr.bf16.gmra.mrb[0].mxu0 %v1643
        %v1880 = vpop.f32.mrb[0].mxu0
        %v1881 = vadd.f32 0.0, %v1880
        %v1882 = vpop.f32.mrb[0].mxu0
        %v1883 = vpop.f32.mrb[0].mxu0
        %v1884 = vadd.f32 0.0, %v1883
        %v1885 = vpop.f32.mrb[0].mxu0
        %1886 = vmatprep.mubr.bf16.mxu0 0
        %1887 = vmatmul.mubr.bf16.gmra.mrb[0].mxu0 %v1651
        %v1888 = vpop.f32.mrb[0].mxu0
        %v1889 = vadd.f32 0.0, %v1888
        %v1890 = vpop.f32.mrb[0].mxu0
        %v1891 = vpop.f32.mrb[0].mxu0
        %v1892 = vadd.f32 0.0, %v1891
        %v1893 = vpop.f32.mrb[0].mxu0
        %1894 = vmatprep.mubr.bf16.mxu0 0
        %1895 = vmatmul.mubr.bf16.gmra.mrb[0].mxu0 %v1659
        %v1896 = vpop.f32.mrb[0].mxu0
        %v1897 = vadd.f32 0.0, %v1896
        %v1898 = vpop.f32.mrb[0].mxu0
        %v1899 = vpop.f32.mrb[0].mxu0
        %v1900 = vadd.f32 0.0, %v1899
        %v1901 = vpop.f32.mrb[0].mxu0
        %1902 = vdwg.mxu0
        %v1937 = vunpack.c.l.b16 %v1384
        %v1938 = vunpack.c.l.b16 %v1385
        %v1939 = vunpack.c.l.b16 %v1386
        %v1940 = vunpack.c.l.b16 %v1387
        %v1941 = vunpack.c.l.b16 %v1388
        %v1942 = vunpack.c.l.b16 %v1389
        %v1943 = vunpack.c.l.b16 %v1390
        %v1944 = vunpack.c.l.b16 %v1391
        %v1945 = vunpack.c.l.b16 %v1392
        %v1946 = vunpack.c.l.b16 %v1393
        %v1947 = vunpack.c.l.b16 %v1394
        %v1948 = vunpack.c.l.b16 %v1395
        %v1949 = vunpack.c.l.b16 %v1396
        %v1950 = vunpack.c.l.b16 %v1397
        %v1951 = vunpack.c.l.b16 %v1398
        %v1952 = vunpack.c.l.b16 %v1399
        %v1953 = vpack.c.b16 %v1938, %v1937
        %v1954 = vpack.c.b16 %v1940, %v1939
        %v1955 = vpack.c.b16 %v1942, %v1941
        %v1956 = vpack.c.b16 %v1944, %v1943
        %v1957 = vpack.c.b16 %v1946, %v1945
        %v1958 = vpack.c.b16 %v1948, %v1947
        %v1959 = vpack.c.b16 %v1950, %v1949
        %v1960 = vpack.c.b16 %v1952, %v1951
        %1969 = vmatprep.subr.bf16.mxu0 0
        %1970 = vmatpush1.bf16.msra.mxu0 %v1953
        %1971 = vmatprep.subr.bf16.mxu0 0
        %1972 = vmatpush1.bf16.msra.mxu0 %v1954
        %1973 = vmatprep.subr.bf16.mxu0 0
        %1974 = vmatpush1.bf16.msra.mxu0 %v1955
        %1975 = vmatprep.subr.bf16.mxu0 0
        %1976 = vmatpush1.bf16.msra.mxu0 %v1956
        %1977 = vmatprep.subr.bf16.mxu0 0
        %1978 = vmatpush1.bf16.msra.mxu0 %v1957
        %1979 = vmatprep.subr.bf16.mxu0 0
        %1980 = vmatpush1.bf16.msra.mxu0 %v1958
        %1981 = vmatprep.subr.bf16.mxu0 0
        %1982 = vmatpush1.bf16.msra.mxu0 %v1959
        %1983 = vmatprep.subr.bf16.mxu0 0
        %1984 = vmatpush1.bf16.msra.mxu0 %v1960
        %1985 = vmatprep.subr.bf16.mxu0 0
        %1986 = vmatpush1.bf16.msra.mxu0 0
        %1987 = vmatprep.subr.bf16.mxu0 0
        %1988 = vmatpush1.bf16.msra.mxu0 0
        %1989 = vmatprep.subr.bf16.mxu0 0
        %1990 = vmatpush1.bf16.msra.mxu0 0
        %1991 = vmatprep.subr.bf16.mxu0 0
        %1992 = vmatpush1.bf16.msra.mxu0 0
        %1993 = vmatprep.subr.bf16.mxu0 0
        %1994 = vmatpush1.bf16.msra.mxu0 0
        %1995 = vmatprep.subr.bf16.mxu0 0
        %1996 = vmatpush1.bf16.msra.mxu0 0
        %1997 = vmatprep.subr.bf16.mxu0 0
        %1998 = vmatpush1.bf16.msra.mxu0 0
        %1999 = vmatprep.subr.bf16.mxu0 0
        %2000 = vmatpush1.bf16.msra.mxu0 0
        %2001 = vmatprep.mubr.bf16.mxu0 0
        %2002 = vmatmul.mubr.bf16.gmra.mrb[0].mxu0 %v1492
        %v2003 = vpop.f32.mrb[0].mxu0
        %v2004 = vadd.f32 %v1761, %v2003
        %v2005 = vpop.f32.mrb[0].mxu0
        %v2006 = vpop.f32.mrb[0].mxu0
        %v2007 = vadd.f32 %v1764, %v2006
        %v2008 = vpop.f32.mrb[0].mxu0
        %2009 = vmatprep.mubr.bf16.mxu0 0
        %2010 = vmatmul.mubr.bf16.gmra.mrb[0].mxu0 %v1493
        %v2011 = vpop.f32.mrb[0].mxu0
        %v2012 = vadd.f32 %v1769, %v2011
        %v2013 = vpop.f32.mrb[0].mxu0
        %v2014 = vpop.f32.mrb[0].mxu0
        %v2015 = vadd.f32 %v1772, %v2014
        %v2016 = vpop.f32.mrb[0].mxu0
        %2017 = vmatprep.mubr.bf16.mxu0 0
        %2018 = vmatmul.mubr.bf16.gmra.mrb[0].mxu0 %v1494
        %v2019 = vpop.f32.mrb[0].mxu0
        %v2020 = vadd.f32 %v1777, %v2019
        %v2021 = vpop.f32.mrb[0].mxu0
        %v2022 = vpop.f32.mrb[0].mxu0
        %v2023 = vadd.f32 %v1780, %v2022
        %v2024 = vpop.f32.mrb[0].mxu0
        %2025 = vmatprep.mubr.bf16.mxu0 0
        %2026 = vmatmul.mubr.bf16.gmra.mrb[0].mxu0 %v1495
        %v2027 = vpop.f32.mrb[0].mxu0
        %v2028 = vadd.f32 %v1785, %v2027
        %v2029 = vpop.f32.mrb[0].mxu0
        %v2030 = vpop.f32.mrb[0].mxu0
        %v2031 = vadd.f32 %v1788, %v2030
        %v2032 = vpop.f32.mrb[0].mxu0
        %2033 = vmatprep.mubr.bf16.mxu0 0
        %2034 = vmatmul.mubr.bf16.gmra.mrb[0].mxu0 %v1496
        %v2035 = vpop.f32.mrb[0].mxu0
        %v2036 = vadd.f32 %v1793, %v2035
        %v2037 = vpop.f32.mrb[0].mxu0
        %v2038 = vpop.f32.mrb[0].mxu0
        %v2039 = vadd.f32 %v1796, %v2038
        %v2040 = vpop.f32.mrb[0].mxu0
        %2041 = vmatprep.mubr.bf16.mxu0 0
        %2042 = vmatmul.mubr.bf16.gmra.mrb[0].mxu0 %v1497
        %v2043 = vpop.f32.mrb[0].mxu0
        %v2044 = vadd.f32 %v1801, %v2043
        %v2045 = vpop.f32.mrb[0].mxu0
        %v2046 = vpop.f32.mrb[0].mxu0
        %v2047 = vadd.f32 %v1804, %v2046
        %v2048 = vpop.f32.mrb[0].mxu0
        %2049 = vmatprep.mubr.bf16.mxu0 0
        %2050 = vmatmul.mubr.bf16.gmra.mrb[0].mxu0 %v1498
        %v2051 = vpop.f32.mrb[0].mxu0
        %v2052 = vadd.f32 %v1809, %v2051
        %v2053 = vpop.f32.mrb[0].mxu0
        %v2054 = vpop.f32.mrb[0].mxu0
        %v2055 = vadd.f32 %v1812, %v2054
        %v2056 = vpop.f32.mrb[0].mxu0
        %2057 = vmatprep.mubr.bf16.mxu0 0
        %2058 = vmatmul.mubr.bf16.gmra.mrb[0].mxu0 %v1499
        %v2059 = vpop.f32.mrb[0].mxu0
        %v2060 = vadd.f32 %v1817, %v2059
        %v2061 = vpop.f32.mrb[0].mxu0
        %v2062 = vpop.f32.mrb[0].mxu0
        %v2063 = vadd.f32 %v1820, %v2062
        %v2064 = vpop.f32.mrb[0].mxu0
        %2065 = vmatprep.mubr.bf16.mxu0 0
        %2066 = vmatmul.mubr.bf16.gmra.mrb[0].mxu0 %v1500
        %v2067 = vpop.f32.mrb[0].mxu0
        %v2068 = vadd.f32 %v1825, %v2067
        %v2069 = vpop.f32.mrb[0].mxu0
        %v2070 = vpop.f32.mrb[0].mxu0
        %v2071 = vadd.f32 %v1828, %v2070
        %v2072 = vpop.f32.mrb[0].mxu0
        %2073 = vmatprep.mubr.bf16.mxu0 0
        %2074 = vmatmul.mubr.bf16.gmra.mrb[0].mxu0 %v1501
        %v2075 = vpop.f32.mrb[0].mxu0
        %v2076 = vadd.f32 %v1833, %v2075
        %v2077 = vpop.f32.mrb[0].mxu0
        %v2078 = vpop.f32.mrb[0].mxu0
        %v2079 = vadd.f32 %v1836, %v2078
        %v2080 = vpop.f32.mrb[0].mxu0
        %2081 = vmatprep.mubr.bf16.mxu0 0
        %2082 = vmatmul.mubr.bf16.gmra.mrb[0].mxu0 %v1502
        %v2083 = vpop.f32.mrb[0].mxu0
        %v2084 = vadd.f32 %v1841, %v2083
        %v2085 = vpop.f32.mrb[0].mxu0
        %v2086 = vpop.f32.mrb[0].mxu0
        %v2087 = vadd.f32 %v1844, %v2086
        %v2088 = vpop.f32.mrb[0].mxu0
        %2089 = vmatprep.mubr.bf16.mxu0 0
        %2090 = vmatmul.mubr.bf16.gmra.mrb[0].mxu0 %v1503
        %v2091 = vpop.f32.mrb[0].mxu0
        %v2092 = vadd.f32 %v1849, %v2091
        %v2093 = vpop.f32.mrb[0].mxu0
        %v2094 = vpop.f32.mrb[0].mxu0
        %v2095 = vadd.f32 %v1852, %v2094
        %v2096 = vpop.f32.mrb[0].mxu0
        %2097 = vmatprep.mubr.bf16.mxu0 0
        %2098 = vmatmul.mubr.bf16.gmra.mrb[0].mxu0 %v1504
        %v2099 = vpop.f32.mrb[0].mxu0
        %v2100 = vadd.f32 %v1857, %v2099
        %v2101 = vpop.f32.mrb[0].mxu0
        %v2102 = vpop.f32.mrb[0].mxu0
        %v2103 = vadd.f32 %v1860, %v2102
        %v2104 = vpop.f32.mrb[0].mxu0
        %2105 = vmatprep.mubr.bf16.mxu0 0
        %2106 = vmatmul.mubr.bf16.gmra.mrb[0].mxu0 %v1505
        %v2107 = vpop.f32.mrb[0].mxu0
        %v2108 = vadd.f32 %v1865, %v2107
        %v2109 = vpop.f32.mrb[0].mxu0
        %v2110 = vpop.f32.mrb[0].mxu0
        %v2111 = vadd.f32 %v1868, %v2110
        %v2112 = vpop.f32.mrb[0].mxu0
        %2113 = vmatprep.mubr.bf16.mxu0 0
        %2114 = vmatmul.mubr.bf16.gmra.mrb[0].mxu0 %v1506
        %v2115 = vpop.f32.mrb[0].mxu0
        %v2116 = vadd.f32 %v1873, %v2115
        %v2117 = vpop.f32.mrb[0].mxu0
        %v2118 = vpop.f32.mrb[0].mxu0
        %v2119 = vadd.f32 %v1876, %v2118
        %v2120 = vpop.f32.mrb[0].mxu0
        %2121 = vmatprep.mubr.bf16.mxu0 0
        %2122 = vmatmul.mubr.bf16.gmra.mrb[0].mxu0 %v1507
        %v2123 = vpop.f32.mrb[0].mxu0
        %v2124 = vadd.f32 %v1881, %v2123
        %v2125 = vpop.f32.mrb[0].mxu0
        %v2126 = vpop.f32.mrb[0].mxu0
        %v2127 = vadd.f32 %v1884, %v2126
        %v2128 = vpop.f32.mrb[0].mxu0
        %2129 = vmatprep.mubr.bf16.mxu0 0
        %2130 = vmatmul.mubr.bf16.gmra.mrb[0].mxu0 %v1508
        %v2131 = vpop.f32.mrb[0].mxu0
        %v2132 = vadd.f32 %v1889, %v2131
        %v2133 = vpop.f32.mrb[0].mxu0
        %v2134 = vpop.f32.mrb[0].mxu0
        %v2135 = vadd.f32 %v1892, %v2134
        %v2136 = vpop.f32.mrb[0].mxu0
        %2137 = vmatprep.mubr.bf16.mxu0 0
        %2138 = vmatmul.mubr.bf16.gmra.mrb[0].mxu0 %v1509
        %v2139 = vpop.f32.mrb[0].mxu0
        %v2140 = vadd.f32 %v1897, %v2139
        %v2141 = vpop.f32.mrb[0].mxu0
        %v2142 = vpop.f32.mrb[0].mxu0
        %v2143 = vadd.f32 %v1900, %v2142
        %v2144 = vpop.f32.mrb[0].mxu0
        %2145 = vdwg.mxu0
        %v2146 = vld [vmem:[#allocation2] sm:$0xe]
        %s2147 = scalar_lea.vmem %s4, 128
        %v2148 = vld [vmem:[%s2147] sm:$0xf]
        %v2149 = vld [vmem:[%s2147 + $0x4] sm:$0xf]
        %v2150 = vld [vmem:[%s2147 + $0x8] sm:$0xf]
        %v2151 = vld [vmem:[%s2147 + $0xc] sm:$0xf]
        %v2152 = vld [vmem:[%s2147 + $0x10] sm:$0xf]
        %v2153 = vld [vmem:[%s2147 + $0x14] sm:$0xf]
        %v2154 = vld [vmem:[%s2147 + $0x18] sm:$0xf]
        %v2155 = vld [vmem:[%s2147 + $0x1c] sm:$0xf]
        %v2156 = vld [vmem:[%s2147 + $0x20] sm:$0xf]
        %v2157 = vld [vmem:[%s2147 + $0x24] sm:$0xf]
        %v2158 = vld [vmem:[%s2147 + $0x28] sm:$0xf]
        %v2159 = vld [vmem:[%s2147 + $0x2c] sm:$0xf]
        %v2160 = vld [vmem:[%s2147 + $0x30] sm:$0xf]
        %v2161 = vld [vmem:[%s2147 + $0x34] sm:$0xf]
        %v2162 = vld [vmem:[%s2147 + $0x38] sm:$0xf]
        %v2163 = vld [vmem:[%s2147 + $0x3c] sm:$0xf]
        %v2165 = vunpack.c.l.b16 %v2146
        %v2166 = vpack.c.b16 %v1456, %v2165
        %vm2167 = vcmask 1046528
        %v2168 = vrot.slane %v2166, 1
        %v2169 = vrot.slane %v1493, 1
        %v2170 = vsel %vm2167, %v2168, %v2169
        %v2171 = vrot.slane %v1494, 1
        %v2172 = vsel %vm2167, %v2169, %v2171
        %v2173 = vrot.slane %v1495, 1
        %v2174 = vsel %vm2167, %v2171, %v2173
        %v2175 = vrot.slane %v1496, 1
        %v2176 = vsel %vm2167, %v2173, %v2175
        %v2177 = vrot.slane %v1497, 1
        %v2178 = vsel %vm2167, %v2175, %v2177
        %v2179 = vrot.slane %v1498, 1
        %v2180 = vsel %vm2167, %v2177, %v2179
        %v2181 = vrot.slane %v1499, 1
        %v2182 = vsel %vm2167, %v2179, %v2181
        %v2183 = vrot.slane %v1500, 1
        %v2184 = vsel %vm2167, %v2181, %v2183
        %v2185 = vrot.slane %v1501, 1
        %v2186 = vsel %vm2167, %v2183, %v2185
        %v2187 = vrot.slane %v1502, 1
        %v2188 = vsel %vm2167, %v2185, %v2187
        %v2189 = vrot.slane %v1503, 1
        %v2190 = vsel %vm2167, %v2187, %v2189
        %v2191 = vrot.slane %v1504, 1
        %v2192 = vsel %vm2167, %v2189, %v2191
        %v2193 = vrot.slane %v1505, 1
        %v2194 = vsel %vm2167, %v2191, %v2193
        %v2195 = vrot.slane %v1506, 1
        %v2196 = vsel %vm2167, %v2193, %v2195
        %v2197 = vrot.slane %v1507, 1
        %v2198 = vsel %vm2167, %v2195, %v2197
        %v2199 = vrot.slane %v1508, 1
        %v2200 = vsel %vm2167, %v2197, %v2199
        %v2201 = vrot.slane %v1509, 1
        %v2202 = vsel %vm2167, %v2199, %v2201
        %v2203 = vrot.slane %v1510, 1
        %v2204 = vsel %vm2167, %v2201, %v2203
        %v2239 = vunpack.c.l.b16 %v2148
        %v2240 = vunpack.c.l.b16 %v2149
        %v2241 = vunpack.c.l.b16 %v2150
        %v2242 = vunpack.c.l.b16 %v2151
        %v2243 = vunpack.c.l.b16 %v2152
        %v2244 = vunpack.c.l.b16 %v2153
        %v2245 = vunpack.c.l.b16 %v2154
        %v2246 = vunpack.c.l.b16 %v2155
        %v2247 = vunpack.c.l.b16 %v2156
        %v2248 = vunpack.c.l.b16 %v2157
        %v2249 = vunpack.c.l.b16 %v2158
        %v2250 = vunpack.c.l.b16 %v2159
        %v2251 = vunpack.c.l.b16 %v2160
        %v2252 = vunpack.c.l.b16 %v2161
        %v2253 = vunpack.c.l.b16 %v2162
        %v2254 = vunpack.c.l.b16 %v2163
        %v2255 = vpack.c.b16 %v2240, %v2239
        %v2256 = vpack.c.b16 %v2242, %v2241
        %v2257 = vpack.c.b16 %v2244, %v2243
        %v2258 = vpack.c.b16 %v2246, %v2245
        %v2259 = vpack.c.b16 %v2248, %v2247
        %v2260 = vpack.c.b16 %v2250, %v2249
        %v2261 = vpack.c.b16 %v2252, %v2251
        %v2262 = vpack.c.b16 %v2254, %v2253
        %2271 = vmatprep.subr.bf16.mxu0 0
        %2272 = vmatpush1.bf16.msra.mxu0 %v2255
        %2273 = vmatprep.subr.bf16.mxu0 0
        %2274 = vmatpush1.bf16.msra.mxu0 %v2256
        %2275 = vmatprep.subr.bf16.mxu0 0
        %2276 = vmatpush1.bf16.msra.mxu0 %v2257
        %2277 = vmatprep.subr.bf16.mxu0 0
        %2278 = vmatpush1.bf16.msra.mxu0 %v2258
        %2279 = vmatprep.subr.bf16.mxu0 0
        %2280 = vmatpush1.bf16.msra.mxu0 %v2259
        %2281 = vmatprep.subr.bf16.mxu0 0
        %2282 = vmatpush1.bf16.msra.mxu0 %v2260
        %2283 = vmatprep.subr.bf16.mxu0 0
        %2284 = vmatpush1.bf16.msra.mxu0 %v2261
        %2285 = vmatprep.subr.bf16.mxu0 0
        %2286 = vmatpush1.bf16.msra.mxu0 %v2262
        %2287 = vmatprep.subr.bf16.mxu0 0
        %2288 = vmatpush1.bf16.msra.mxu0 0
        %2289 = vmatprep.subr.bf16.mxu0 0
        %2290 = vmatpush1.bf16.msra.mxu0 0
        %2291 = vmatprep.subr.bf16.mxu0 0
        %2292 = vmatpush1.bf16.msra.mxu0 0
        %2293 = vmatprep.subr.bf16.mxu0 0
        %2294 = vmatpush1.bf16.msra.mxu0 0
        %2295 = vmatprep.subr.bf16.mxu0 0
        %2296 = vmatpush1.bf16.msra.mxu0 0
        %2297 = vmatprep.subr.bf16.mxu0 0
        %2298 = vmatpush1.bf16.msra.mxu0 0
        %2299 = vmatprep.subr.bf16.mxu0 0
        %2300 = vmatpush1.bf16.msra.mxu0 0
        %2301 = vmatprep.subr.bf16.mxu0 0
        %2302 = vmatpush1.bf16.msra.mxu0 0
        %2303 = vmatprep.mubr.bf16.mxu0 0
        %2304 = vmatmul.mubr.bf16.gmra.mrb[0].mxu0 %v2170
        %v2305 = vpop.f32.mrb[0].mxu0
        %v2306 = vadd.f32 0.0, %v2305
        %v2307 = vpop.f32.mrb[0].mxu0
        %v2308 = vpop.f32.mrb[0].mxu0
        %v2309 = vadd.f32 0.0, %v2308
        %v2310 = vpop.f32.mrb[0].mxu0
        %2311 = vmatprep.mubr.bf16.mxu0 0
        %2312 = vmatmul.mubr.bf16.gmra.mrb[0].mxu0 %v2172
        %v2313 = vpop.f32.mrb[0].mxu0
        %v2314 = vadd.f32 0.0, %v2313
        %v2315 = vpop.f32.mrb[0].mxu0
        %v2316 = vpop.f32.mrb[0].mxu0
        %v2317 = vadd.f32 0.0, %v2316
        %v2318 = vpop.f32.mrb[0].mxu0
        %2319 = vmatprep.mubr.bf16.mxu0 0
        %2320 = vmatmul.mubr.bf16.gmra.mrb[0].mxu0 %v2174
        %v2321 = vpop.f32.mrb[0].mxu0
        %v2322 = vadd.f32 0.0, %v2321
        %v2323 = vpop.f32.mrb[0].mxu0
        %v2324 = vpop.f32.mrb[0].mxu0
        %v2325 = vadd.f32 0.0, %v2324
        %v2326 = vpop.f32.mrb[0].mxu0
        %2327 = vmatprep.mubr.bf16.mxu0 0
        %2328 = vmatmul.mubr.bf16.gmra.mrb[0].mxu0 %v2176
        %v2329 = vpop.f32.mrb[0].mxu0
        %v2330 = vadd.f32 0.0, %v2329
        %v2331 = vpop.f32.mrb[0].mxu0
        %v2332 = vpop.f32.mrb[0].mxu0
        %v2333 = vadd.f32 0.0, %v2332
        %v2334 = vpop.f32.mrb[0].mxu0
        %2335 = vmatprep.mubr.bf16.mxu0 0
        %2336 = vmatmul.mubr.bf16.gmra.mrb[0].mxu0 %v2178
        %v2337 = vpop.f32.mrb[0].mxu0
        %v2338 = vadd.f32 0.0, %v2337
        %v2339 = vpop.f32.mrb[0].mxu0
        %v2340 = vpop.f32.mrb[0].mxu0
        %v2341 = vadd.f32 0.0, %v2340
        %v2342 = vpop.f32.mrb[0].mxu0
        %2343 = vmatprep.mubr.bf16.mxu0 0
        %2344 = vmatmul.mubr.bf16.gmra.mrb[0].mxu0 %v2180
        %v2345 = vpop.f32.mrb[0].mxu0
        %v2346 = vadd.f32 0.0, %v2345
        %v2347 = vpop.f32.mrb[0].mxu0
        %v2348 = vpop.f32.mrb[0].mxu0
        %v2349 = vadd.f32 0.0, %v2348
        %v2350 = vpop.f32.mrb[0].mxu0
        %2351 = vmatprep.mubr.bf16.mxu0 0
        %2352 = vmatmul.mubr.bf16.gmra.mrb[0].mxu0 %v2182
        %v2353 = vpop.f32.mrb[0].mxu0
        %v2354 = vadd.f32 0.0, %v2353
        %v2355 = vpop.f32.mrb[0].mxu0
        %v2356 = vpop.f32.mrb[0].mxu0
        %v2357 = vadd.f32 0.0, %v2356
        %v2358 = vpop.f32.mrb[0].mxu0
        %2359 = vmatprep.mubr.bf16.mxu0 0
        %2360 = vmatmul.mubr.bf16.gmra.mrb[0].mxu0 %v2184
        %v2361 = vpop.f32.mrb[0].mxu0
        %v2362 = vadd.f32 0.0, %v2361
        %v2363 = vpop.f32.mrb[0].mxu0
        %v2364 = vpop.f32.mrb[0].mxu0
        %v2365 = vadd.f32 0.0, %v2364
        %v2366 = vpop.f32.mrb[0].mxu0
        %2367 = vmatprep.mubr.bf16.mxu0 0
        %2368 = vmatmul.mubr.bf16.gmra.mrb[0].mxu0 %v2186
        %v2369 = vpop.f32.mrb[0].mxu0
        %v2370 = vadd.f32 0.0, %v2369
        %v2371 = vpop.f32.mrb[0].mxu0
        %v2372 = vpop.f32.mrb[0].mxu0
        %v2373 = vadd.f32 0.0, %v2372
        %v2374 = vpop.f32.mrb[0].mxu0
        %2375 = vmatprep.mubr.bf16.mxu0 0
        %2376 = vmatmul.mubr.bf16.gmra.mrb[0].mxu0 %v2188
        %v2377 = vpop.f32.mrb[0].mxu0
        %v2378 = vadd.f32 0.0, %v2377
        %v2379 = vpop.f32.mrb[0].mxu0
        %v2380 = vpop.f32.mrb[0].mxu0
        %v2381 = vadd.f32 0.0, %v2380
        %v2382 = vpop.f32.mrb[0].mxu0
        %2383 = vmatprep.mubr.bf16.mxu0 0
        %2384 = vmatmul.mubr.bf16.gmra.mrb[0].mxu0 %v2190
        %v2385 = vpop.f32.mrb[0].mxu0
        %v2386 = vadd.f32 0.0, %v2385
        %v2387 = vpop.f32.mrb[0].mxu0
        %v2388 = vpop.f32.mrb[0].mxu0
        %v2389 = vadd.f32 0.0, %v2388
        %v2390 = vpop.f32.mrb[0].mxu0
        %2391 = vmatprep.mubr.bf16.mxu0 0
        %2392 = vmatmul.mubr.bf16.gmra.mrb[0].mxu0 %v2192
        %v2393 = vpop.f32.mrb[0].mxu0
        %v2394 = vadd.f32 0.0, %v2393
        %v2395 = vpop.f32.mrb[0].mxu0
        %v2396 = vpop.f32.mrb[0].mxu0
        %v2397 = vadd.f32 0.0, %v2396
        %v2398 = vpop.f32.mrb[0].mxu0
        %2399 = vmatprep.mubr.bf16.mxu0 0
        %2400 = vmatmul.mubr.bf16.gmra.mrb[0].mxu0 %v2194
        %v2401 = vpop.f32.mrb[0].mxu0
        %v2402 = vadd.f32 0.0, %v2401
        %v2403 = vpop.f32.mrb[0].mxu0
        %v2404 = vpop.f32.mrb[0].mxu0
        %v2405 = vadd.f32 0.0, %v2404
        %v2406 = vpop.f32.mrb[0].mxu0
        %2407 = vmatprep.mubr.bf16.mxu0 0
        %2408 = vmatmul.mubr.bf16.gmra.mrb[0].mxu0 %v2196
        %v2409 = vpop.f32.mrb[0].mxu0
        %v2410 = vadd.f32 0.0, %v2409
        %v2411 = vpop.f32.mrb[0].mxu0
        %v2412 = vpop.f32.mrb[0].mxu0
        %v2413 = vadd.f32 0.0, %v2412
        %v2414 = vpop.f32.mrb[0].mxu0
        %2415 = vmatprep.mubr.bf16.mxu0 0
        %2416 = vmatmul.mubr.bf16.gmra.mrb[0].mxu0 %v2198
        %v2417 = vpop.f32.mrb[0].mxu0
        %v2418 = vadd.f32 0.0, %v2417
        %v2419 = vpop.f32.mrb[0].mxu0
        %v2420 = vpop.f32.mrb[0].mxu0
        %v2421 = vadd.f32 0.0, %v2420
        %v2422 = vpop.f32.mrb[0].mxu0
        %2423 = vmatprep.mubr.bf16.mxu0 0
        %2424 = vmatmul.mubr.bf16.gmra.mrb[0].mxu0 %v2200
        %v2425 = vpop.f32.mrb[0].mxu0
        %v2426 = vadd.f32 0.0, %v2425
        %v2427 = vpop.f32.mrb[0].mxu0
        %v2428 = vpop.f32.mrb[0].mxu0
        %v2429 = vadd.f32 0.0, %v2428
        %v2430 = vpop.f32.mrb[0].mxu0
        %2431 = vmatprep.mubr.bf16.mxu0 0
        %2432 = vmatmul.mubr.bf16.gmra.mrb[0].mxu0 %v2202
        %v2433 = vpop.f32.mrb[0].mxu0
        %v2434 = vadd.f32 0.0, %v2433
        %v2435 = vpop.f32.mrb[0].mxu0
        %v2436 = vpop.f32.mrb[0].mxu0
        %v2437 = vadd.f32 0.0, %v2436
        %v2438 = vpop.f32.mrb[0].mxu0
        %2439 = vmatprep.mubr.bf16.mxu0 0
        %2440 = vmatmul.mubr.bf16.gmra.mrb[0].mxu0 %v2204
        %v2441 = vpop.f32.mrb[0].mxu0
        %v2442 = vadd.f32 0.0, %v2441
        %v2443 = vpop.f32.mrb[0].mxu0
        %v2444 = vpop.f32.mrb[0].mxu0
        %v2445 = vadd.f32 0.0, %v2444
        %v2446 = vpop.f32.mrb[0].mxu0
        %2447 = vdwg.mxu0
        %v2448 = vadd.f32 %v2004, %v2306
        %v2449 = vadd.f32 %v2007, %v2309
        %v2450 = vadd.f32 %v2012, %v2314
        %v2451 = vadd.f32 %v2015, %v2317
        %v2452 = vadd.f32 %v2020, %v2322
        %v2453 = vadd.f32 %v2023, %v2325
        %v2454 = vadd.f32 %v2028, %v2330
        %v2455 = vadd.f32 %v2031, %v2333
        %v2456 = vadd.f32 %v2036, %v2338
        %v2457 = vadd.f32 %v2039, %v2341
        %v2458 = vadd.f32 %v2044, %v2346
        %v2459 = vadd.f32 %v2047, %v2349
        %v2460 = vadd.f32 %v2052, %v2354
        %v2461 = vadd.f32 %v2055, %v2357
        %v2462 = vadd.f32 %v2060, %v2362
        %v2463 = vadd.f32 %v2063, %v2365
        %v2464 = vadd.f32 %v2068, %v2370
        %v2465 = vadd.f32 %v2071, %v2373
        %v2466 = vadd.f32 %v2076, %v2378
        %v2467 = vadd.f32 %v2079, %v2381
        %v2468 = vadd.f32 %v2084, %v2386
        %v2469 = vadd.f32 %v2087, %v2389
        %v2470 = vadd.f32 %v2092, %v2394
        %v2471 = vadd.f32 %v2095, %v2397
        %v2472 = vadd.f32 %v2100, %v2402
        %v2473 = vadd.f32 %v2103, %v2405
        %v2474 = vadd.f32 %v2108, %v2410
        %v2475 = vadd.f32 %v2111, %v2413
        %v2476 = vadd.f32 %v2116, %v2418
        %v2477 = vadd.f32 %v2119, %v2421
        %v2478 = vadd.f32 %v2124, %v2426
        %v2479 = vadd.f32 %v2127, %v2429
        %v2480 = vadd.f32 %v2132, %v2434
        %v2481 = vadd.f32 %v2135, %v2437
        %v2482 = vadd.f32 %v2140, %v2442
        %v2483 = vadd.f32 %v2143, %v2445
        %v2484 = vld [vmem:[#allocation2 + $0x8] sm:$0xe]
        %v2485 = vld [vmem:[#allocation2 + $0xc] sm:$0xf]
        %v2486 = vld [vmem:[#allocation2 + $0x10] sm:$0xf]
        %v2487 = vld [vmem:[#allocation2 + $0x14] sm:$0xf]
        %v2488 = vld [vmem:[#allocation2 + $0x18] sm:$0xf]
        %v2489 = vld [vmem:[#allocation2 + $0x1c] sm:$0xf]
        %v2490 = vld [vmem:[#allocation2 + $0x20] sm:$0xf]
        %v2491 = vld [vmem:[#allocation2 + $0x24] sm:$0xf]
        %v2492 = vld [vmem:[#allocation2 + $0x28] sm:$0xf]
        %v2493 = vld [vmem:[#allocation2 + $0x2c] sm:$0xf]
        %v2494 = vld [vmem:[#allocation2 + $0x30] sm:$0xf]
        %v2495 = vld [vmem:[#allocation2 + $0x34] sm:$0xf]
        %v2496 = vld [vmem:[#allocation2 + $0x38] sm:$0xf]
        %v2497 = vld [vmem:[#allocation2 + $0x3c] sm:$0xf]
        %v2498 = vld [vmem:[#allocation2 + $0x40] sm:$0xf]
        %v2499 = vld [vmem:[#allocation2 + $0x44] sm:$0xf]
        %v2500 = vld [vmem:[#allocation2 + $0x48] sm:$0xf]
        %v2501 = vld [vmem:[#allocation2 + $0x4c] sm:$0xf]
        %v2502 = vld [vmem:[#allocation2 + $0x50] sm:$0xf]
        %v2503 = vld [vmem:[#allocation2 + $0x54] sm:$0xf]
        %v2504 = vld [vmem:[#allocation2 + $0x58] sm:$0xf]
        %v2505 = vld [vmem:[#allocation2 + $0x5c] sm:$0xf]
        %v2506 = vld [vmem:[#allocation2 + $0x60] sm:$0xf]
        %v2507 = vld [vmem:[#allocation2 + $0x64] sm:$0xf]
        %v2508 = vld [vmem:[#allocation2 + $0x68] sm:$0xf]
        %v2509 = vld [vmem:[#allocation2 + $0x6c] sm:$0xf]
        %v2510 = vld [vmem:[#allocation2 + $0x70] sm:$0xf]
        %v2511 = vld [vmem:[#allocation2 + $0x74] sm:$0xf]
        %v2512 = vld [vmem:[#allocation2 + $0x78] sm:$0xf]
        %v2513 = vld [vmem:[#allocation2 + $0x7c] sm:$0xf]
        %v2514 = vld [vmem:[#allocation2 + $0x80] sm:$0xf]
        %v2515 = vld [vmem:[#allocation2 + $0x84] sm:$0xf]
        %v2516 = vld [vmem:[#allocation2 + $0x88] sm:$0xf]
        %v2517 = vld [vmem:[#allocation2 + $0x8c] sm:$0xf]
        %v2518 = vld [vmem:[#allocation2 + $0x90] sm:$0xf]
        %v2519 = vld [vmem:[#allocation2 + $0x94] sm:$0xf]
        %v2520 = vld [vmem:[#allocation2 + $0x98] sm:$0x1]
        %s2521 = scalar_lea.vmem %s4, 192
        %v2522 = vld [vmem:[%s2521] sm:$0xf]
        %v2523 = vld [vmem:[%s2521 + $0x4] sm:$0xf]
        %v2524 = vld [vmem:[%s2521 + $0x8] sm:$0xf]
        %v2525 = vld [vmem:[%s2521 + $0xc] sm:$0xf]
        %v2526 = vld [vmem:[%s2521 + $0x10] sm:$0xf]
        %v2527 = vld [vmem:[%s2521 + $0x14] sm:$0xf]
        %v2528 = vld [vmem:[%s2521 + $0x18] sm:$0xf]
        %v2529 = vld [vmem:[%s2521 + $0x1c] sm:$0xf]
        %v2530 = vld [vmem:[%s2521 + $0x20] sm:$0xf]
        %v2531 = vld [vmem:[%s2521 + $0x24] sm:$0xf]
        %v2532 = vld [vmem:[%s2521 + $0x28] sm:$0xf]
        %v2533 = vld [vmem:[%s2521 + $0x2c] sm:$0xf]
        %v2534 = vld [vmem:[%s2521 + $0x30] sm:$0xf]
        %v2535 = vld [vmem:[%s2521 + $0x34] sm:$0xf]
        %v2536 = vld [vmem:[%s2521 + $0x38] sm:$0xf]
        %v2537 = vld [vmem:[%s2521 + $0x3c] sm:$0xf]
        %v2575 = vunpack.c.l.b16 %v2484
        %v2576 = vunpack.c.l.b16 %v2485
        %v2577 = vunpack.c.l.b16 %v2486
        %v2578 = vunpack.c.l.b16 %v2487
        %v2579 = vunpack.c.l.b16 %v2488
        %v2580 = vunpack.c.l.b16 %v2489
        %v2581 = vunpack.c.l.b16 %v2490
        %v2582 = vunpack.c.l.b16 %v2491
        %v2583 = vunpack.c.l.b16 %v2492
        %v2584 = vunpack.c.l.b16 %v2493
        %v2585 = vunpack.c.l.b16 %v2494
        %v2586 = vunpack.c.l.b16 %v2495
        %v2587 = vunpack.c.l.b16 %v2496
        %v2588 = vunpack.c.l.b16 %v2497
        %v2589 = vunpack.c.l.b16 %v2498
        %v2590 = vunpack.c.l.b16 %v2499
        %v2591 = vunpack.c.l.b16 %v2500
        %v2592 = vunpack.c.l.b16 %v2501
        %v2593 = vunpack.c.l.b16 %v2502
        %v2594 = vunpack.c.l.b16 %v2503
        %v2595 = vunpack.c.l.b16 %v2504
        %v2596 = vunpack.c.l.b16 %v2505
        %v2597 = vunpack.c.l.b16 %v2506
        %v2598 = vunpack.c.l.b16 %v2507
        %v2599 = vunpack.c.l.b16 %v2508
        %v2600 = vunpack.c.l.b16 %v2509
        %v2601 = vunpack.c.l.b16 %v2510
        %v2602 = vunpack.c.l.b16 %v2511
        %v2603 = vunpack.c.l.b16 %v2512
        %v2604 = vunpack.c.l.b16 %v2513
        %v2605 = vunpack.c.l.b16 %v2514
        %v2606 = vunpack.c.l.b16 %v2515
        %v2607 = vunpack.c.l.b16 %v2516
        %v2608 = vunpack.c.l.b16 %v2517
        %v2609 = vunpack.c.l.b16 %v2518
        %v2610 = vunpack.c.l.b16 %v2519
        %v2611 = vunpack.c.l.b16 %v2520
        %v2612 = vpack.c.b16 %v2576, %v2575
        %v2613 = vpack.c.b16 %v2578, %v2577
        %v2614 = vpack.c.b16 %v2580, %v2579
        %v2615 = vpack.c.b16 %v2582, %v2581
        %v2616 = vpack.c.b16 %v2584, %v2583
        %v2617 = vpack.c.b16 %v2586, %v2585
        %v2618 = vpack.c.b16 %v2588, %v2587
        %v2619 = vpack.c.b16 %v2590, %v2589
        %v2620 = vpack.c.b16 %v2592, %v2591
        %v2621 = vpack.c.b16 %v2594, %v2593
        %v2622 = vpack.c.b16 %v2596, %v2595
        %v2623 = vpack.c.b16 %v2598, %v2597
        %v2624 = vpack.c.b16 %v2600, %v2599
        %v2625 = vpack.c.b16 %v2602, %v2601
        %v2626 = vpack.c.b16 %v2604, %v2603
        %v2627 = vpack.c.b16 %v2606, %v2605
        %v2628 = vpack.c.b16 %v2608, %v2607
        %v2629 = vpack.c.b16 %v2610, %v2609
        %v2630 = vpack.c.b16 %v2611, %v2611
        %v2631 = vrot.slane %v2612, 1
        %v2632 = vrot.slane %v2613, 1
        %v2633 = vsel %vm2167, %v2631, %v2632
        %v2634 = vrot.slane %v2614, 1
        %v2635 = vsel %vm2167, %v2632, %v2634
        %v2636 = vrot.slane %v2615, 1
        %v2637 = vsel %vm2167, %v2634, %v2636
        %v2638 = vrot.slane %v2616, 1
        %v2639 = vsel %vm2167, %v2636, %v2638
        %v2640 = vrot.slane %v2617, 1
        %v2641 = vsel %vm2167, %v2638, %v2640
        %v2642 = vrot.slane %v2618, 1
        %v2643 = vsel %vm2167, %v2640, %v2642
        %v2644 = vrot.slane %v2619, 1
        %v2645 = vsel %vm2167, %v2642, %v2644
        %v2646 = vrot.slane %v2620, 1
        %v2647 = vsel %vm2167, %v2644, %v2646
        %v2648 = vrot.slane %v2621, 1
        %v2649 = vsel %vm2167, %v2646, %v2648
        %v2650 = vrot.slane %v2622, 1
        %v2651 = vsel %vm2167, %v2648, %v2650
        %v2652 = vrot.slane %v2623, 1
        %v2653 = vsel %vm2167, %v2650, %v2652
        %v2654 = vrot.slane %v2624, 1
        %v2655 = vsel %vm2167, %v2652, %v2654
        %v2656 = vrot.slane %v2625, 1
        %v2657 = vsel %vm2167, %v2654, %v2656
        %v2658 = vrot.slane %v2626, 1
        %v2659 = vsel %vm2167, %v2656, %v2658
        %v2660 = vrot.slane %v2627, 1
        %v2661 = vsel %vm2167, %v2658, %v2660
        %v2662 = vrot.slane %v2628, 1
        %v2663 = vsel %vm2167, %v2660, %v2662
        %v2664 = vrot.slane %v2629, 1
        %v2665 = vsel %vm2167, %v2662, %v2664
        %v2666 = vrot.slane %v2630, 1
        %v2667 = vsel %vm2167, %v2664, %v2666
        %v2702 = vunpack.c.l.b16 %v2522
        %v2703 = vunpack.c.l.b16 %v2523
        %v2704 = vunpack.c.l.b16 %v2524
        %v2705 = vunpack.c.l.b16 %v2525
        %v2706 = vunpack.c.l.b16 %v2526
        %v2707 = vunpack.c.l.b16 %v2527
        %v2708 = vunpack.c.l.b16 %v2528
        %v2709 = vunpack.c.l.b16 %v2529
        %v2710 = vunpack.c.l.b16 %v2530
        %v2711 = vunpack.c.l.b16 %v2531
        %v2712 = vunpack.c.l.b16 %v2532
        %v2713 = vunpack.c.l.b16 %v2533
        %v2714 = vunpack.c.l.b16 %v2534
        %v2715 = vunpack.c.l.b16 %v2535
        %v2716 = vunpack.c.l.b16 %v2536
        %v2717 = vunpack.c.l.b16 %v2537
        %v2718 = vpack.c.b16 %v2703, %v2702
        %v2719 = vpack.c.b16 %v2705, %v2704
        %v2720 = vpack.c.b16 %v2707, %v2706
        %v2721 = vpack.c.b16 %v2709, %v2708
        %v2722 = vpack.c.b16 %v2711, %v2710
        %v2723 = vpack.c.b16 %v2713, %v2712
        %v2724 = vpack.c.b16 %v2715, %v2714
        %v2725 = vpack.c.b16 %v2717, %v2716
        %2734 = vmatprep.subr.bf16.mxu0 0
        %2735 = vmatpush1.bf16.msra.mxu0 %v2718
        %2736 = vmatprep.subr.bf16.mxu0 0
        %2737 = vmatpush1.bf16.msra.mxu0 %v2719
        %2738 = vmatprep.subr.bf16.mxu0 0
        %2739 = vmatpush1.bf16.msra.mxu0 %v2720
        %2740 = vmatprep.subr.bf16.mxu0 0
        %2741 = vmatpush1.bf16.msra.mxu0 %v2721
        %2742 = vmatprep.subr.bf16.mxu0 0
        %2743 = vmatpush1.bf16.msra.mxu0 %v2722
        %2744 = vmatprep.subr.bf16.mxu0 0
        %2745 = vmatpush1.bf16.msra.mxu0 %v2723
        %2746 = vmatprep.subr.bf16.mxu0 0
        %2747 = vmatpush1.bf16.msra.mxu0 %v2724
        %2748 = vmatprep.subr.bf16.mxu0 0
        %2749 = vmatpush1.bf16.msra.mxu0 %v2725
        %2750 = vmatprep.subr.bf16.mxu0 0
        %2751 = vmatpush1.bf16.msra.mxu0 0
        %2752 = vmatprep.subr.bf16.mxu0 0
        %2753 = vmatpush1.bf16.msra.mxu0 0
        %2754 = vmatprep.subr.bf16.mxu0 0
        %2755 = vmatpush1.bf16.msra.mxu0 0
        %2756 = vmatprep.subr.bf16.mxu0 0
        %2757 = vmatpush1.bf16.msra.mxu0 0
        %2758 = vmatprep.subr.bf16.mxu0 0
        %2759 = vmatpush1.bf16.msra.mxu0 0
        %2760 = vmatprep.subr.bf16.mxu0 0
        %2761 = vmatpush1.bf16.msra.mxu0 0
        %2762 = vmatprep.subr.bf16.mxu0 0
        %2763 = vmatpush1.bf16.msra.mxu0 0
        %2764 = vmatprep.subr.bf16.mxu0 0
        %2765 = vmatpush1.bf16.msra.mxu0 0
        %2766 = vmatprep.mubr.bf16.mxu0 0
        %2767 = vmatmul.mubr.bf16.gmra.mrb[0].mxu0 %v2633
        %v2768 = vpop.f32.mrb[0].mxu0
        %v2769 = vadd.f32 0.0, %v2768
        %v2770 = vpop.f32.mrb[0].mxu0
        %v2771 = vpop.f32.mrb[0].mxu0
        %v2772 = vadd.f32 0.0, %v2771
        %v2773 = vpop.f32.mrb[0].mxu0
        %2774 = vmatprep.mubr.bf16.mxu0 0
        %2775 = vmatmul.mubr.bf16.gmra.mrb[0].mxu0 %v2635
        %v2776 = vpop.f32.mrb[0].mxu0
        %v2777 = vadd.f32 0.0, %v2776
        %v2778 = vpop.f32.mrb[0].mxu0
        %v2779 = vpop.f32.mrb[0].mxu0
        %v2780 = vadd.f32 0.0, %v2779
        %v2781 = vpop.f32.mrb[0].mxu0
        %2782 = vmatprep.mubr.bf16.mxu0 0
        %2783 = vmatmul.mubr.bf16.gmra.mrb[0].mxu0 %v2637
        %v2784 = vpop.f32.mrb[0].mxu0
        %v2785 = vadd.f32 0.0, %v2784
        %v2786 = vpop.f32.mrb[0].mxu0
        %v2787 = vpop.f32.mrb[0].mxu0
        %v2788 = vadd.f32 0.0, %v2787
        %v2789 = vpop.f32.mrb[0].mxu0
        %2790 = vmatprep.mubr.bf16.mxu0 0
        %2791 = vmatmul.mubr.bf16.gmra.mrb[0].mxu0 %v2639
        %v2792 = vpop.f32.mrb[0].mxu0
        %v2793 = vadd.f32 0.0, %v2792
        %v2794 = vpop.f32.mrb[0].mxu0
        %v2795 = vpop.f32.mrb[0].mxu0
        %v2796 = vadd.f32 0.0, %v2795
        %v2797 = vpop.f32.mrb[0].mxu0
        %2798 = vmatprep.mubr.bf16.mxu0 0
        %2799 = vmatmul.mubr.bf16.gmra.mrb[0].mxu0 %v2641
        %v2800 = vpop.f32.mrb[0].mxu0
        %v2801 = vadd.f32 0.0, %v2800
        %v2802 = vpop.f32.mrb[0].mxu0
        %v2803 = vpop.f32.mrb[0].mxu0
        %v2804 = vadd.f32 0.0, %v2803
        %v2805 = vpop.f32.mrb[0].mxu0
        %2806 = vmatprep.mubr.bf16.mxu0 0
        %2807 = vmatmul.mubr.bf16.gmra.mrb[0].mxu0 %v2643
        %v2808 = vpop.f32.mrb[0].mxu0
        %v2809 = vadd.f32 0.0, %v2808
        %v2810 = vpop.f32.mrb[0].mxu0
        %v2811 = vpop.f32.mrb[0].mxu0
        %v2812 = vadd.f32 0.0, %v2811
        %v2813 = vpop.f32.mrb[0].mxu0
        %2814 = vmatprep.mubr.bf16.mxu0 0
        %2815 = vmatmul.mubr.bf16.gmra.mrb[0].mxu0 %v2645
        %v2816 = vpop.f32.mrb[0].mxu0
        %v2817 = vadd.f32 0.0, %v2816
        %v2818 = vpop.f32.mrb[0].mxu0
        %v2819 = vpop.f32.mrb[0].mxu0
        %v2820 = vadd.f32 0.0, %v2819
        %v2821 = vpop.f32.mrb[0].mxu0
        %2822 = vmatprep.mubr.bf16.mxu0 0
        %2823 = vmatmul.mubr.bf16.gmra.mrb[0].mxu0 %v2647
        %v2824 = vpop.f32.mrb[0].mxu0
        %v2825 = vadd.f32 0.0, %v2824
        %v2826 = vpop.f32.mrb[0].mxu0
        %v2827 = vpop.f32.mrb[0].mxu0
        %v2828 = vadd.f32 0.0, %v2827
        %v2829 = vpop.f32.mrb[0].mxu0
        %2830 = vmatprep.mubr.bf16.mxu0 0
        %2831 = vmatmul.mubr.bf16.gmra.mrb[0].mxu0 %v2649
        %v2832 = vpop.f32.mrb[0].mxu0
        %v2833 = vadd.f32 0.0, %v2832
        %v2834 = vpop.f32.mrb[0].mxu0
        %v2835 = vpop.f32.mrb[0].mxu0
        %v2836 = vadd.f32 0.0, %v2835
        %v2837 = vpop.f32.mrb[0].mxu0
        %2838 = vmatprep.mubr.bf16.mxu0 0
        %2839 = vmatmul.mubr.bf16.gmra.mrb[0].mxu0 %v2651
        %v2840 = vpop.f32.mrb[0].mxu0
        %v2841 = vadd.f32 0.0, %v2840
        %v2842 = vpop.f32.mrb[0].mxu0
        %v2843 = vpop.f32.mrb[0].mxu0
        %v2844 = vadd.f32 0.0, %v2843
        %v2845 = vpop.f32.mrb[0].mxu0
        %2846 = vmatprep.mubr.bf16.mxu0 0
        %2847 = vmatmul.mubr.bf16.gmra.mrb[0].mxu0 %v2653
        %v2848 = vpop.f32.mrb[0].mxu0
        %v2849 = vadd.f32 0.0, %v2848
        %v2850 = vpop.f32.mrb[0].mxu0
        %v2851 = vpop.f32.mrb[0].mxu0
        %v2852 = vadd.f32 0.0, %v2851
        %v2853 = vpop.f32.mrb[0].mxu0
        %2854 = vmatprep.mubr.bf16.mxu0 0
        %2855 = vmatmul.mubr.bf16.gmra.mrb[0].mxu0 %v2655
        %v2856 = vpop.f32.mrb[0].mxu0
        %v2857 = vadd.f32 0.0, %v2856
        %v2858 = vpop.f32.mrb[0].mxu0
        %v2859 = vpop.f32.mrb[0].mxu0
        %v2860 = vadd.f32 0.0, %v2859
        %v2861 = vpop.f32.mrb[0].mxu0
        %2862 = vmatprep.mubr.bf16.mxu0 0
        %2863 = vmatmul.mubr.bf16.gmra.mrb[0].mxu0 %v2657
        %v2864 = vpop.f32.mrb[0].mxu0
        %v2865 = vadd.f32 0.0, %v2864
        %v2866 = vpop.f32.mrb[0].mxu0
        %v2867 = vpop.f32.mrb[0].mxu0
        %v2868 = vadd.f32 0.0, %v2867
        %v2869 = vpop.f32.mrb[0].mxu0
        %2870 = vmatprep.mubr.bf16.mxu0 0
        %2871 = vmatmul.mubr.bf16.gmra.mrb[0].mxu0 %v2659
        %v2872 = vpop.f32.mrb[0].mxu0
        %v2873 = vadd.f32 0.0, %v2872
        %v2874 = vpop.f32.mrb[0].mxu0
        %v2875 = vpop.f32.mrb[0].mxu0
        %v2876 = vadd.f32 0.0, %v2875
        %v2877 = vpop.f32.mrb[0].mxu0
        %2878 = vmatprep.mubr.bf16.mxu0 0
        %2879 = vmatmul.mubr.bf16.gmra.mrb[0].mxu0 %v2661
        %v2880 = vpop.f32.mrb[0].mxu0
        %v2881 = vadd.f32 0.0, %v2880
        %v2882 = vpop.f32.mrb[0].mxu0
        %v2883 = vpop.f32.mrb[0].mxu0
        %v2884 = vadd.f32 0.0, %v2883
        %v2885 = vpop.f32.mrb[0].mxu0
        %2886 = vmatprep.mubr.bf16.mxu0 0
        %2887 = vmatmul.mubr.bf16.gmra.mrb[0].mxu0 %v2663
        %v2888 = vpop.f32.mrb[0].mxu0
        %v2889 = vadd.f32 0.0, %v2888
        %v2890 = vpop.f32.mrb[0].mxu0
        %v2891 = vpop.f32.mrb[0].mxu0
        %v2892 = vadd.f32 0.0, %v2891
        %v2893 = vpop.f32.mrb[0].mxu0
        %2894 = vmatprep.mubr.bf16.mxu0 0
        %2895 = vmatmul.mubr.bf16.gmra.mrb[0].mxu0 %v2665
        %v2896 = vpop.f32.mrb[0].mxu0
        %v2897 = vadd.f32 0.0, %v2896
        %v2898 = vpop.f32.mrb[0].mxu0
        %v2899 = vpop.f32.mrb[0].mxu0
        %v2900 = vadd.f32 0.0, %v2899
        %v2901 = vpop.f32.mrb[0].mxu0
        %2902 = vmatprep.mubr.bf16.mxu0 0
        %2903 = vmatmul.mubr.bf16.gmra.mrb[0].mxu0 %v2667
        %v2904 = vpop.f32.mrb[0].mxu0
        %v2905 = vadd.f32 0.0, %v2904
        %v2906 = vpop.f32.mrb[0].mxu0
        %v2907 = vpop.f32.mrb[0].mxu0
        %v2908 = vadd.f32 0.0, %v2907
        %v2909 = vpop.f32.mrb[0].mxu0
        %2910 = vdwg.mxu0
        %v2911 = vadd.f32 %v2448, %v2769
        %v2912 = vadd.f32 %v2449, %v2772
        %v2913 = vadd.f32 %v2450, %v2777
        %v2914 = vadd.f32 %v2451, %v2780
        %v2915 = vadd.f32 %v2452, %v2785
        %v2916 = vadd.f32 %v2453, %v2788
        %v2917 = vadd.f32 %v2454, %v2793
        %v2918 = vadd.f32 %v2455, %v2796
        %v2919 = vadd.f32 %v2456, %v2801
        %v2920 = vadd.f32 %v2457, %v2804
        %v2921 = vadd.f32 %v2458, %v2809
        %v2922 = vadd.f32 %v2459, %v2812
        %v2923 = vadd.f32 %v2460, %v2817
        %v2924 = vadd.f32 %v2461, %v2820
        %v2925 = vadd.f32 %v2462, %v2825
        %v2926 = vadd.f32 %v2463, %v2828
        %v2927 = vadd.f32 %v2464, %v2833
        %v2928 = vadd.f32 %v2465, %v2836
        %v2929 = vadd.f32 %v2466, %v2841
        %v2930 = vadd.f32 %v2467, %v2844
        %v2931 = vadd.f32 %v2468, %v2849
        %v2932 = vadd.f32 %v2469, %v2852
        %v2933 = vadd.f32 %v2470, %v2857
        %v2934 = vadd.f32 %v2471, %v2860
        %v2935 = vadd.f32 %v2472, %v2865
        %v2936 = vadd.f32 %v2473, %v2868
        %v2937 = vadd.f32 %v2474, %v2873
        %v2938 = vadd.f32 %v2475, %v2876
        %v2939 = vadd.f32 %v2476, %v2881
        %v2940 = vadd.f32 %v2477, %v2884
        %v2941 = vadd.f32 %v2478, %v2889
        %v2942 = vadd.f32 %v2479, %v2892
        %v2943 = vadd.f32 %v2480, %v2897
        %v2944 = vadd.f32 %v2481, %v2900
        %v2945 = vadd.f32 %v2482, %v2905
        %v2946 = vadd.f32 %v2483, %v2908
        %v2947 = vld [vmem:[#allocation2 + $0x98] sm:$0x3]
        %s2948 = scalar_lea.vmem %s4, 256
        %v2949 = vld [vmem:[%s2948] sm:$0xf]
        %v2950 = vld [vmem:[%s2948 + $0x4] sm:$0xf]
        %v2951 = vld [vmem:[%s2948 + $0x8] sm:$0xf]
        %v2952 = vld [vmem:[%s2948 + $0xc] sm:$0xf]
        %v2953 = vld [vmem:[%s2948 + $0x10] sm:$0xf]
        %v2954 = vld [vmem:[%s2948 + $0x14] sm:$0xf]
        %v2955 = vld [vmem:[%s2948 + $0x18] sm:$0xf]
        %v2956 = vld [vmem:[%s2948 + $0x1c] sm:$0xf]
        %v2957 = vld [vmem:[%s2948 + $0x20] sm:$0xf]
        %v2958 = vld [vmem:[%s2948 + $0x24] sm:$0xf]
        %v2959 = vld [vmem:[%s2948 + $0x28] sm:$0xf]
        %v2960 = vld [vmem:[%s2948 + $0x2c] sm:$0xf]
        %v2961 = vld [vmem:[%s2948 + $0x30] sm:$0xf]
        %v2962 = vld [vmem:[%s2948 + $0x34] sm:$0xf]
        %v2963 = vld [vmem:[%s2948 + $0x38] sm:$0xf]
        %v2964 = vld [vmem:[%s2948 + $0x3c] sm:$0xf]
        %v2966 = vunpack.c.l.b16 %v2947
        %v2967 = vpack.c.b16 %v2966, %v2966
        %vm2968 = vsmask.f32 6400
        %v2970 = vshrl.u32 %v2612, 16
        %v2972 = vrot.slane %v2970, 1
        %v2973 = vshll.u32 %v2612, 16
        %v2975 = vrot.slane %v2973, 2
        %v2976 = vor.u32 %v2972, %v2975
        %v2978 = vshrl.u32 %v2613, 16
        %v2980 = vrot.slane %v2978, 1
        %v2981 = vshll.u32 %v2613, 16
        %v2983 = vrot.slane %v2981, 2
        %v2984 = vor.u32 %v2980, %v2983
        %v2985 = vsel %vm2968, %v2976, %v2984
        %v2987 = vshrl.u32 %v2614, 16
        %v2989 = vrot.slane %v2987, 1
        %v2990 = vshll.u32 %v2614, 16
        %v2992 = vrot.slane %v2990, 2
        %v2993 = vor.u32 %v2989, %v2992
        %v2994 = vsel %vm2968, %v2984, %v2993
        %v2996 = vshrl.u32 %v2615, 16
        %v2998 = vrot.slane %v2996, 1
        %v2999 = vshll.u32 %v2615, 16
        %v3001 = vrot.slane %v2999, 2
        %v3002 = vor.u32 %v2998, %v3001
        %v3003 = vsel %vm2968, %v2993, %v3002
        %v3005 = vshrl.u32 %v2616, 16
        %v3007 = vrot.slane %v3005, 1
        %v3008 = vshll.u32 %v2616, 16
        %v3010 = vrot.slane %v3008, 2
        %v3011 = vor.u32 %v3007, %v3010
        %v3012 = vsel %vm2968, %v3002, %v3011
        %v3014 = vshrl.u32 %v2617, 16
        %v3016 = vrot.slane %v3014, 1
        %v3017 = vshll.u32 %v2617, 16
        %v3019 = vrot.slane %v3017, 2
        %v3020 = vor.u32 %v3016, %v3019
        %v3021 = vsel %vm2968, %v3011, %v3020
        %v3023 = vshrl.u32 %v2618, 16
        %v3025 = vrot.slane %v3023, 1
        %v3026 = vshll.u32 %v2618, 16
        %v3028 = vrot.slane %v3026, 2
        %v3029 = vor.u32 %v3025, %v3028
        %v3030 = vsel %vm2968, %v3020, %v3029
        %v3032 = vshrl.u32 %v2619, 16
        %v3034 = vrot.slane %v3032, 1
        %v3035 = vshll.u32 %v2619, 16
        %v3037 = vrot.slane %v3035, 2
        %v3038 = vor.u32 %v3034, %v3037
        %v3039 = vsel %vm2968, %v3029, %v3038
        %v3041 = vshrl.u32 %v2620, 16
        %v3043 = vrot.slane %v3041, 1
        %v3044 = vshll.u32 %v2620, 16
        %v3046 = vrot.slane %v3044, 2
        %v3047 = vor.u32 %v3043, %v3046
        %v3048 = vsel %vm2968, %v3038, %v3047
        %v3050 = vshrl.u32 %v2621, 16
        %v3052 = vrot.slane %v3050, 1
        %v3053 = vshll.u32 %v2621, 16
        %v3055 = vrot.slane %v3053, 2
        %v3056 = vor.u32 %v3052, %v3055
        %v3057 = vsel %vm2968, %v3047, %v3056
        %v3059 = vshrl.u32 %v2622, 16
        %v3061 = vrot.slane %v3059, 1
        %v3062 = vshll.u32 %v2622, 16
        %v3064 = vrot.slane %v3062, 2
        %v3065 = vor.u32 %v3061, %v3064
        %v3066 = vsel %vm2968, %v3056, %v3065
        %v3068 = vshrl.u32 %v2623, 16
        %v3070 = vrot.slane %v3068, 1
        %v3071 = vshll.u32 %v2623, 16
        %v3073 = vrot.slane %v3071, 2
        %v3074 = vor.u32 %v3070, %v3073
        %v3075 = vsel %vm2968, %v3065, %v3074
        %v3077 = vshrl.u32 %v2624, 16
        %v3079 = vrot.slane %v3077, 1
        %v3080 = vshll.u32 %v2624, 16
        %v3082 = vrot.slane %v3080, 2
        %v3083 = vor.u32 %v3079, %v3082
        %v3084 = vsel %vm2968, %v3074, %v3083
        %v3086 = vshrl.u32 %v2625, 16
        %v3088 = vrot.slane %v3086, 1
        %v3089 = vshll.u32 %v2625, 16
        %v3091 = vrot.slane %v3089, 2
        %v3092 = vor.u32 %v3088, %v3091
        %v3093 = vsel %vm2968, %v3083, %v3092
        %v3095 = vshrl.u32 %v2626, 16
        %v3097 = vrot.slane %v3095, 1
        %v3098 = vshll.u32 %v2626, 16
        %v3100 = vrot.slane %v3098, 2
        %v3101 = vor.u32 %v3097, %v3100
        %v3102 = vsel %vm2968, %v3092, %v3101
        %v3104 = vshrl.u32 %v2627, 16
        %v3106 = vrot.slane %v3104, 1
        %v3107 = vshll.u32 %v2627, 16
        %v3109 = vrot.slane %v3107, 2
        %v3110 = vor.u32 %v3106, %v3109
        %v3111 = vsel %vm2968, %v3101, %v3110
        %v3113 = vshrl.u32 %v2628, 16
        %v3115 = vrot.slane %v3113, 1
        %v3116 = vshll.u32 %v2628, 16
        %v3118 = vrot.slane %v3116, 2
        %v3119 = vor.u32 %v3115, %v3118
        %v3120 = vsel %vm2968, %v3110, %v3119
        %v3122 = vshrl.u32 %v2629, 16
        %v3124 = vrot.slane %v3122, 1
        %v3125 = vshll.u32 %v2629, 16
        %v3127 = vrot.slane %v3125, 2
        %v3128 = vor.u32 %v3124, %v3127
        %v3129 = vsel %vm2968, %v3119, %v3128
        %v3131 = vshrl.u32 %v2967, 16
        %v3133 = vrot.slane %v3131, 1
        %v3134 = vshll.u32 %v2967, 16
        %v3136 = vrot.slane %v3134, 2
        %v3137 = vor.u32 %v3133, %v3136
        %v3138 = vsel %vm2968, %v3128, %v3137
        %v3173 = vunpack.c.l.b16 %v2949
        %v3174 = vunpack.c.l.b16 %v2950
        %v3175 = vunpack.c.l.b16 %v2951
        %v3176 = vunpack.c.l.b16 %v2952
        %v3177 = vunpack.c.l.b16 %v2953
        %v3178 = vunpack.c.l.b16 %v2954
        %v3179 = vunpack.c.l.b16 %v2955
        %v3180 = vunpack.c.l.b16 %v2956
        %v3181 = vunpack.c.l.b16 %v2957
        %v3182 = vunpack.c.l.b16 %v2958
        %v3183 = vunpack.c.l.b16 %v2959
        %v3184 = vunpack.c.l.b16 %v2960
        %v3185 = vunpack.c.l.b16 %v2961
        %v3186 = vunpack.c.l.b16 %v2962
        %v3187 = vunpack.c.l.b16 %v2963
        %v3188 = vunpack.c.l.b16 %v2964
        %v3189 = vpack.c.b16 %v3174, %v3173
        %v3190 = vpack.c.b16 %v3176, %v3175
        %v3191 = vpack.c.b16 %v3178, %v3177
        %v3192 = vpack.c.b16 %v3180, %v3179
        %v3193 = vpack.c.b16 %v3182, %v3181
        %v3194 = vpack.c.b16 %v3184, %v3183
        %v3195 = vpack.c.b16 %v3186, %v3185
        %v3196 = vpack.c.b16 %v3188, %v3187
        %3205 = vmatprep.subr.bf16.mxu0 0
        %3206 = vmatpush1.bf16.msra.mxu0 %v3189
        %3207 = vmatprep.subr.bf16.mxu0 0
        %3208 = vmatpush1.bf16.msra.mxu0 %v3190
        %3209 = vmatprep.subr.bf16.mxu0 0
        %3210 = vmatpush1.bf16.msra.mxu0 %v3191
        %3211 = vmatprep.subr.bf16.mxu0 0
        %3212 = vmatpush1.bf16.msra.mxu0 %v3192
        %3213 = vmatprep.subr.bf16.mxu0 0
        %3214 = vmatpush1.bf16.msra.mxu0 %v3193
        %3215 = vmatprep.subr.bf16.mxu0 0
        %3216 = vmatpush1.bf16.msra.mxu0 %v3194
        %3217 = vmatprep.subr.bf16.mxu0 0
        %3218 = vmatpush1.bf16.msra.mxu0 %v3195
        %3219 = vmatprep.subr.bf16.mxu0 0
        %3220 = vmatpush1.bf16.msra.mxu0 %v3196
        %3221 = vmatprep.subr.bf16.mxu0 0
        %3222 = vmatpush1.bf16.msra.mxu0 0
        %3223 = vmatprep.subr.bf16.mxu0 0
        %3224 = vmatpush1.bf16.msra.mxu0 0
        %3225 = vmatprep.subr.bf16.mxu0 0
        %3226 = vmatpush1.bf16.msra.mxu0 0
        %3227 = vmatprep.subr.bf16.mxu0 0
        %3228 = vmatpush1.bf16.msra.mxu0 0
        %3229 = vmatprep.subr.bf16.mxu0 0
        %3230 = vmatpush1.bf16.msra.mxu0 0
        %3231 = vmatprep.subr.bf16.mxu0 0
        %3232 = vmatpush1.bf16.msra.mxu0 0
        %3233 = vmatprep.subr.bf16.mxu0 0
        %3234 = vmatpush1.bf16.msra.mxu0 0
        %3235 = vmatprep.subr.bf16.mxu0 0
        %3236 = vmatpush1.bf16.msra.mxu0 0
        %3237 = vmatprep.mubr.bf16.mxu0 0
        %3238 = vmatmul.mubr.bf16.gmra.mrb[0].mxu0 %v2985
        %v3239 = vpop.f32.mrb[0].mxu0
        %v3240 = vadd.f32 0.0, %v3239
        %v3241 = vpop.f32.mrb[0].mxu0
        %v3242 = vpop.f32.mrb[0].mxu0
        %v3243 = vadd.f32 0.0, %v3242
        %v3244 = vpop.f32.mrb[0].mxu0
        %3245 = vmatprep.mubr.bf16.mxu0 0
        %3246 = vmatmul.mubr.bf16.gmra.mrb[0].mxu0 %v2994
        %v3247 = vpop.f32.mrb[0].mxu0
        %v3248 = vadd.f32 0.0, %v3247
        %v3249 = vpop.f32.mrb[0].mxu0
        %v3250 = vpop.f32.mrb[0].mxu0
        %v3251 = vadd.f32 0.0, %v3250
        %v3252 = vpop.f32.mrb[0].mxu0
        %3253 = vmatprep.mubr.bf16.mxu0 0
        %3254 = vmatmul.mubr.bf16.gmra.mrb[0].mxu0 %v3003
        %v3255 = vpop.f32.mrb[0].mxu0
        %v3256 = vadd.f32 0.0, %v3255
        %v3257 = vpop.f32.mrb[0].mxu0
        %v3258 = vpop.f32.mrb[0].mxu0
        %v3259 = vadd.f32 0.0, %v3258
        %v3260 = vpop.f32.mrb[0].mxu0
        %3261 = vmatprep.mubr.bf16.mxu0 0
        %3262 = vmatmul.mubr.bf16.gmra.mrb[0].mxu0 %v3012
        %v3263 = vpop.f32.mrb[0].mxu0
        %v3264 = vadd.f32 0.0, %v3263
        %v3265 = vpop.f32.mrb[0].mxu0
        %v3266 = vpop.f32.mrb[0].mxu0
        %v3267 = vadd.f32 0.0, %v3266
        %v3268 = vpop.f32.mrb[0].mxu0
        %3269 = vmatprep.mubr.bf16.mxu0 0
        %3270 = vmatmul.mubr.bf16.gmra.mrb[0].mxu0 %v3021
        %v3271 = vpop.f32.mrb[0].mxu0
        %v3272 = vadd.f32 0.0, %v3271
        %v3273 = vpop.f32.mrb[0].mxu0
        %v3274 = vpop.f32.mrb[0].mxu0
        %v3275 = vadd.f32 0.0, %v3274
        %v3276 = vpop.f32.mrb[0].mxu0
        %3277 = vmatprep.mubr.bf16.mxu0 0
        %3278 = vmatmul.mubr.bf16.gmra.mrb[0].mxu0 %v3030
        %v3279 = vpop.f32.mrb[0].mxu0
        %v3280 = vadd.f32 0.0, %v3279
        %v3281 = vpop.f32.mrb[0].mxu0
        %v3282 = vpop.f32.mrb[0].mxu0
        %v3283 = vadd.f32 0.0, %v3282
        %v3284 = vpop.f32.mrb[0].mxu0
        %3285 = vmatprep.mubr.bf16.mxu0 0
        %3286 = vmatmul.mubr.bf16.gmra.mrb[0].mxu0 %v3039
        %v3287 = vpop.f32.mrb[0].mxu0
        %v3288 = vadd.f32 0.0, %v3287
        %v3289 = vpop.f32.mrb[0].mxu0
        %v3290 = vpop.f32.mrb[0].mxu0
        %v3291 = vadd.f32 0.0, %v3290
        %v3292 = vpop.f32.mrb[0].mxu0
        %3293 = vmatprep.mubr.bf16.mxu0 0
        %3294 = vmatmul.mubr.bf16.gmra.mrb[0].mxu0 %v3048
        %v3295 = vpop.f32.mrb[0].mxu0
        %v3296 = vadd.f32 0.0, %v3295
        %v3297 = vpop.f32.mrb[0].mxu0
        %v3298 = vpop.f32.mrb[0].mxu0
        %v3299 = vadd.f32 0.0, %v3298
        %v3300 = vpop.f32.mrb[0].mxu0
        %3301 = vmatprep.mubr.bf16.mxu0 0
        %3302 = vmatmul.mubr.bf16.gmra.mrb[0].mxu0 %v3057
        %v3303 = vpop.f32.mrb[0].mxu0
        %v3304 = vadd.f32 0.0, %v3303
        %v3305 = vpop.f32.mrb[0].mxu0
        %v3306 = vpop.f32.mrb[0].mxu0
        %v3307 = vadd.f32 0.0, %v3306
        %v3308 = vpop.f32.mrb[0].mxu0
        %3309 = vmatprep.mubr.bf16.mxu0 0
        %3310 = vmatmul.mubr.bf16.gmra.mrb[0].mxu0 %v3066
        %v3311 = vpop.f32.mrb[0].mxu0
        %v3312 = vadd.f32 0.0, %v3311
        %v3313 = vpop.f32.mrb[0].mxu0
        %v3314 = vpop.f32.mrb[0].mxu0
        %v3315 = vadd.f32 0.0, %v3314
        %v3316 = vpop.f32.mrb[0].mxu0
        %3317 = vmatprep.mubr.bf16.mxu0 0
        %3318 = vmatmul.mubr.bf16.gmra.mrb[0].mxu0 %v3075
        %v3319 = vpop.f32.mrb[0].mxu0
        %v3320 = vadd.f32 0.0, %v3319
        %v3321 = vpop.f32.mrb[0].mxu0
        %v3322 = vpop.f32.mrb[0].mxu0
        %v3323 = vadd.f32 0.0, %v3322
        %v3324 = vpop.f32.mrb[0].mxu0
        %3325 = vmatprep.mubr.bf16.mxu0 0
        %3326 = vmatmul.mubr.bf16.gmra.mrb[0].mxu0 %v3084
        %v3327 = vpop.f32.mrb[0].mxu0
        %v3328 = vadd.f32 0.0, %v3327
        %v3329 = vpop.f32.mrb[0].mxu0
        %v3330 = vpop.f32.mrb[0].mxu0
        %v3331 = vadd.f32 0.0, %v3330
        %v3332 = vpop.f32.mrb[0].mxu0
        %3333 = vmatprep.mubr.bf16.mxu0 0
        %3334 = vmatmul.mubr.bf16.gmra.mrb[0].mxu0 %v3093
        %v3335 = vpop.f32.mrb[0].mxu0
        %v3336 = vadd.f32 0.0, %v3335
        %v3337 = vpop.f32.mrb[0].mxu0
        %v3338 = vpop.f32.mrb[0].mxu0
        %v3339 = vadd.f32 0.0, %v3338
        %v3340 = vpop.f32.mrb[0].mxu0
        %3341 = vmatprep.mubr.bf16.mxu0 0
        %3342 = vmatmul.mubr.bf16.gmra.mrb[0].mxu0 %v3102
        %v3343 = vpop.f32.mrb[0].mxu0
        %v3344 = vadd.f32 0.0, %v3343
        %v3345 = vpop.f32.mrb[0].mxu0
        %v3346 = vpop.f32.mrb[0].mxu0
        %v3347 = vadd.f32 0.0, %v3346
        %v3348 = vpop.f32.mrb[0].mxu0
        %3349 = vmatprep.mubr.bf16.mxu0 0
        %3350 = vmatmul.mubr.bf16.gmra.mrb[0].mxu0 %v3111
        %v3351 = vpop.f32.mrb[0].mxu0
        %v3352 = vadd.f32 0.0, %v3351
        %v3353 = vpop.f32.mrb[0].mxu0
        %v3354 = vpop.f32.mrb[0].mxu0
        %v3355 = vadd.f32 0.0, %v3354
        %v3356 = vpop.f32.mrb[0].mxu0
        %3357 = vmatprep.mubr.bf16.mxu0 0
        %3358 = vmatmul.mubr.bf16.gmra.mrb[0].mxu0 %v3120
        %v3359 = vpop.f32.mrb[0].mxu0
        %v3360 = vadd.f32 0.0, %v3359
        %v3361 = vpop.f32.mrb[0].mxu0
        %v3362 = vpop.f32.mrb[0].mxu0
        %v3363 = vadd.f32 0.0, %v3362
        %v3364 = vpop.f32.mrb[0].mxu0
        %3365 = vmatprep.mubr.bf16.mxu0 0
        %3366 = vmatmul.mubr.bf16.gmra.mrb[0].mxu0 %v3129
        %v3367 = vpop.f32.mrb[0].mxu0
        %v3368 = vadd.f32 0.0, %v3367
        %v3369 = vpop.f32.mrb[0].mxu0
        %v3370 = vpop.f32.mrb[0].mxu0
        %v3371 = vadd.f32 0.0, %v3370
        %v3372 = vpop.f32.mrb[0].mxu0
        %3373 = vmatprep.mubr.bf16.mxu0 0
        %3374 = vmatmul.mubr.bf16.gmra.mrb[0].mxu0 %v3138
        %v3375 = vpop.f32.mrb[0].mxu0
        %v3376 = vadd.f32 0.0, %v3375
        %v3377 = vpop.f32.mrb[0].mxu0
        %v3378 = vpop.f32.mrb[0].mxu0
        %v3379 = vadd.f32 0.0, %v3378
        %v3380 = vpop.f32.mrb[0].mxu0
        %3381 = vdwg.mxu0
        %v3382 = vadd.f32 %v2911, %v3240
        %v3383 = vadd.f32 %v2912, %v3243
        %v3384 = vadd.f32 %v2913, %v3248
        %v3385 = vadd.f32 %v2914, %v3251
        %v3386 = vadd.f32 %v2915, %v3256
        %v3387 = vadd.f32 %v2916, %v3259
        %v3388 = vadd.f32 %v2917, %v3264
        %v3389 = vadd.f32 %v2918, %v3267
        %v3390 = vadd.f32 %v2919, %v3272
        %v3391 = vadd.f32 %v2920, %v3275
        %v3392 = vadd.f32 %v2921, %v3280
        %v3393 = vadd.f32 %v2922, %v3283
        %v3394 = vadd.f32 %v2923, %v3288
        %v3395 = vadd.f32 %v2924, %v3291
        %v3396 = vadd.f32 %v2925, %v3296
        %v3397 = vadd.f32 %v2926, %v3299
        %v3398 = vadd.f32 %v2927, %v3304
        %v3399 = vadd.f32 %v2928, %v3307
        %v3400 = vadd.f32 %v2929, %v3312
        %v3401 = vadd.f32 %v2930, %v3315
        %v3402 = vadd.f32 %v2931, %v3320
        %v3403 = vadd.f32 %v2932, %v3323
        %v3404 = vadd.f32 %v2933, %v3328
        %v3405 = vadd.f32 %v2934, %v3331
        %v3406 = vadd.f32 %v2935, %v3336
        %v3407 = vadd.f32 %v2936, %v3339
        %v3408 = vadd.f32 %v2937, %v3344
        %v3409 = vadd.f32 %v2938, %v3347
        %v3410 = vadd.f32 %v2939, %v3352
        %v3411 = vadd.f32 %v2940, %v3355
        %v3412 = vadd.f32 %v2941, %v3360
        %v3413 = vadd.f32 %v2942, %v3363
        %v3414 = vadd.f32 %v2943, %v3368
        %v3415 = vadd.f32 %v2944, %v3371
        %v3416 = vadd.f32 %v2945, %v3376
        %v3417 = vadd.f32 %v2946, %v3379
        %v3418 = vld [vmem:[#allocation2 + $0x8] sm:$0xc]
        %s3419 = scalar_lea.vmem %s4, 320
        %v3420 = vld [vmem:[%s3419] sm:$0xf]
        %v3421 = vld [vmem:[%s3419 + $0x4] sm:$0xf]
        %v3422 = vld [vmem:[%s3419 + $0x8] sm:$0xf]
        %v3423 = vld [vmem:[%s3419 + $0xc] sm:$0xf]
        %v3424 = vld [vmem:[%s3419 + $0x10] sm:$0xf]
        %v3425 = vld [vmem:[%s3419 + $0x14] sm:$0xf]
        %v3426 = vld [vmem:[%s3419 + $0x18] sm:$0xf]
        %v3427 = vld [vmem:[%s3419 + $0x1c] sm:$0xf]
        %v3428 = vld [vmem:[%s3419 + $0x20] sm:$0xf]
        %v3429 = vld [vmem:[%s3419 + $0x24] sm:$0xf]
        %v3430 = vld [vmem:[%s3419 + $0x28] sm:$0xf]
        %v3431 = vld [vmem:[%s3419 + $0x2c] sm:$0xf]
        %v3432 = vld [vmem:[%s3419 + $0x30] sm:$0xf]
        %v3433 = vld [vmem:[%s3419 + $0x34] sm:$0xf]
        %v3434 = vld [vmem:[%s3419 + $0x38] sm:$0xf]
        %v3435 = vld [vmem:[%s3419 + $0x3c] sm:$0xf]
        %v3437 = vunpack.c.l.b16 %v3418
        %v3438 = vpack.c.b16 %v2576, %v3437
        %vm3439 = vcmask 1045504
        %v3440 = vrot.slane %v3438, 2
        %v3441 = vrot.slane %v2613, 2
        %v3442 = vsel %vm3439, %v3440, %v3441
        %v3443 = vrot.slane %v2614, 2
        %v3444 = vsel %vm3439, %v3441, %v3443
        %v3445 = vrot.slane %v2615, 2
        %v3446 = vsel %vm3439, %v3443, %v3445
        %v3447 = vrot.slane %v2616, 2
        %v3448 = vsel %vm3439, %v3445, %v3447
        %v3449 = vrot.slane %v2617, 2
        %v3450 = vsel %vm3439, %v3447, %v3449
        %v3451 = vrot.slane %v2618, 2
        %v3452 = vsel %vm3439, %v3449, %v3451
        %v3453 = vrot.slane %v2619, 2
        %v3454 = vsel %vm3439, %v3451, %v3453
        %v3455 = vrot.slane %v2620, 2
        %v3456 = vsel %vm3439, %v3453, %v3455
        %v3457 = vrot.slane %v2621, 2
        %v3458 = vsel %vm3439, %v3455, %v3457
        %v3459 = vrot.slane %v2622, 2
        %v3460 = vsel %vm3439, %v3457, %v3459
        %v3461 = vrot.slane %v2623, 2
        %v3462 = vsel %vm3439, %v3459, %v3461
        %v3463 = vrot.slane %v2624, 2
        %v3464 = vsel %vm3439, %v3461, %v3463
        %v3465 = vrot.slane %v2625, 2
        %v3466 = vsel %vm3439, %v3463, %v3465
        %v3467 = vrot.slane %v2626, 2
        %v3468 = vsel %vm3439, %v3465, %v3467
        %v3469 = vrot.slane %v2627, 2
        %v3470 = vsel %vm3439, %v3467, %v3469
        %v3471 = vrot.slane %v2628, 2
        %v3472 = vsel %vm3439, %v3469, %v3471
        %v3473 = vrot.slane %v2629, 2
        %v3474 = vsel %vm3439, %v3471, %v3473
        %v3475 = vrot.slane %v2967, 2
        %v3476 = vsel %vm3439, %v3473, %v3475
        %v3511 = vunpack.c.l.b16 %v3420
        %v3512 = vunpack.c.l.b16 %v3421
        %v3513 = vunpack.c.l.b16 %v3422
        %v3514 = vunpack.c.l.b16 %v3423
        %v3515 = vunpack.c.l.b16 %v3424
        %v3516 = vunpack.c.l.b16 %v3425
        %v3517 = vunpack.c.l.b16 %v3426
        %v3518 = vunpack.c.l.b16 %v3427
        %v3519 = vunpack.c.l.b16 %v3428
        %v3520 = vunpack.c.l.b16 %v3429
        %v3521 = vunpack.c.l.b16 %v3430
        %v3522 = vunpack.c.l.b16 %v3431
        %v3523 = vunpack.c.l.b16 %v3432
        %v3524 = vunpack.c.l.b16 %v3433
        %v3525 = vunpack.c.l.b16 %v3434
        %v3526 = vunpack.c.l.b16 %v3435
        %v3527 = vpack.c.b16 %v3512, %v3511
        %v3528 = vpack.c.b16 %v3514, %v3513
        %v3529 = vpack.c.b16 %v3516, %v3515
        %v3530 = vpack.c.b16 %v3518, %v3517
        %v3531 = vpack.c.b16 %v3520, %v3519
        %v3532 = vpack.c.b16 %v3522, %v3521
        %v3533 = vpack.c.b16 %v3524, %v3523
        %v3534 = vpack.c.b16 %v3526, %v3525
        %3543 = vmatprep.subr.bf16.mxu0 0
        %3544 = vmatpush1.bf16.msra.mxu0 %v3527
        %3545 = vmatprep.subr.bf16.mxu0 0
        %3546 = vmatpush1.bf16.msra.mxu0 %v3528
        %3547 = vmatprep.subr.bf16.mxu0 0
        %3548 = vmatpush1.bf16.msra.mxu0 %v3529
        %3549 = vmatprep.subr.bf16.mxu0 0
        %3550 = vmatpush1.bf16.msra.mxu0 %v3530
        %3551 = vmatprep.subr.bf16.mxu0 0
        %3552 = vmatpush1.bf16.msra.mxu0 %v3531
        %3553 = vmatprep.subr.bf16.mxu0 0
        %3554 = vmatpush1.bf16.msra.mxu0 %v3532
        %3555 = vmatprep.subr.bf16.mxu0 0
        %3556 = vmatpush1.bf16.msra.mxu0 %v3533
        %3557 = vmatprep.subr.bf16.mxu0 0
        %3558 = vmatpush1.bf16.msra.mxu0 %v3534
        %3559 = vmatprep.subr.bf16.mxu0 0
        %3560 = vmatpush1.bf16.msra.mxu0 0
        %3561 = vmatprep.subr.bf16.mxu0 0
        %3562 = vmatpush1.bf16.msra.mxu0 0
        %3563 = vmatprep.subr.bf16.mxu0 0
        %3564 = vmatpush1.bf16.msra.mxu0 0
        %3565 = vmatprep.subr.bf16.mxu0 0
        %3566 = vmatpush1.bf16.msra.mxu0 0
        %3567 = vmatprep.subr.bf16.mxu0 0
        %3568 = vmatpush1.bf16.msra.mxu0 0
        %3569 = vmatprep.subr.bf16.mxu0 0
        %3570 = vmatpush1.bf16.msra.mxu0 0
        %3571 = vmatprep.subr.bf16.mxu0 0
        %3572 = vmatpush1.bf16.msra.mxu0 0
        %3573 = vmatprep.subr.bf16.mxu0 0
        %3574 = vmatpush1.bf16.msra.mxu0 0
        %3575 = vmatprep.mubr.bf16.mxu0 0
        %3576 = vmatmul.mubr.bf16.gmra.mrb[0].mxu0 %v3442
        %v3577 = vpop.f32.mrb[0].mxu0
        %v3578 = vadd.f32 0.0, %v3577
        %v3579 = vpop.f32.mrb[0].mxu0
        %v3580 = vpop.f32.mrb[0].mxu0
        %v3581 = vadd.f32 0.0, %v3580
        %v3582 = vpop.f32.mrb[0].mxu0
        %3583 = vmatprep.mubr.bf16.mxu0 0
        %3584 = vmatmul.mubr.bf16.gmra.mrb[0].mxu0 %v3444
        %v3585 = vpop.f32.mrb[0].mxu0
        %v3586 = vadd.f32 0.0, %v3585
        %v3587 = vpop.f32.mrb[0].mxu0
        %v3588 = vpop.f32.mrb[0].mxu0
        %v3589 = vadd.f32 0.0, %v3588
        %v3590 = vpop.f32.mrb[0].mxu0
        %3591 = vmatprep.mubr.bf16.mxu0 0
        %3592 = vmatmul.mubr.bf16.gmra.mrb[0].mxu0 %v3446
        %v3593 = vpop.f32.mrb[0].mxu0
        %v3594 = vadd.f32 0.0, %v3593
        %v3595 = vpop.f32.mrb[0].mxu0
        %v3596 = vpop.f32.mrb[0].mxu0
        %v3597 = vadd.f32 0.0, %v3596
        %v3598 = vpop.f32.mrb[0].mxu0
        %3599 = vmatprep.mubr.bf16.mxu0 0
        %3600 = vmatmul.mubr.bf16.gmra.mrb[0].mxu0 %v3448
        %v3601 = vpop.f32.mrb[0].mxu0
        %v3602 = vadd.f32 0.0, %v3601
        %v3603 = vpop.f32.mrb[0].mxu0
        %v3604 = vpop.f32.mrb[0].mxu0
        %v3605 = vadd.f32 0.0, %v3604
        %v3606 = vpop.f32.mrb[0].mxu0
        %3607 = vmatprep.mubr.bf16.mxu0 0
        %3608 = vmatmul.mubr.bf16.gmra.mrb[0].mxu0 %v3450
        %v3609 = vpop.f32.mrb[0].mxu0
        %v3610 = vadd.f32 0.0, %v3609
        %v3611 = vpop.f32.mrb[0].mxu0
        %v3612 = vpop.f32.mrb[0].mxu0
        %v3613 = vadd.f32 0.0, %v3612
        %v3614 = vpop.f32.mrb[0].mxu0
        %3615 = vmatprep.mubr.bf16.mxu0 0
        %3616 = vmatmul.mubr.bf16.gmra.mrb[0].mxu0 %v3452
        %v3617 = vpop.f32.mrb[0].mxu0
        %v3618 = vadd.f32 0.0, %v3617
        %v3619 = vpop.f32.mrb[0].mxu0
        %v3620 = vpop.f32.mrb[0].mxu0
        %v3621 = vadd.f32 0.0, %v3620
        %v3622 = vpop.f32.mrb[0].mxu0
        %3623 = vmatprep.mubr.bf16.mxu0 0
        %3624 = vmatmul.mubr.bf16.gmra.mrb[0].mxu0 %v3454
        %v3625 = vpop.f32.mrb[0].mxu0
        %v3626 = vadd.f32 0.0, %v3625
        %v3627 = vpop.f32.mrb[0].mxu0
        %v3628 = vpop.f32.mrb[0].mxu0
        %v3629 = vadd.f32 0.0, %v3628
        %v3630 = vpop.f32.mrb[0].mxu0
        %3631 = vmatprep.mubr.bf16.mxu0 0
        %3632 = vmatmul.mubr.bf16.gmra.mrb[0].mxu0 %v3456
        %v3633 = vpop.f32.mrb[0].mxu0
        %v3634 = vadd.f32 0.0, %v3633
        %v3635 = vpop.f32.mrb[0].mxu0
        %v3636 = vpop.f32.mrb[0].mxu0
        %v3637 = vadd.f32 0.0, %v3636
        %v3638 = vpop.f32.mrb[0].mxu0
        %3639 = vmatprep.mubr.bf16.mxu0 0
        %3640 = vmatmul.mubr.bf16.gmra.mrb[0].mxu0 %v3458
        %v3641 = vpop.f32.mrb[0].mxu0
        %v3642 = vadd.f32 0.0, %v3641
        %v3643 = vpop.f32.mrb[0].mxu0
        %v3644 = vpop.f32.mrb[0].mxu0
        %v3645 = vadd.f32 0.0, %v3644
        %v3646 = vpop.f32.mrb[0].mxu0
        %3647 = vmatprep.mubr.bf16.mxu0 0
        %3648 = vmatmul.mubr.bf16.gmra.mrb[0].mxu0 %v3460
        %v3649 = vpop.f32.mrb[0].mxu0
        %v3650 = vadd.f32 0.0, %v3649
        %v3651 = vpop.f32.mrb[0].mxu0
        %v3652 = vpop.f32.mrb[0].mxu0
        %v3653 = vadd.f32 0.0, %v3652
        %v3654 = vpop.f32.mrb[0].mxu0
        %3655 = vmatprep.mubr.bf16.mxu0 0
        %3656 = vmatmul.mubr.bf16.gmra.mrb[0].mxu0 %v3462
        %v3657 = vpop.f32.mrb[0].mxu0
        %v3658 = vadd.f32 0.0, %v3657
        %v3659 = vpop.f32.mrb[0].mxu0
        %v3660 = vpop.f32.mrb[0].mxu0
        %v3661 = vadd.f32 0.0, %v3660
        %v3662 = vpop.f32.mrb[0].mxu0
        %3663 = vmatprep.mubr.bf16.mxu0 0
        %3664 = vmatmul.mubr.bf16.gmra.mrb[0].mxu0 %v3464
        %v3665 = vpop.f32.mrb[0].mxu0
        %v3666 = vadd.f32 0.0, %v3665
        %v3667 = vpop.f32.mrb[0].mxu0
        %v3668 = vpop.f32.mrb[0].mxu0
        %v3669 = vadd.f32 0.0, %v3668
        %v3670 = vpop.f32.mrb[0].mxu0
        %3671 = vmatprep.mubr.bf16.mxu0 0
        %3672 = vmatmul.mubr.bf16.gmra.mrb[0].mxu0 %v3466
        %v3673 = vpop.f32.mrb[0].mxu0
        %v3674 = vadd.f32 0.0, %v3673
        %v3675 = vpop.f32.mrb[0].mxu0
        %v3676 = vpop.f32.mrb[0].mxu0
        %v3677 = vadd.f32 0.0, %v3676
        %v3678 = vpop.f32.mrb[0].mxu0
        %3679 = vmatprep.mubr.bf16.mxu0 0
        %3680 = vmatmul.mubr.bf16.gmra.mrb[0].mxu0 %v3468
        %v3681 = vpop.f32.mrb[0].mxu0
        %v3682 = vadd.f32 0.0, %v3681
        %v3683 = vpop.f32.mrb[0].mxu0
        %v3684 = vpop.f32.mrb[0].mxu0
        %v3685 = vadd.f32 0.0, %v3684
        %v3686 = vpop.f32.mrb[0].mxu0
        %3687 = vmatprep.mubr.bf16.mxu0 0
        %3688 = vmatmul.mubr.bf16.gmra.mrb[0].mxu0 %v3470
        %v3689 = vpop.f32.mrb[0].mxu0
        %v3690 = vadd.f32 0.0, %v3689
        %v3691 = vpop.f32.mrb[0].mxu0
        %v3692 = vpop.f32.mrb[0].mxu0
        %v3693 = vadd.f32 0.0, %v3692
        %v3694 = vpop.f32.mrb[0].mxu0
        %3695 = vmatprep.mubr.bf16.mxu0 0
        %3696 = vmatmul.mubr.bf16.gmra.mrb[0].mxu0 %v3472
        %v3697 = vpop.f32.mrb[0].mxu0
        %v3698 = vadd.f32 0.0, %v3697
        %v3699 = vpop.f32.mrb[0].mxu0
        %v3700 = vpop.f32.mrb[0].mxu0
        %v3701 = vadd.f32 0.0, %v3700
        %v3702 = vpop.f32.mrb[0].mxu0
        %3703 = vmatprep.mubr.bf16.mxu0 0
        %3704 = vmatmul.mubr.bf16.gmra.mrb[0].mxu0 %v3474
        %v3705 = vpop.f32.mrb[0].mxu0
        %v3706 = vadd.f32 0.0, %v3705
        %v3707 = vpop.f32.mrb[0].mxu0
        %v3708 = vpop.f32.mrb[0].mxu0
        %v3709 = vadd.f32 0.0, %v3708
        %v3710 = vpop.f32.mrb[0].mxu0
        %3711 = vmatprep.mubr.bf16.mxu0 0
        %3712 = vmatmul.mubr.bf16.gmra.mrb[0].mxu0 %v3476
        %v3713 = vpop.f32.mrb[0].mxu0
        %v3714 = vadd.f32 0.0, %v3713
        %v3715 = vpop.f32.mrb[0].mxu0
        %v3716 = vpop.f32.mrb[0].mxu0
        %v3717 = vadd.f32 0.0, %v3716
        %v3718 = vpop.f32.mrb[0].mxu0
        %3719 = vdwg.mxu0
        %v3720 = vadd.f32 %v3382, %v3578
        %v3721 = vadd.f32 %v3383, %v3581
        %v3722 = vadd.f32 %v3384, %v3586
        %v3723 = vadd.f32 %v3385, %v3589
        %v3724 = vadd.f32 %v3386, %v3594
        %v3725 = vadd.f32 %v3387, %v3597
        %v3726 = vadd.f32 %v3388, %v3602
        %v3727 = vadd.f32 %v3389, %v3605
        %v3728 = vadd.f32 %v3390, %v3610
        %v3729 = vadd.f32 %v3391, %v3613
        %v3730 = vadd.f32 %v3392, %v3618
        %v3731 = vadd.f32 %v3393, %v3621
        %v3732 = vadd.f32 %v3394, %v3626
        %v3733 = vadd.f32 %v3395, %v3629
        %v3734 = vadd.f32 %v3396, %v3634
        %v3735 = vadd.f32 %v3397, %v3637
        %v3736 = vadd.f32 %v3398, %v3642
        %v3737 = vadd.f32 %v3399, %v3645
        %v3738 = vadd.f32 %v3400, %v3650
        %v3739 = vadd.f32 %v3401, %v3653
        %v3740 = vadd.f32 %v3402, %v3658
        %v3741 = vadd.f32 %v3403, %v3661
        %v3742 = vadd.f32 %v3404, %v3666
        %v3743 = vadd.f32 %v3405, %v3669
        %v3744 = vadd.f32 %v3406, %v3674
        %v3745 = vadd.f32 %v3407, %v3677
        %v3746 = vadd.f32 %v3408, %v3682
        %v3747 = vadd.f32 %v3409, %v3685
        %v3748 = vadd.f32 %v3410, %v3690
        %v3749 = vadd.f32 %v3411, %v3693
        %v3750 = vadd.f32 %v3412, %v3698
        %v3751 = vadd.f32 %v3413, %v3701
        %v3752 = vadd.f32 %v3414, %v3706
        %v3753 = vadd.f32 %v3415, %v3709
        %v3754 = vadd.f32 %v3416, %v3714
        %v3755 = vadd.f32 %v3417, %v3717
        %v3756 = vld [vmem:[#allocation2 + $0x10] sm:$0xc]
        %v3757 = vld [vmem:[#allocation2 + $0x14] sm:$0xf]
        %v3758 = vld [vmem:[#allocation2 + $0x18] sm:$0xf]
        %v3759 = vld [vmem:[#allocation2 + $0x1c] sm:$0xf]
        %v3760 = vld [vmem:[#allocation2 + $0x20] sm:$0xf]
        %v3761 = vld [vmem:[#allocation2 + $0x24] sm:$0xf]
        %v3762 = vld [vmem:[#allocation2 + $0x28] sm:$0xf]
        %v3763 = vld [vmem:[#allocation2 + $0x2c] sm:$0xf]
        %v3764 = vld [vmem:[#allocation2 + $0x30] sm:$0xf]
        %v3765 = vld [vmem:[#allocation2 + $0x34] sm:$0xf]
        %v3766 = vld [vmem:[#allocation2 + $0x38] sm:$0xf]
        %v3767 = vld [vmem:[#allocation2 + $0x3c] sm:$0xf]
        %v3768 = vld [vmem:[#allocation2 + $0x40] sm:$0xf]
        %v3769 = vld [vmem:[#allocation2 + $0x44] sm:$0xf]
        %v3770 = vld [vmem:[#allocation2 + $0x48] sm:$0xf]
        %v3771 = vld [vmem:[#allocation2 + $0x4c] sm:$0xf]
        %v3772 = vld [vmem:[#allocation2 + $0x50] sm:$0xf]
        %v3773 = vld [vmem:[#allocation2 + $0x54] sm:$0xf]
        %v3774 = vld [vmem:[#allocation2 + $0x58] sm:$0xf]
        %v3775 = vld [vmem:[#allocation2 + $0x5c] sm:$0xf]
        %v3776 = vld [vmem:[#allocation2 + $0x60] sm:$0xf]
        %v3777 = vld [vmem:[#allocation2 + $0x64] sm:$0xf]
        %v3778 = vld [vmem:[#allocation2 + $0x68] sm:$0xf]
        %v3779 = vld [vmem:[#allocation2 + $0x6c] sm:$0xf]
        %v3780 = vld [vmem:[#allocation2 + $0x70] sm:$0xf]
        %v3781 = vld [vmem:[#allocation2 + $0x74] sm:$0xf]
        %v3782 = vld [vmem:[#allocation2 + $0x78] sm:$0xf]
        %v3783 = vld [vmem:[#allocation2 + $0x7c] sm:$0xf]
        %v3784 = vld [vmem:[#allocation2 + $0x80] sm:$0xf]
        %v3785 = vld [vmem:[#allocation2 + $0x84] sm:$0xf]
        %v3786 = vld [vmem:[#allocation2 + $0x88] sm:$0xf]
        %v3787 = vld [vmem:[#allocation2 + $0x8c] sm:$0xf]
        %v3788 = vld [vmem:[#allocation2 + $0x90] sm:$0xf]
        %v3789 = vld [vmem:[#allocation2 + $0x94] sm:$0xf]
        %v3790 = vld [vmem:[#allocation2 + $0x98] sm:$0xf]
        %v3791 = vld [vmem:[#allocation2 + $0x9c] sm:$0xf]
        %v3792 = vld [vmem:[#allocation2 + $0xa0] sm:$0x3]
        %s3793 = scalar_lea.vmem %s4, 384
        %v3794 = vld [vmem:[%s3793] sm:$0xf]
        %v3795 = vld [vmem:[%s3793 + $0x4] sm:$0xf]
        %v3796 = vld [vmem:[%s3793 + $0x8] sm:$0xf]
        %v3797 = vld [vmem:[%s3793 + $0xc] sm:$0xf]
        %v3798 = vld [vmem:[%s3793 + $0x10] sm:$0xf]
        %v3799 = vld [vmem:[%s3793 + $0x14] sm:$0xf]
        %v3800 = vld [vmem:[%s3793 + $0x18] sm:$0xf]
        %v3801 = vld [vmem:[%s3793 + $0x1c] sm:$0xf]
        %v3802 = vld [vmem:[%s3793 + $0x20] sm:$0xf]
        %v3803 = vld [vmem:[%s3793 + $0x24] sm:$0xf]
        %v3804 = vld [vmem:[%s3793 + $0x28] sm:$0xf]
        %v3805 = vld [vmem:[%s3793 + $0x2c] sm:$0xf]
        %v3806 = vld [vmem:[%s3793 + $0x30] sm:$0xf]
        %v3807 = vld [vmem:[%s3793 + $0x34] sm:$0xf]
        %v3808 = vld [vmem:[%s3793 + $0x38] sm:$0xf]
        %v3809 = vld [vmem:[%s3793 + $0x3c] sm:$0xf]
        %v3847 = vunpack.c.l.b16 %v3756
        %v3848 = vunpack.c.l.b16 %v3757
        %v3849 = vunpack.c.l.b16 %v3758
        %v3850 = vunpack.c.l.b16 %v3759
        %v3851 = vunpack.c.l.b16 %v3760
        %v3852 = vunpack.c.l.b16 %v3761
        %v3853 = vunpack.c.l.b16 %v3762
        %v3854 = vunpack.c.l.b16 %v3763
        %v3855 = vunpack.c.l.b16 %v3764
        %v3856 = vunpack.c.l.b16 %v3765
        %v3857 = vunpack.c.l.b16 %v3766
        %v3858 = vunpack.c.l.b16 %v3767
        %v3859 = vunpack.c.l.b16 %v3768
        %v3860 = vunpack.c.l.b16 %v3769
        %v3861 = vunpack.c.l.b16 %v3770
        %v3862 = vunpack.c.l.b16 %v3771
        %v3863 = vunpack.c.l.b16 %v3772
        %v3864 = vunpack.c.l.b16 %v3773
        %v3865 = vunpack.c.l.b16 %v3774
        %v3866 = vunpack.c.l.b16 %v3775
        %v3867 = vunpack.c.l.b16 %v3776
        %v3868 = vunpack.c.l.b16 %v3777
        %v3869 = vunpack.c.l.b16 %v3778
        %v3870 = vunpack.c.l.b16 %v3779
        %v3871 = vunpack.c.l.b16 %v3780
        %v3872 = vunpack.c.l.b16 %v3781
        %v3873 = vunpack.c.l.b16 %v3782
        %v3874 = vunpack.c.l.b16 %v3783
        %v3875 = vunpack.c.l.b16 %v3784
        %v3876 = vunpack.c.l.b16 %v3785
        %v3877 = vunpack.c.l.b16 %v3786
        %v3878 = vunpack.c.l.b16 %v3787
        %v3879 = vunpack.c.l.b16 %v3788
        %v3880 = vunpack.c.l.b16 %v3789
        %v3881 = vunpack.c.l.b16 %v3790
        %v3882 = vunpack.c.l.b16 %v3791
        %v3883 = vunpack.c.l.b16 %v3792
        %v3884 = vpack.c.b16 %v3848, %v3847
        %v3885 = vpack.c.b16 %v3850, %v3849
        %v3886 = vpack.c.b16 %v3852, %v3851
        %v3887 = vpack.c.b16 %v3854, %v3853
        %v3888 = vpack.c.b16 %v3856, %v3855
        %v3889 = vpack.c.b16 %v3858, %v3857
        %v3890 = vpack.c.b16 %v3860, %v3859
        %v3891 = vpack.c.b16 %v3862, %v3861
        %v3892 = vpack.c.b16 %v3864, %v3863
        %v3893 = vpack.c.b16 %v3866, %v3865
        %v3894 = vpack.c.b16 %v3868, %v3867
        %v3895 = vpack.c.b16 %v3870, %v3869
        %v3896 = vpack.c.b16 %v3872, %v3871
        %v3897 = vpack.c.b16 %v3874, %v3873
        %v3898 = vpack.c.b16 %v3876, %v3875
        %v3899 = vpack.c.b16 %v3878, %v3877
        %v3900 = vpack.c.b16 %v3880, %v3879
        %v3901 = vpack.c.b16 %v3882, %v3881
        %v3902 = vpack.c.b16 %v3883, %v3883
        %v3903 = vrot.slane %v3884, 2
        %v3904 = vrot.slane %v3885, 2
        %v3905 = vsel %vm3439, %v3903, %v3904
        %v3906 = vrot.slane %v3886, 2
        %v3907 = vsel %vm3439, %v3904, %v3906
        %v3908 = vrot.slane %v3887, 2
        %v3909 = vsel %vm3439, %v3906, %v3908
        %v3910 = vrot.slane %v3888, 2
        %v3911 = vsel %vm3439, %v3908, %v3910
        %v3912 = vrot.slane %v3889, 2
        %v3913 = vsel %vm3439, %v3910, %v3912
        %v3914 = vrot.slane %v3890, 2
        %v3915 = vsel %vm3439, %v3912, %v3914
        %v3916 = vrot.slane %v3891, 2
        %v3917 = vsel %vm3439, %v3914, %v3916
        %v3918 = vrot.slane %v3892, 2
        %v3919 = vsel %vm3439, %v3916, %v3918
        %v3920 = vrot.slane %v3893, 2
        %v3921 = vsel %vm3439, %v3918, %v3920
        %v3922 = vrot.slane %v3894, 2
        %v3923 = vsel %vm3439, %v3920, %v3922
        %v3924 = vrot.slane %v3895, 2
        %v3925 = vsel %vm3439, %v3922, %v3924
        %v3926 = vrot.slane %v3896, 2
        %v3927 = vsel %vm3439, %v3924, %v3926
        %v3928 = vrot.slane %v3897, 2
        %v3929 = vsel %vm3439, %v3926, %v3928
        %v3930 = vrot.slane %v3898, 2
        %v3931 = vsel %vm3439, %v3928, %v3930
        %v3932 = vrot.slane %v3899, 2
        %v3933 = vsel %vm3439, %v3930, %v3932
        %v3934 = vrot.slane %v3900, 2
        %v3935 = vsel %vm3439, %v3932, %v3934
        %v3936 = vrot.slane %v3901, 2
        %v3937 = vsel %vm3439, %v3934, %v3936
        %v3938 = vrot.slane %v3902, 2
        %v3939 = vsel %vm3439, %v3936, %v3938
        %v3974 = vunpack.c.l.b16 %v3794
        %v3975 = vunpack.c.l.b16 %v3795
        %v3976 = vunpack.c.l.b16 %v3796
        %v3977 = vunpack.c.l.b16 %v3797
        %v3978 = vunpack.c.l.b16 %v3798
        %v3979 = vunpack.c.l.b16 %v3799
        %v3980 = vunpack.c.l.b16 %v3800
        %v3981 = vunpack.c.l.b16 %v3801
        %v3982 = vunpack.c.l.b16 %v3802
        %v3983 = vunpack.c.l.b16 %v3803
        %v3984 = vunpack.c.l.b16 %v3804
        %v3985 = vunpack.c.l.b16 %v3805
        %v3986 = vunpack.c.l.b16 %v3806
        %v3987 = vunpack.c.l.b16 %v3807
        %v3988 = vunpack.c.l.b16 %v3808
        %v3989 = vunpack.c.l.b16 %v3809
        %v3990 = vpack.c.b16 %v3975, %v3974
        %v3991 = vpack.c.b16 %v3977, %v3976
        %v3992 = vpack.c.b16 %v3979, %v3978
        %v3993 = vpack.c.b16 %v3981, %v3980
        %v3994 = vpack.c.b16 %v3983, %v3982
        %v3995 = vpack.c.b16 %v3985, %v3984
        %v3996 = vpack.c.b16 %v3987, %v3986
        %v3997 = vpack.c.b16 %v3989, %v3988
        %4006 = vmatprep.subr.bf16.mxu0 0
        %4007 = vmatpush1.bf16.msra.mxu0 %v3990
        %4008 = vmatprep.subr.bf16.mxu0 0
        %4009 = vmatpush1.bf16.msra.mxu0 %v3991
        %4010 = vmatprep.subr.bf16.mxu0 0
        %4011 = vmatpush1.bf16.msra.mxu0 %v3992
        %4012 = vmatprep.subr.bf16.mxu0 0
        %4013 = vmatpush1.bf16.msra.mxu0 %v3993
        %4014 = vmatprep.subr.bf16.mxu0 0
        %4015 = vmatpush1.bf16.msra.mxu0 %v3994
        %4016 = vmatprep.subr.bf16.mxu0 0
        %4017 = vmatpush1.bf16.msra.mxu0 %v3995
        %4018 = vmatprep.subr.bf16.mxu0 0
        %4019 = vmatpush1.bf16.msra.mxu0 %v3996
        %4020 = vmatprep.subr.bf16.mxu0 0
        %4021 = vmatpush1.bf16.msra.mxu0 %v3997
        %4022 = vmatprep.subr.bf16.mxu0 0
        %4023 = vmatpush1.bf16.msra.mxu0 0
        %4024 = vmatprep.subr.bf16.mxu0 0
        %4025 = vmatpush1.bf16.msra.mxu0 0
        %4026 = vmatprep.subr.bf16.mxu0 0
        %4027 = vmatpush1.bf16.msra.mxu0 0
        %4028 = vmatprep.subr.bf16.mxu0 0
        %4029 = vmatpush1.bf16.msra.mxu0 0
        %4030 = vmatprep.subr.bf16.mxu0 0
        %4031 = vmatpush1.bf16.msra.mxu0 0
        %4032 = vmatprep.subr.bf16.mxu0 0
        %4033 = vmatpush1.bf16.msra.mxu0 0
        %4034 = vmatprep.subr.bf16.mxu0 0
        %4035 = vmatpush1.bf16.msra.mxu0 0
        %4036 = vmatprep.subr.bf16.mxu0 0
        %4037 = vmatpush1.bf16.msra.mxu0 0
        %4038 = vmatprep.mubr.bf16.mxu0 0
        %4039 = vmatmul.mubr.bf16.gmra.mrb[0].mxu0 %v3905
        %v4040 = vpop.f32.mrb[0].mxu0
        %v4041 = vadd.f32 0.0, %v4040
        %v4042 = vpop.f32.mrb[0].mxu0
        %v4043 = vpop.f32.mrb[0].mxu0
        %v4044 = vadd.f32 0.0, %v4043
        %v4045 = vpop.f32.mrb[0].mxu0
        %4046 = vmatprep.mubr.bf16.mxu0 0
        %4047 = vmatmul.mubr.bf16.gmra.mrb[0].mxu0 %v3907
        %v4048 = vpop.f32.mrb[0].mxu0
        %v4049 = vadd.f32 0.0, %v4048
        %v4050 = vpop.f32.mrb[0].mxu0
        %v4051 = vpop.f32.mrb[0].mxu0
        %v4052 = vadd.f32 0.0, %v4051
        %v4053 = vpop.f32.mrb[0].mxu0
        %4054 = vmatprep.mubr.bf16.mxu0 0
        %4055 = vmatmul.mubr.bf16.gmra.mrb[0].mxu0 %v3909
        %v4056 = vpop.f32.mrb[0].mxu0
        %v4057 = vadd.f32 0.0, %v4056
        %v4058 = vpop.f32.mrb[0].mxu0
        %v4059 = vpop.f32.mrb[0].mxu0
        %v4060 = vadd.f32 0.0, %v4059
        %v4061 = vpop.f32.mrb[0].mxu0
        %4062 = vmatprep.mubr.bf16.mxu0 0
        %4063 = vmatmul.mubr.bf16.gmra.mrb[0].mxu0 %v3911
        %v4064 = vpop.f32.mrb[0].mxu0
        %v4065 = vadd.f32 0.0, %v4064
        %v4066 = vpop.f32.mrb[0].mxu0
        %v4067 = vpop.f32.mrb[0].mxu0
        %v4068 = vadd.f32 0.0, %v4067
        %v4069 = vpop.f32.mrb[0].mxu0
        %4070 = vmatprep.mubr.bf16.mxu0 0
        %4071 = vmatmul.mubr.bf16.gmra.mrb[0].mxu0 %v3913
        %v4072 = vpop.f32.mrb[0].mxu0
        %v4073 = vadd.f32 0.0, %v4072
        %v4074 = vpop.f32.mrb[0].mxu0
        %v4075 = vpop.f32.mrb[0].mxu0
        %v4076 = vadd.f32 0.0, %v4075
        %v4077 = vpop.f32.mrb[0].mxu0
        %4078 = vmatprep.mubr.bf16.mxu0 0
        %4079 = vmatmul.mubr.bf16.gmra.mrb[0].mxu0 %v3915
        %v4080 = vpop.f32.mrb[0].mxu0
        %v4081 = vadd.f32 0.0, %v4080
        %v4082 = vpop.f32.mrb[0].mxu0
        %v4083 = vpop.f32.mrb[0].mxu0
        %v4084 = vadd.f32 0.0, %v4083
        %v4085 = vpop.f32.mrb[0].mxu0
        %4086 = vmatprep.mubr.bf16.mxu0 0
        %4087 = vmatmul.mubr.bf16.gmra.mrb[0].mxu0 %v3917
        %v4088 = vpop.f32.mrb[0].mxu0
        %v4089 = vadd.f32 0.0, %v4088
        %v4090 = vpop.f32.mrb[0].mxu0
        %v4091 = vpop.f32.mrb[0].mxu0
        %v4092 = vadd.f32 0.0, %v4091
        %v4093 = vpop.f32.mrb[0].mxu0
        %4094 = vmatprep.mubr.bf16.mxu0 0
        %4095 = vmatmul.mubr.bf16.gmra.mrb[0].mxu0 %v3919
        %v4096 = vpop.f32.mrb[0].mxu0
        %v4097 = vadd.f32 0.0, %v4096
        %v4098 = vpop.f32.mrb[0].mxu0
        %v4099 = vpop.f32.mrb[0].mxu0
        %v4100 = vadd.f32 0.0, %v4099
        %v4101 = vpop.f32.mrb[0].mxu0
        %4102 = vmatprep.mubr.bf16.mxu0 0
        %4103 = vmatmul.mubr.bf16.gmra.mrb[0].mxu0 %v3921
        %v4104 = vpop.f32.mrb[0].mxu0
        %v4105 = vadd.f32 0.0, %v4104
        %v4106 = vpop.f32.mrb[0].mxu0
        %v4107 = vpop.f32.mrb[0].mxu0
        %v4108 = vadd.f32 0.0, %v4107
        %v4109 = vpop.f32.mrb[0].mxu0
        %4110 = vmatprep.mubr.bf16.mxu0 0
        %4111 = vmatmul.mubr.bf16.gmra.mrb[0].mxu0 %v3923
        %v4112 = vpop.f32.mrb[0].mxu0
        %v4113 = vadd.f32 0.0, %v4112
        %v4114 = vpop.f32.mrb[0].mxu0
        %v4115 = vpop.f32.mrb[0].mxu0
        %v4116 = vadd.f32 0.0, %v4115
        %v4117 = vpop.f32.mrb[0].mxu0
        %4118 = vmatprep.mubr.bf16.mxu0 0
        %4119 = vmatmul.mubr.bf16.gmra.mrb[0].mxu0 %v3925
        %v4120 = vpop.f32.mrb[0].mxu0
        %v4121 = vadd.f32 0.0, %v4120
        %v4122 = vpop.f32.mrb[0].mxu0
        %v4123 = vpop.f32.mrb[0].mxu0
        %v4124 = vadd.f32 0.0, %v4123
        %v4125 = vpop.f32.mrb[0].mxu0
        %4126 = vmatprep.mubr.bf16.mxu0 0
        %4127 = vmatmul.mubr.bf16.gmra.mrb[0].mxu0 %v3927
        %v4128 = vpop.f32.mrb[0].mxu0
        %v4129 = vadd.f32 0.0, %v4128
        %v4130 = vpop.f32.mrb[0].mxu0
        %v4131 = vpop.f32.mrb[0].mxu0
        %v4132 = vadd.f32 0.0, %v4131
        %v4133 = vpop.f32.mrb[0].mxu0
        %4134 = vmatprep.mubr.bf16.mxu0 0
        %4135 = vmatmul.mubr.bf16.gmra.mrb[0].mxu0 %v3929
        %v4136 = vpop.f32.mrb[0].mxu0
        %v4137 = vadd.f32 0.0, %v4136
        %v4138 = vpop.f32.mrb[0].mxu0
        %v4139 = vpop.f32.mrb[0].mxu0
        %v4140 = vadd.f32 0.0, %v4139
        %v4141 = vpop.f32.mrb[0].mxu0
        %4142 = vmatprep.mubr.bf16.mxu0 0
        %4143 = vmatmul.mubr.bf16.gmra.mrb[0].mxu0 %v3931
        %v4144 = vpop.f32.mrb[0].mxu0
        %v4145 = vadd.f32 0.0, %v4144
        %v4146 = vpop.f32.mrb[0].mxu0
        %v4147 = vpop.f32.mrb[0].mxu0
        %v4148 = vadd.f32 0.0, %v4147
        %v4149 = vpop.f32.mrb[0].mxu0
        %4150 = vmatprep.mubr.bf16.mxu0 0
        %4151 = vmatmul.mubr.bf16.gmra.mrb[0].mxu0 %v3933
        %v4152 = vpop.f32.mrb[0].mxu0
        %v4153 = vadd.f32 0.0, %v4152
        %v4154 = vpop.f32.mrb[0].mxu0
        %v4155 = vpop.f32.mrb[0].mxu0
        %v4156 = vadd.f32 0.0, %v4155
        %v4157 = vpop.f32.mrb[0].mxu0
        %4158 = vmatprep.mubr.bf16.mxu0 0
        %4159 = vmatmul.mubr.bf16.gmra.mrb[0].mxu0 %v3935
        %v4160 = vpop.f32.mrb[0].mxu0
        %v4161 = vadd.f32 0.0, %v4160
        %v4162 = vpop.f32.mrb[0].mxu0
        %v4163 = vpop.f32.mrb[0].mxu0
        %v4164 = vadd.f32 0.0, %v4163
        %v4165 = vpop.f32.mrb[0].mxu0
        %4166 = vmatprep.mubr.bf16.mxu0 0
        %4167 = vmatmul.mubr.bf16.gmra.mrb[0].mxu0 %v3937
        %v4168 = vpop.f32.mrb[0].mxu0
        %v4169 = vadd.f32 0.0, %v4168
        %v4170 = vpop.f32.mrb[0].mxu0
        %v4171 = vpop.f32.mrb[0].mxu0
        %v4172 = vadd.f32 0.0, %v4171
        %v4173 = vpop.f32.mrb[0].mxu0
        %4174 = vmatprep.mubr.bf16.mxu0 0
        %4175 = vmatmul.mubr.bf16.gmra.mrb[0].mxu0 %v3939
        %v4176 = vpop.f32.mrb[0].mxu0
        %v4177 = vadd.f32 0.0, %v4176
        %v4178 = vpop.f32.mrb[0].mxu0
        %v4179 = vpop.f32.mrb[0].mxu0
        %v4180 = vadd.f32 0.0, %v4179
        %v4181 = vpop.f32.mrb[0].mxu0
        %4182 = vdwg.mxu0
        %v4183 = vadd.f32 %v3720, %v4041
        %v4184 = vadd.f32 %v3721, %v4044
        %v4185 = vadd.f32 %v3722, %v4049
        %v4186 = vadd.f32 %v3723, %v4052
        %v4187 = vadd.f32 %v3724, %v4057
        %v4188 = vadd.f32 %v3725, %v4060
        %v4189 = vadd.f32 %v3726, %v4065
        %v4190 = vadd.f32 %v3727, %v4068
        %v4191 = vadd.f32 %v3728, %v4073
        %v4192 = vadd.f32 %v3729, %v4076
        %v4193 = vadd.f32 %v3730, %v4081
        %v4194 = vadd.f32 %v3731, %v4084
        %v4195 = vadd.f32 %v3732, %v4089
        %v4196 = vadd.f32 %v3733, %v4092
        %v4197 = vadd.f32 %v3734, %v4097
        %v4198 = vadd.f32 %v3735, %v4100
        %v4199 = vadd.f32 %v3736, %v4105
        %v4200 = vadd.f32 %v3737, %v4108
        %v4201 = vadd.f32 %v3738, %v4113
        %v4202 = vadd.f32 %v3739, %v4116
        %v4203 = vadd.f32 %v3740, %v4121
        %v4204 = vadd.f32 %v3741, %v4124
        %v4205 = vadd.f32 %v3742, %v4129
        %v4206 = vadd.f32 %v3743, %v4132
        %v4207 = vadd.f32 %v3744, %v4137
        %v4208 = vadd.f32 %v3745, %v4140
        %v4209 = vadd.f32 %v3746, %v4145
        %v4210 = vadd.f32 %v3747, %v4148
        %v4211 = vadd.f32 %v3748, %v4153
        %v4212 = vadd.f32 %v3749, %v4156
        %v4213 = vadd.f32 %v3750, %v4161
        %v4214 = vadd.f32 %v3751, %v4164
        %v4215 = vadd.f32 %v3752, %v4169
        %v4216 = vadd.f32 %v3753, %v4172
        %v4217 = vadd.f32 %v3754, %v4177
        %v4218 = vadd.f32 %v3755, %v4180
        %v4219 = vld [vmem:[#allocation2 + $0xa0] sm:$0x7]
        %s4220 = scalar_lea.vmem %s4, 448
        %v4221 = vld [vmem:[%s4220] sm:$0xf]
        %v4222 = vld [vmem:[%s4220 + $0x4] sm:$0xf]
        %v4223 = vld [vmem:[%s4220 + $0x8] sm:$0xf]
        %v4224 = vld [vmem:[%s4220 + $0xc] sm:$0xf]
        %v4225 = vld [vmem:[%s4220 + $0x10] sm:$0xf]
        %v4226 = vld [vmem:[%s4220 + $0x14] sm:$0xf]
        %v4227 = vld [vmem:[%s4220 + $0x18] sm:$0xf]
        %v4228 = vld [vmem:[%s4220 + $0x1c] sm:$0xf]
        %v4229 = vld [vmem:[%s4220 + $0x20] sm:$0xf]
        %v4230 = vld [vmem:[%s4220 + $0x24] sm:$0xf]
        %v4231 = vld [vmem:[%s4220 + $0x28] sm:$0xf]
        %v4232 = vld [vmem:[%s4220 + $0x2c] sm:$0xf]
        %v4233 = vld [vmem:[%s4220 + $0x30] sm:$0xf]
        %v4234 = vld [vmem:[%s4220 + $0x34] sm:$0xf]
        %v4235 = vld [vmem:[%s4220 + $0x38] sm:$0xf]
        %v4236 = vld [vmem:[%s4220 + $0x3c] sm:$0xf]
        %v4238 = vunpack.c.l.b16 %v4219
        %v4239 = vpack.c.b16 %v4238, %v4238
        %vm4240 = vsmask.f32 5376
        %v4242 = vshrl.u32 %v3884, 16
        %v4244 = vrot.slane %v4242, 2
        %v4245 = vshll.u32 %v3884, 16
        %v4247 = vrot.slane %v4245, 3
        %v4248 = vor.u32 %v4244, %v4247
        %v4250 = vshrl.u32 %v3885, 16
        %v4252 = vrot.slane %v4250, 2
        %v4253 = vshll.u32 %v3885, 16
        %v4255 = vrot.slane %v4253, 3
        %v4256 = vor.u32 %v4252, %v4255
        %v4257 = vsel %vm4240, %v4248, %v4256
        %v4259 = vshrl.u32 %v3886, 16
        %v4261 = vrot.slane %v4259, 2
        %v4262 = vshll.u32 %v3886, 16
        %v4264 = vrot.slane %v4262, 3
        %v4265 = vor.u32 %v4261, %v4264
        %v4266 = vsel %vm4240, %v4256, %v4265
        %v4268 = vshrl.u32 %v3887, 16
        %v4270 = vrot.slane %v4268, 2
        %v4271 = vshll.u32 %v3887, 16
        %v4273 = vrot.slane %v4271, 3
        %v4274 = vor.u32 %v4270, %v4273
        %v4275 = vsel %vm4240, %v4265, %v4274
        %v4277 = vshrl.u32 %v3888, 16
        %v4279 = vrot.slane %v4277, 2
        %v4280 = vshll.u32 %v3888, 16
        %v4282 = vrot.slane %v4280, 3
        %v4283 = vor.u32 %v4279, %v4282
        %v4284 = vsel %vm4240, %v4274, %v4283
        %v4286 = vshrl.u32 %v3889, 16
        %v4288 = vrot.slane %v4286, 2
        %v4289 = vshll.u32 %v3889, 16
        %v4291 = vrot.slane %v4289, 3
        %v4292 = vor.u32 %v4288, %v4291
        %v4293 = vsel %vm4240, %v4283, %v4292
        %v4295 = vshrl.u32 %v3890, 16
        %v4297 = vrot.slane %v4295, 2
        %v4298 = vshll.u32 %v3890, 16
        %v4300 = vrot.slane %v4298, 3
        %v4301 = vor.u32 %v4297, %v4300
        %v4302 = vsel %vm4240, %v4292, %v4301
        %v4304 = vshrl.u32 %v3891, 16
        %v4306 = vrot.slane %v4304, 2
        %v4307 = vshll.u32 %v3891, 16
        %v4309 = vrot.slane %v4307, 3
        %v4310 = vor.u32 %v4306, %v4309
        %v4311 = vsel %vm4240, %v4301, %v4310
        %v4313 = vshrl.u32 %v3892, 16
        %v4315 = vrot.slane %v4313, 2
        %v4316 = vshll.u32 %v3892, 16
        %v4318 = vrot.slane %v4316, 3
        %v4319 = vor.u32 %v4315, %v4318
        %v4320 = vsel %vm4240, %v4310, %v4319
        %v4322 = vshrl.u32 %v3893, 16
        %v4324 = vrot.slane %v4322, 2
        %v4325 = vshll.u32 %v3893, 16
        %v4327 = vrot.slane %v4325, 3
        %v4328 = vor.u32 %v4324, %v4327
        %v4329 = vsel %vm4240, %v4319, %v4328
        %v4331 = vshrl.u32 %v3894, 16
        %v4333 = vrot.slane %v4331, 2
        %v4334 = vshll.u32 %v3894, 16
        %v4336 = vrot.slane %v4334, 3
        %v4337 = vor.u32 %v4333, %v4336
        %v4338 = vsel %vm4240, %v4328, %v4337
        %v4340 = vshrl.u32 %v3895, 16
        %v4342 = vrot.slane %v4340, 2
        %v4343 = vshll.u32 %v3895, 16
        %v4345 = vrot.slane %v4343, 3
        %v4346 = vor.u32 %v4342, %v4345
        %v4347 = vsel %vm4240, %v4337, %v4346
        %v4349 = vshrl.u32 %v3896, 16
        %v4351 = vrot.slane %v4349, 2
        %v4352 = vshll.u32 %v3896, 16
        %v4354 = vrot.slane %v4352, 3
        %v4355 = vor.u32 %v4351, %v4354
        %v4356 = vsel %vm4240, %v4346, %v4355
        %v4358 = vshrl.u32 %v3897, 16
        %v4360 = vrot.slane %v4358, 2
        %v4361 = vshll.u32 %v3897, 16
        %v4363 = vrot.slane %v4361, 3
        %v4364 = vor.u32 %v4360, %v4363
        %v4365 = vsel %vm4240, %v4355, %v4364
        %v4367 = vshrl.u32 %v3898, 16
        %v4369 = vrot.slane %v4367, 2
        %v4370 = vshll.u32 %v3898, 16
        %v4372 = vrot.slane %v4370, 3
        %v4373 = vor.u32 %v4369, %v4372
        %v4374 = vsel %vm4240, %v4364, %v4373
        %v4376 = vshrl.u32 %v3899, 16
        %v4378 = vrot.slane %v4376, 2
        %v4379 = vshll.u32 %v3899, 16
        %v4381 = vrot.slane %v4379, 3
        %v4382 = vor.u32 %v4378, %v4381
        %v4383 = vsel %vm4240, %v4373, %v4382
        %v4385 = vshrl.u32 %v3900, 16
        %v4387 = vrot.slane %v4385, 2
        %v4388 = vshll.u32 %v3900, 16
        %v4390 = vrot.slane %v4388, 3
        %v4391 = vor.u32 %v4387, %v4390
        %v4392 = vsel %vm4240, %v4382, %v4391
        %v4394 = vshrl.u32 %v3901, 16
        %v4396 = vrot.slane %v4394, 2
        %v4397 = vshll.u32 %v3901, 16
        %v4399 = vrot.slane %v4397, 3
        %v4400 = vor.u32 %v4396, %v4399
        %v4401 = vsel %vm4240, %v4391, %v4400
        %v4403 = vshrl.u32 %v4239, 16
        %v4405 = vrot.slane %v4403, 2
        %v4406 = vshll.u32 %v4239, 16
        %v4408 = vrot.slane %v4406, 3
        %v4409 = vor.u32 %v4405, %v4408
        %v4410 = vsel %vm4240, %v4400, %v4409
        %v4445 = vunpack.c.l.b16 %v4221
        %v4446 = vunpack.c.l.b16 %v4222
        %v4447 = vunpack.c.l.b16 %v4223
        %v4448 = vunpack.c.l.b16 %v4224
        %v4449 = vunpack.c.l.b16 %v4225
        %v4450 = vunpack.c.l.b16 %v4226
        %v4451 = vunpack.c.l.b16 %v4227
        %v4452 = vunpack.c.l.b16 %v4228
        %v4453 = vunpack.c.l.b16 %v4229
        %v4454 = vunpack.c.l.b16 %v4230
        %v4455 = vunpack.c.l.b16 %v4231
        %v4456 = vunpack.c.l.b16 %v4232
        %v4457 = vunpack.c.l.b16 %v4233
        %v4458 = vunpack.c.l.b16 %v4234
        %v4459 = vunpack.c.l.b16 %v4235
        %v4460 = vunpack.c.l.b16 %v4236
        %v4461 = vpack.c.b16 %v4446, %v4445
        %v4462 = vpack.c.b16 %v4448, %v4447
        %v4463 = vpack.c.b16 %v4450, %v4449
        %v4464 = vpack.c.b16 %v4452, %v4451
        %v4465 = vpack.c.b16 %v4454, %v4453
        %v4466 = vpack.c.b16 %v4456, %v4455
        %v4467 = vpack.c.b16 %v4458, %v4457
        %v4468 = vpack.c.b16 %v4460, %v4459
        %4477 = vmatprep.subr.bf16.mxu0 0
        %4478 = vmatpush1.bf16.msra.mxu0 %v4461
        %4479 = vmatprep.subr.bf16.mxu0 0
        %4480 = vmatpush1.bf16.msra.mxu0 %v4462
        %4481 = vmatprep.subr.bf16.mxu0 0
        %4482 = vmatpush1.bf16.msra.mxu0 %v4463
        %4483 = vmatprep.subr.bf16.mxu0 0
        %4484 = vmatpush1.bf16.msra.mxu0 %v4464
        %4485 = vmatprep.subr.bf16.mxu0 0
        %4486 = vmatpush1.bf16.msra.mxu0 %v4465
        %4487 = vmatprep.subr.bf16.mxu0 0
        %4488 = vmatpush1.bf16.msra.mxu0 %v4466
        %4489 = vmatprep.subr.bf16.mxu0 0
        %4490 = vmatpush1.bf16.msra.mxu0 %v4467
        %4491 = vmatprep.subr.bf16.mxu0 0
        %4492 = vmatpush1.bf16.msra.mxu0 %v4468
        %4493 = vmatprep.subr.bf16.mxu0 0
        %4494 = vmatpush1.bf16.msra.mxu0 0
        %4495 = vmatprep.subr.bf16.mxu0 0
        %4496 = vmatpush1.bf16.msra.mxu0 0
        %4497 = vmatprep.subr.bf16.mxu0 0
        %4498 = vmatpush1.bf16.msra.mxu0 0
        %4499 = vmatprep.subr.bf16.mxu0 0
        %4500 = vmatpush1.bf16.msra.mxu0 0
        %4501 = vmatprep.subr.bf16.mxu0 0
        %4502 = vmatpush1.bf16.msra.mxu0 0
        %4503 = vmatprep.subr.bf16.mxu0 0
        %4504 = vmatpush1.bf16.msra.mxu0 0
        %4505 = vmatprep.subr.bf16.mxu0 0
        %4506 = vmatpush1.bf16.msra.mxu0 0
        %4507 = vmatprep.subr.bf16.mxu0 0
        %4508 = vmatpush1.bf16.msra.mxu0 0
        %4509 = vmatprep.mubr.bf16.mxu0 0
        %4510 = vmatmul.mubr.bf16.gmra.mrb[0].mxu0 %v4257
        %v4511 = vpop.f32.mrb[0].mxu0
        %v4512 = vadd.f32 0.0, %v4511
        %v4513 = vpop.f32.mrb[0].mxu0
        %v4514 = vpop.f32.mrb[0].mxu0
        %v4515 = vadd.f32 0.0, %v4514
        %v4516 = vpop.f32.mrb[0].mxu0
        %4517 = vmatprep.mubr.bf16.mxu0 0
        %4518 = vmatmul.mubr.bf16.gmra.mrb[0].mxu0 %v4266
        %v4519 = vpop.f32.mrb[0].mxu0
        %v4520 = vadd.f32 0.0, %v4519
        %v4521 = vpop.f32.mrb[0].mxu0
        %v4522 = vpop.f32.mrb[0].mxu0
        %v4523 = vadd.f32 0.0, %v4522
        %v4524 = vpop.f32.mrb[0].mxu0
        %4525 = vmatprep.mubr.bf16.mxu0 0
        %4526 = vmatmul.mubr.bf16.gmra.mrb[0].mxu0 %v4275
        %v4527 = vpop.f32.mrb[0].mxu0
        %v4528 = vadd.f32 0.0, %v4527
        %v4529 = vpop.f32.mrb[0].mxu0
        %v4530 = vpop.f32.mrb[0].mxu0
        %v4531 = vadd.f32 0.0, %v4530
        %v4532 = vpop.f32.mrb[0].mxu0
        %4533 = vmatprep.mubr.bf16.mxu0 0
        %4534 = vmatmul.mubr.bf16.gmra.mrb[0].mxu0 %v4284
        %v4535 = vpop.f32.mrb[0].mxu0
        %v4536 = vadd.f32 0.0, %v4535
        %v4537 = vpop.f32.mrb[0].mxu0
        %v4538 = vpop.f32.mrb[0].mxu0
        %v4539 = vadd.f32 0.0, %v4538
        %v4540 = vpop.f32.mrb[0].mxu0
        %4541 = vmatprep.mubr.bf16.mxu0 0
        %4542 = vmatmul.mubr.bf16.gmra.mrb[0].mxu0 %v4293
        %v4543 = vpop.f32.mrb[0].mxu0
        %v4544 = vadd.f32 0.0, %v4543
        %v4545 = vpop.f32.mrb[0].mxu0
        %v4546 = vpop.f32.mrb[0].mxu0
        %v4547 = vadd.f32 0.0, %v4546
        %v4548 = vpop.f32.mrb[0].mxu0
        %4549 = vmatprep.mubr.bf16.mxu0 0
        %4550 = vmatmul.mubr.bf16.gmra.mrb[0].mxu0 %v4302
        %v4551 = vpop.f32.mrb[0].mxu0
        %v4552 = vadd.f32 0.0, %v4551
        %v4553 = vpop.f32.mrb[0].mxu0
        %v4554 = vpop.f32.mrb[0].mxu0
        %v4555 = vadd.f32 0.0, %v4554
        %v4556 = vpop.f32.mrb[0].mxu0
        %4557 = vmatprep.mubr.bf16.mxu0 0
        %4558 = vmatmul.mubr.bf16.gmra.mrb[0].mxu0 %v4311
        %v4559 = vpop.f32.mrb[0].mxu0
        %v4560 = vadd.f32 0.0, %v4559
        %v4561 = vpop.f32.mrb[0].mxu0
        %v4562 = vpop.f32.mrb[0].mxu0
        %v4563 = vadd.f32 0.0, %v4562
        %v4564 = vpop.f32.mrb[0].mxu0
        %4565 = vmatprep.mubr.bf16.mxu0 0
        %4566 = vmatmul.mubr.bf16.gmra.mrb[0].mxu0 %v4320
        %v4567 = vpop.f32.mrb[0].mxu0
        %v4568 = vadd.f32 0.0, %v4567
        %v4569 = vpop.f32.mrb[0].mxu0
        %v4570 = vpop.f32.mrb[0].mxu0
        %v4571 = vadd.f32 0.0, %v4570
        %v4572 = vpop.f32.mrb[0].mxu0
        %4573 = vmatprep.mubr.bf16.mxu0 0
        %4574 = vmatmul.mubr.bf16.gmra.mrb[0].mxu0 %v4329
        %v4575 = vpop.f32.mrb[0].mxu0
        %v4576 = vadd.f32 0.0, %v4575
        %v4577 = vpop.f32.mrb[0].mxu0
        %v4578 = vpop.f32.mrb[0].mxu0
        %v4579 = vadd.f32 0.0, %v4578
        %v4580 = vpop.f32.mrb[0].mxu0
        %4581 = vmatprep.mubr.bf16.mxu0 0
        %4582 = vmatmul.mubr.bf16.gmra.mrb[0].mxu0 %v4338
        %v4583 = vpop.f32.mrb[0].mxu0
        %v4584 = vadd.f32 0.0, %v4583
        %v4585 = vpop.f32.mrb[0].mxu0
        %v4586 = vpop.f32.mrb[0].mxu0
        %v4587 = vadd.f32 0.0, %v4586
        %v4588 = vpop.f32.mrb[0].mxu0
        %4589 = vmatprep.mubr.bf16.mxu0 0
        %4590 = vmatmul.mubr.bf16.gmra.mrb[0].mxu0 %v4347
        %v4591 = vpop.f32.mrb[0].mxu0
        %v4592 = vadd.f32 0.0, %v4591
        %v4593 = vpop.f32.mrb[0].mxu0
        %v4594 = vpop.f32.mrb[0].mxu0
        %v4595 = vadd.f32 0.0, %v4594
        %v4596 = vpop.f32.mrb[0].mxu0
        %4597 = vmatprep.mubr.bf16.mxu0 0
        %4598 = vmatmul.mubr.bf16.gmra.mrb[0].mxu0 %v4356
        %v4599 = vpop.f32.mrb[0].mxu0
        %v4600 = vadd.f32 0.0, %v4599
        %v4601 = vpop.f32.mrb[0].mxu0
        %v4602 = vpop.f32.mrb[0].mxu0
        %v4603 = vadd.f32 0.0, %v4602
        %v4604 = vpop.f32.mrb[0].mxu0
        %4605 = vmatprep.mubr.bf16.mxu0 0
        %4606 = vmatmul.mubr.bf16.gmra.mrb[0].mxu0 %v4365
        %v4607 = vpop.f32.mrb[0].mxu0
        %v4608 = vadd.f32 0.0, %v4607
        %v4609 = vpop.f32.mrb[0].mxu0
        %v4610 = vpop.f32.mrb[0].mxu0
        %v4611 = vadd.f32 0.0, %v4610
        %v4612 = vpop.f32.mrb[0].mxu0
        %4613 = vmatprep.mubr.bf16.mxu0 0
        %4614 = vmatmul.mubr.bf16.gmra.mrb[0].mxu0 %v4374
        %v4615 = vpop.f32.mrb[0].mxu0
        %v4616 = vadd.f32 0.0, %v4615
        %v4617 = vpop.f32.mrb[0].mxu0
        %v4618 = vpop.f32.mrb[0].mxu0
        %v4619 = vadd.f32 0.0, %v4618
        %v4620 = vpop.f32.mrb[0].mxu0
        %4621 = vmatprep.mubr.bf16.mxu0 0
        %4622 = vmatmul.mubr.bf16.gmra.mrb[0].mxu0 %v4383
        %v4623 = vpop.f32.mrb[0].mxu0
        %v4624 = vadd.f32 0.0, %v4623
        %v4625 = vpop.f32.mrb[0].mxu0
        %v4626 = vpop.f32.mrb[0].mxu0
        %v4627 = vadd.f32 0.0, %v4626
        %v4628 = vpop.f32.mrb[0].mxu0
        %4629 = vmatprep.mubr.bf16.mxu0 0
        %4630 = vmatmul.mubr.bf16.gmra.mrb[0].mxu0 %v4392
        %v4631 = vpop.f32.mrb[0].mxu0
        %v4632 = vadd.f32 0.0, %v4631
        %v4633 = vpop.f32.mrb[0].mxu0
        %v4634 = vpop.f32.mrb[0].mxu0
        %v4635 = vadd.f32 0.0, %v4634
        %v4636 = vpop.f32.mrb[0].mxu0
        %4637 = vmatprep.mubr.bf16.mxu0 0
        %4638 = vmatmul.mubr.bf16.gmra.mrb[0].mxu0 %v4401
        %v4639 = vpop.f32.mrb[0].mxu0
        %v4640 = vadd.f32 0.0, %v4639
        %v4641 = vpop.f32.mrb[0].mxu0
        %v4642 = vpop.f32.mrb[0].mxu0
        %v4643 = vadd.f32 0.0, %v4642
        %v4644 = vpop.f32.mrb[0].mxu0
        %4645 = vmatprep.mubr.bf16.mxu0 0
        %4646 = vmatmul.mubr.bf16.gmra.mrb[0].mxu0 %v4410
        %v4647 = vpop.f32.mrb[0].mxu0
        %v4648 = vadd.f32 0.0, %v4647
        %v4649 = vpop.f32.mrb[0].mxu0
        %v4650 = vpop.f32.mrb[0].mxu0
        %v4651 = vadd.f32 0.0, %v4650
        %v4652 = vpop.f32.mrb[0].mxu0
        %4653 = vdwg.mxu0
        %v4654 = vadd.f32 %v4183, %v4512
        %v4655 = vadd.f32 %v4184, %v4515
        %v4656 = vadd.f32 %v4185, %v4520
        %v4657 = vadd.f32 %v4186, %v4523
        %v4658 = vadd.f32 %v4187, %v4528
        %v4659 = vadd.f32 %v4188, %v4531
        %v4660 = vadd.f32 %v4189, %v4536
        %v4661 = vadd.f32 %v4190, %v4539
        %v4662 = vadd.f32 %v4191, %v4544
        %v4663 = vadd.f32 %v4192, %v4547
        %v4664 = vadd.f32 %v4193, %v4552
        %v4665 = vadd.f32 %v4194, %v4555
        %v4666 = vadd.f32 %v4195, %v4560
        %v4667 = vadd.f32 %v4196, %v4563
        %v4668 = vadd.f32 %v4197, %v4568
        %v4669 = vadd.f32 %v4198, %v4571
        %v4670 = vadd.f32 %v4199, %v4576
        %v4671 = vadd.f32 %v4200, %v4579
        %v4672 = vadd.f32 %v4201, %v4584
        %v4673 = vadd.f32 %v4202, %v4587
        %v4674 = vadd.f32 %v4203, %v4592
        %v4675 = vadd.f32 %v4204, %v4595
        %v4676 = vadd.f32 %v4205, %v4600
        %v4677 = vadd.f32 %v4206, %v4603
        %v4678 = vadd.f32 %v4207, %v4608
        %v4679 = vadd.f32 %v4208, %v4611
        %v4680 = vadd.f32 %v4209, %v4616
        %v4681 = vadd.f32 %v4210, %v4619
        %v4682 = vadd.f32 %v4211, %v4624
        %v4683 = vadd.f32 %v4212, %v4627
        %v4684 = vadd.f32 %v4213, %v4632
        %v4685 = vadd.f32 %v4214, %v4635
        %v4686 = vadd.f32 %v4215, %v4640
        %v4687 = vadd.f32 %v4216, %v4643
        %v4688 = vadd.f32 %v4217, %v4648
        %v4689 = vadd.f32 %v4218, %v4651
        %v4690 = vld [vmem:[#allocation2 + $0x10] sm:$0x8]
        %s4691 = scalar_lea.vmem %s4, 512
        %v4692 = vld [vmem:[%s4691] sm:$0xf]
        %v4693 = vld [vmem:[%s4691 + $0x4] sm:$0xf]
        %v4694 = vld [vmem:[%s4691 + $0x8] sm:$0xf]
        %v4695 = vld [vmem:[%s4691 + $0xc] sm:$0xf]
        %v4696 = vld [vmem:[%s4691 + $0x10] sm:$0xf]
        %v4697 = vld [vmem:[%s4691 + $0x14] sm:$0xf]
        %v4698 = vld [vmem:[%s4691 + $0x18] sm:$0xf]
        %v4699 = vld [vmem:[%s4691 + $0x1c] sm:$0xf]
        %v4700 = vld [vmem:[%s4691 + $0x20] sm:$0xf]
        %v4701 = vld [vmem:[%s4691 + $0x24] sm:$0xf]
        %v4702 = vld [vmem:[%s4691 + $0x28] sm:$0xf]
        %v4703 = vld [vmem:[%s4691 + $0x2c] sm:$0xf]
        %v4704 = vld [vmem:[%s4691 + $0x30] sm:$0xf]
        %v4705 = vld [vmem:[%s4691 + $0x34] sm:$0xf]
        %v4706 = vld [vmem:[%s4691 + $0x38] sm:$0xf]
        %v4707 = vld [vmem:[%s4691 + $0x3c] sm:$0xf]
        %v4709 = vunpack.c.l.b16 %v4690
        %v4710 = vpack.c.b16 %v3848, %v4709
        %vm4711 = vcmask 1044480
        %v4712 = vrot.slane %v4710, 3
        %v4713 = vrot.slane %v3885, 3
        %v4714 = vsel %vm4711, %v4712, %v4713
        %v4715 = vrot.slane %v3886, 3
        %v4716 = vsel %vm4711, %v4713, %v4715
        %v4717 = vrot.slane %v3887, 3
        %v4718 = vsel %vm4711, %v4715, %v4717
        %v4719 = vrot.slane %v3888, 3
        %v4720 = vsel %vm4711, %v4717, %v4719
        %v4721 = vrot.slane %v3889, 3
        %v4722 = vsel %vm4711, %v4719, %v4721
        %v4723 = vrot.slane %v3890, 3
        %v4724 = vsel %vm4711, %v4721, %v4723
        %v4725 = vrot.slane %v3891, 3
        %v4726 = vsel %vm4711, %v4723, %v4725
        %v4727 = vrot.slane %v3892, 3
        %v4728 = vsel %vm4711, %v4725, %v4727
        %v4729 = vrot.slane %v3893, 3
        %v4730 = vsel %vm4711, %v4727, %v4729
        %v4731 = vrot.slane %v3894, 3
        %v4732 = vsel %vm4711, %v4729, %v4731
        %v4733 = vrot.slane %v3895, 3
        %v4734 = vsel %vm4711, %v4731, %v4733
        %v4735 = vrot.slane %v3896, 3
        %v4736 = vsel %vm4711, %v4733, %v4735
        %v4737 = vrot.slane %v3897, 3
        %v4738 = vsel %vm4711, %v4735, %v4737
        %v4739 = vrot.slane %v3898, 3
        %v4740 = vsel %vm4711, %v4737, %v4739
        %v4741 = vrot.slane %v3899, 3
        %v4742 = vsel %vm4711, %v4739, %v4741
        %v4743 = vrot.slane %v3900, 3
        %v4744 = vsel %vm4711, %v4741, %v4743
        %v4745 = vrot.slane %v3901, 3
        %v4746 = vsel %vm4711, %v4743, %v4745
        %v4747 = vrot.slane %v4239, 3
        %v4748 = vsel %vm4711, %v4745, %v4747
        %v4783 = vunpack.c.l.b16 %v4692
        %v4784 = vunpack.c.l.b16 %v4693
        %v4785 = vunpack.c.l.b16 %v4694
        %v4786 = vunpack.c.l.b16 %v4695
        %v4787 = vunpack.c.l.b16 %v4696
        %v4788 = vunpack.c.l.b16 %v4697
        %v4789 = vunpack.c.l.b16 %v4698
        %v4790 = vunpack.c.l.b16 %v4699
        %v4791 = vunpack.c.l.b16 %v4700
        %v4792 = vunpack.c.l.b16 %v4701
        %v4793 = vunpack.c.l.b16 %v4702
        %v4794 = vunpack.c.l.b16 %v4703
        %v4795 = vunpack.c.l.b16 %v4704
        %v4796 = vunpack.c.l.b16 %v4705
        %v4797 = vunpack.c.l.b16 %v4706
        %v4798 = vunpack.c.l.b16 %v4707
        %v4799 = vpack.c.b16 %v4784, %v4783
        %v4800 = vpack.c.b16 %v4786, %v4785
        %v4801 = vpack.c.b16 %v4788, %v4787
        %v4802 = vpack.c.b16 %v4790, %v4789
        %v4803 = vpack.c.b16 %v4792, %v4791
        %v4804 = vpack.c.b16 %v4794, %v4793
        %v4805 = vpack.c.b16 %v4796, %v4795
        %v4806 = vpack.c.b16 %v4798, %v4797
        %4815 = vmatprep.subr.bf16.mxu0 0
        %4816 = vmatpush1.bf16.msra.mxu0 %v4799
        %4817 = vmatprep.subr.bf16.mxu0 0
        %4818 = vmatpush1.bf16.msra.mxu0 %v4800
        %4819 = vmatprep.subr.bf16.mxu0 0
        %4820 = vmatpush1.bf16.msra.mxu0 %v4801
        %4821 = vmatprep.subr.bf16.mxu0 0
        %4822 = vmatpush1.bf16.msra.mxu0 %v4802
        %4823 = vmatprep.subr.bf16.mxu0 0
        %4824 = vmatpush1.bf16.msra.mxu0 %v4803
        %4825 = vmatprep.subr.bf16.mxu0 0
        %4826 = vmatpush1.bf16.msra.mxu0 %v4804
        %4827 = vmatprep.subr.bf16.mxu0 0
        %4828 = vmatpush1.bf16.msra.mxu0 %v4805
        %4829 = vmatprep.subr.bf16.mxu0 0
        %4830 = vmatpush1.bf16.msra.mxu0 %v4806
        %4831 = vmatprep.subr.bf16.mxu0 0
        %4832 = vmatpush1.bf16.msra.mxu0 0
        %4833 = vmatprep.subr.bf16.mxu0 0
        %4834 = vmatpush1.bf16.msra.mxu0 0
        %4835 = vmatprep.subr.bf16.mxu0 0
        %4836 = vmatpush1.bf16.msra.mxu0 0
        %4837 = vmatprep.subr.bf16.mxu0 0
        %4838 = vmatpush1.bf16.msra.mxu0 0
        %4839 = vmatprep.subr.bf16.mxu0 0
        %4840 = vmatpush1.bf16.msra.mxu0 0
        %4841 = vmatprep.subr.bf16.mxu0 0
        %4842 = vmatpush1.bf16.msra.mxu0 0
        %4843 = vmatprep.subr.bf16.mxu0 0
        %4844 = vmatpush1.bf16.msra.mxu0 0
        %4845 = vmatprep.subr.bf16.mxu0 0
        %4846 = vmatpush1.bf16.msra.mxu0 0
        %4847 = vmatprep.mubr.bf16.mxu0 0
        %4848 = vmatmul.mubr.bf16.gmra.mrb[0].mxu0 %v4714
        %v4849 = vpop.f32.mrb[0].mxu0
        %v4850 = vadd.f32 0.0, %v4849
        %v4851 = vpop.f32.mrb[0].mxu0
        %v4852 = vpop.f32.mrb[0].mxu0
        %v4853 = vadd.f32 0.0, %v4852
        %v4854 = vpop.f32.mrb[0].mxu0
        %4855 = vmatprep.mubr.bf16.mxu0 0
        %4856 = vmatmul.mubr.bf16.gmra.mrb[0].mxu0 %v4716
        %v4857 = vpop.f32.mrb[0].mxu0
        %v4858 = vadd.f32 0.0, %v4857
        %v4859 = vpop.f32.mrb[0].mxu0
        %v4860 = vpop.f32.mrb[0].mxu0
        %v4861 = vadd.f32 0.0, %v4860
        %v4862 = vpop.f32.mrb[0].mxu0
        %4863 = vmatprep.mubr.bf16.mxu0 0
        %4864 = vmatmul.mubr.bf16.gmra.mrb[0].mxu0 %v4718
        %v4865 = vpop.f32.mrb[0].mxu0
        %v4866 = vadd.f32 0.0, %v4865
        %v4867 = vpop.f32.mrb[0].mxu0
        %v4868 = vpop.f32.mrb[0].mxu0
        %v4869 = vadd.f32 0.0, %v4868
        %v4870 = vpop.f32.mrb[0].mxu0
        %4871 = vmatprep.mubr.bf16.mxu0 0
        %4872 = vmatmul.mubr.bf16.gmra.mrb[0].mxu0 %v4720
        %v4873 = vpop.f32.mrb[0].mxu0
        %v4874 = vadd.f32 0.0, %v4873
        %v4875 = vpop.f32.mrb[0].mxu0
        %v4876 = vpop.f32.mrb[0].mxu0
        %v4877 = vadd.f32 0.0, %v4876
        %v4878 = vpop.f32.mrb[0].mxu0
        %4879 = vmatprep.mubr.bf16.mxu0 0
        %4880 = vmatmul.mubr.bf16.gmra.mrb[0].mxu0 %v4722
        %v4881 = vpop.f32.mrb[0].mxu0
        %v4882 = vadd.f32 0.0, %v4881
        %v4883 = vpop.f32.mrb[0].mxu0
        %v4884 = vpop.f32.mrb[0].mxu0
        %v4885 = vadd.f32 0.0, %v4884
        %v4886 = vpop.f32.mrb[0].mxu0
        %4887 = vmatprep.mubr.bf16.mxu0 0
        %4888 = vmatmul.mubr.bf16.gmra.mrb[0].mxu0 %v4724
        %v4889 = vpop.f32.mrb[0].mxu0
        %v4890 = vadd.f32 0.0, %v4889
        %v4891 = vpop.f32.mrb[0].mxu0
        %v4892 = vpop.f32.mrb[0].mxu0
        %v4893 = vadd.f32 0.0, %v4892
        %v4894 = vpop.f32.mrb[0].mxu0
        %4895 = vmatprep.mubr.bf16.mxu0 0
        %4896 = vmatmul.mubr.bf16.gmra.mrb[0].mxu0 %v4726
        %v4897 = vpop.f32.mrb[0].mxu0
        %v4898 = vadd.f32 0.0, %v4897
        %v4899 = vpop.f32.mrb[0].mxu0
        %v4900 = vpop.f32.mrb[0].mxu0
        %v4901 = vadd.f32 0.0, %v4900
        %v4902 = vpop.f32.mrb[0].mxu0
        %4903 = vmatprep.mubr.bf16.mxu0 0
        %4904 = vmatmul.mubr.bf16.gmra.mrb[0].mxu0 %v4728
        %v4905 = vpop.f32.mrb[0].mxu0
        %v4906 = vadd.f32 0.0, %v4905
        %v4907 = vpop.f32.mrb[0].mxu0
        %v4908 = vpop.f32.mrb[0].mxu0
        %v4909 = vadd.f32 0.0, %v4908
        %v4910 = vpop.f32.mrb[0].mxu0
        %4911 = vmatprep.mubr.bf16.mxu0 0
        %4912 = vmatmul.mubr.bf16.gmra.mrb[0].mxu0 %v4730
        %v4913 = vpop.f32.mrb[0].mxu0
        %v4914 = vadd.f32 0.0, %v4913
        %v4915 = vpop.f32.mrb[0].mxu0
        %v4916 = vpop.f32.mrb[0].mxu0
        %v4917 = vadd.f32 0.0, %v4916
        %v4918 = vpop.f32.mrb[0].mxu0
        %4919 = vmatprep.mubr.bf16.mxu0 0
        %4920 = vmatmul.mubr.bf16.gmra.mrb[0].mxu0 %v4732
        %v4921 = vpop.f32.mrb[0].mxu0
        %v4922 = vadd.f32 0.0, %v4921
        %v4923 = vpop.f32.mrb[0].mxu0
        %v4924 = vpop.f32.mrb[0].mxu0
        %v4925 = vadd.f32 0.0, %v4924
        %v4926 = vpop.f32.mrb[0].mxu0
        %4927 = vmatprep.mubr.bf16.mxu0 0
        %4928 = vmatmul.mubr.bf16.gmra.mrb[0].mxu0 %v4734
        %v4929 = vpop.f32.mrb[0].mxu0
        %v4930 = vadd.f32 0.0, %v4929
        %v4931 = vpop.f32.mrb[0].mxu0
        %v4932 = vpop.f32.mrb[0].mxu0
        %v4933 = vadd.f32 0.0, %v4932
        %v4934 = vpop.f32.mrb[0].mxu0
        %4935 = vmatprep.mubr.bf16.mxu0 0
        %4936 = vmatmul.mubr.bf16.gmra.mrb[0].mxu0 %v4736
        %v4937 = vpop.f32.mrb[0].mxu0
        %v4938 = vadd.f32 0.0, %v4937
        %v4939 = vpop.f32.mrb[0].mxu0
        %v4940 = vpop.f32.mrb[0].mxu0
        %v4941 = vadd.f32 0.0, %v4940
        %v4942 = vpop.f32.mrb[0].mxu0
        %4943 = vmatprep.mubr.bf16.mxu0 0
        %4944 = vmatmul.mubr.bf16.gmra.mrb[0].mxu0 %v4738
        %v4945 = vpop.f32.mrb[0].mxu0
        %v4946 = vadd.f32 0.0, %v4945
        %v4947 = vpop.f32.mrb[0].mxu0
        %v4948 = vpop.f32.mrb[0].mxu0
        %v4949 = vadd.f32 0.0, %v4948
        %v4950 = vpop.f32.mrb[0].mxu0
        %4951 = vmatprep.mubr.bf16.mxu0 0
        %4952 = vmatmul.mubr.bf16.gmra.mrb[0].mxu0 %v4740
        %v4953 = vpop.f32.mrb[0].mxu0
        %v4954 = vadd.f32 0.0, %v4953
        %v4955 = vpop.f32.mrb[0].mxu0
        %v4956 = vpop.f32.mrb[0].mxu0
        %v4957 = vadd.f32 0.0, %v4956
        %v4958 = vpop.f32.mrb[0].mxu0
        %4959 = vmatprep.mubr.bf16.mxu0 0
        %4960 = vmatmul.mubr.bf16.gmra.mrb[0].mxu0 %v4742
        %v4961 = vpop.f32.mrb[0].mxu0
        %v4962 = vadd.f32 0.0, %v4961
        %v4963 = vpop.f32.mrb[0].mxu0
        %v4964 = vpop.f32.mrb[0].mxu0
        %v4965 = vadd.f32 0.0, %v4964
        %v4966 = vpop.f32.mrb[0].mxu0
        %4967 = vmatprep.mubr.bf16.mxu0 0
        %4968 = vmatmul.mubr.bf16.gmra.mrb[0].mxu0 %v4744
        %v4969 = vpop.f32.mrb[0].mxu0
        %v4970 = vadd.f32 0.0, %v4969
        %v4971 = vpop.f32.mrb[0].mxu0
        %v4972 = vpop.f32.mrb[0].mxu0
        %v4973 = vadd.f32 0.0, %v4972
        %v4974 = vpop.f32.mrb[0].mxu0
        %4975 = vmatprep.mubr.bf16.mxu0 0
        %4976 = vmatmul.mubr.bf16.gmra.mrb[0].mxu0 %v4746
        %v4977 = vpop.f32.mrb[0].mxu0
        %v4978 = vadd.f32 0.0, %v4977
        %v4979 = vpop.f32.mrb[0].mxu0
        %v4980 = vpop.f32.mrb[0].mxu0
        %v4981 = vadd.f32 0.0, %v4980
        %v4982 = vpop.f32.mrb[0].mxu0
        %4983 = vmatprep.mubr.bf16.mxu0 0
        %4984 = vmatmul.mubr.bf16.gmra.mrb[0].mxu0 %v4748
        %v4985 = vpop.f32.mrb[0].mxu0
        %v4986 = vadd.f32 0.0, %v4985
        %v4987 = vpop.f32.mrb[0].mxu0
        %v4988 = vpop.f32.mrb[0].mxu0
        %v4989 = vadd.f32 0.0, %v4988
        %v4990 = vpop.f32.mrb[0].mxu0
        %4991 = vdwg.mxu0
        %v4992 = vadd.f32 %v4654, %v4850
        %v4993 = vadd.f32 %v4655, %v4853
        %v4994 = vadd.f32 %v4656, %v4858
        %v4995 = vadd.f32 %v4657, %v4861
        %v4996 = vadd.f32 %v4658, %v4866
        %v4997 = vadd.f32 %v4659, %v4869
        %v4998 = vadd.f32 %v4660, %v4874
        %v4999 = vadd.f32 %v4661, %v4877
        %v5000 = vadd.f32 %v4662, %v4882
        %v5001 = vadd.f32 %v4663, %v4885
        %v5002 = vadd.f32 %v4664, %v4890
        %v5003 = vadd.f32 %v4665, %v4893
        %v5004 = vadd.f32 %v4666, %v4898
        %v5005 = vadd.f32 %v4667, %v4901
        %v5006 = vadd.f32 %v4668, %v4906
        %v5007 = vadd.f32 %v4669, %v4909
        %v5008 = vadd.f32 %v4670, %v4914
        %v5009 = vadd.f32 %v4671, %v4917
        %v5010 = vadd.f32 %v4672, %v4922
        %v5011 = vadd.f32 %v4673, %v4925
        %v5012 = vadd.f32 %v4674, %v4930
        %v5013 = vadd.f32 %v4675, %v4933
        %v5014 = vadd.f32 %v4676, %v4938
        %v5015 = vadd.f32 %v4677, %v4941
        %v5016 = vadd.f32 %v4678, %v4946
        %v5017 = vadd.f32 %v4679, %v4949
        %v5018 = vadd.f32 %v4680, %v4954
        %v5019 = vadd.f32 %v4681, %v4957
        %v5020 = vadd.f32 %v4682, %v4962
        %v5021 = vadd.f32 %v4683, %v4965
        %v5022 = vadd.f32 %v4684, %v4970
        %v5023 = vadd.f32 %v4685, %v4973
        %v5024 = vadd.f32 %v4686, %v4978
        %v5025 = vadd.f32 %v4687, %v4981
        %v5026 = vadd.f32 %v4688, %v4986
        %v5027 = vadd.f32 %v4689, %v4989
        %v5028 = vld [vmem:[%s5] sm:$0x1]
        %v5030 = vlaneseq
        %v5031 = vshrl.u32 %v5030, 7
        %v5032 = vsub.s32 0, %v5031
        %v5033 = vrot.slane %v5028, %v5032
        %v5035 = vadd.f32 %v4992, %v5033
        %v5036 = vadd.f32 %v4993, %v5033
        %v5037 = vadd.f32 %v4994, %v5033
        %v5038 = vadd.f32 %v4995, %v5033
        %v5039 = vadd.f32 %v4996, %v5033
        %v5040 = vadd.f32 %v4997, %v5033
        %v5041 = vadd.f32 %v4998, %v5033
        %v5042 = vadd.f32 %v4999, %v5033
        %v5043 = vadd.f32 %v5000, %v5033
        %v5044 = vadd.f32 %v5001, %v5033
        %v5045 = vadd.f32 %v5002, %v5033
        %v5046 = vadd.f32 %v5003, %v5033
        %v5047 = vadd.f32 %v5004, %v5033
        %v5048 = vadd.f32 %v5005, %v5033
        %v5049 = vadd.f32 %v5006, %v5033
        %v5050 = vadd.f32 %v5007, %v5033
        %v5051 = vadd.f32 %v5008, %v5033
        %v5052 = vadd.f32 %v5009, %v5033
        %v5053 = vadd.f32 %v5010, %v5033
        %v5054 = vadd.f32 %v5011, %v5033
        %v5055 = vadd.f32 %v5012, %v5033
        %v5056 = vadd.f32 %v5013, %v5033
        %v5057 = vadd.f32 %v5014, %v5033
        %v5058 = vadd.f32 %v5015, %v5033
        %v5059 = vadd.f32 %v5016, %v5033
        %v5060 = vadd.f32 %v5017, %v5033
        %v5061 = vadd.f32 %v5018, %v5033
        %v5062 = vadd.f32 %v5019, %v5033
        %v5063 = vadd.f32 %v5020, %v5033
        %v5064 = vadd.f32 %v5021, %v5033
        %v5065 = vadd.f32 %v5022, %v5033
        %v5066 = vadd.f32 %v5023, %v5033
        %v5067 = vadd.f32 %v5024, %v5033
        %v5068 = vadd.f32 %v5025, %v5033
        %v5069 = vadd.f32 %v5026, %v5033
        %v5070 = vadd.f32 %v5027, %v5033
        %s5071 = sld [smem:[#allocation3 + $0x1]]
        %vm5072 = vcmp.gt.f32.partialorder %v5035, 0.0
        %vm5073 = vcmp.gt.f32.partialorder %v5036, 0.0
        %vm5074 = vcmp.gt.f32.partialorder %v5037, 0.0
        %vm5075 = vcmp.gt.f32.partialorder %v5038, 0.0
        %vm5076 = vcmp.gt.f32.partialorder %v5039, 0.0
        %vm5077 = vcmp.gt.f32.partialorder %v5040, 0.0
        %vm5078 = vcmp.gt.f32.partialorder %v5041, 0.0
        %vm5079 = vcmp.gt.f32.partialorder %v5042, 0.0
        %vm5080 = vcmp.gt.f32.partialorder %v5043, 0.0
        %vm5081 = vcmp.gt.f32.partialorder %v5044, 0.0
        %vm5082 = vcmp.gt.f32.partialorder %v5045, 0.0
        %vm5083 = vcmp.gt.f32.partialorder %v5046, 0.0
        %vm5084 = vcmp.gt.f32.partialorder %v5047, 0.0
        %vm5085 = vcmp.gt.f32.partialorder %v5048, 0.0
        %vm5086 = vcmp.gt.f32.partialorder %v5049, 0.0
        %vm5087 = vcmp.gt.f32.partialorder %v5050, 0.0
        %vm5088 = vcmp.gt.f32.partialorder %v5051, 0.0
        %vm5089 = vcmp.gt.f32.partialorder %v5052, 0.0
        %vm5090 = vcmp.gt.f32.partialorder %v5053, 0.0
        %vm5091 = vcmp.gt.f32.partialorder %v5054, 0.0
        %vm5092 = vcmp.gt.f32.partialorder %v5055, 0.0
        %vm5093 = vcmp.gt.f32.partialorder %v5056, 0.0
        %vm5094 = vcmp.gt.f32.partialorder %v5057, 0.0
        %vm5095 = vcmp.gt.f32.partialorder %v5058, 0.0
        %vm5096 = vcmp.gt.f32.partialorder %v5059, 0.0
        %vm5097 = vcmp.gt.f32.partialorder %v5060, 0.0
        %vm5098 = vcmp.gt.f32.partialorder %v5061, 0.0
        %vm5099 = vcmp.gt.f32.partialorder %v5062, 0.0
        %vm5100 = vcmp.gt.f32.partialorder %v5063, 0.0
        %vm5101 = vcmp.gt.f32.partialorder %v5064, 0.0
        %vm5102 = vcmp.gt.f32.partialorder %v5065, 0.0
        %vm5103 = vcmp.gt.f32.partialorder %v5066, 0.0
        %vm5104 = vcmp.gt.f32.partialorder %v5067, 0.0
        %vm5105 = vcmp.gt.f32.partialorder %v5068, 0.0
        %vm5106 = vcmp.gt.f32.partialorder %v5069, 0.0
        %vm5107 = vcmp.gt.f32.partialorder %v5070, 0.0
        %v5108 = vstv %s5071
        %v5109 = vmul.f32 %v5108, %v5035
        %v5110 = vmul.f32 %v5108, %v5036
        %v5111 = vmul.f32 %v5108, %v5037
        %v5112 = vmul.f32 %v5108, %v5038
        %v5113 = vmul.f32 %v5108, %v5039
        %v5114 = vmul.f32 %v5108, %v5040
        %v5115 = vmul.f32 %v5108, %v5041
        %v5116 = vmul.f32 %v5108, %v5042
        %v5117 = vmul.f32 %v5108, %v5043
        %v5118 = vmul.f32 %v5108, %v5044
        %v5119 = vmul.f32 %v5108, %v5045
        %v5120 = vmul.f32 %v5108, %v5046
        %v5121 = vmul.f32 %v5108, %v5047
        %v5122 = vmul.f32 %v5108, %v5048
        %v5123 = vmul.f32 %v5108, %v5049
        %v5124 = vmul.f32 %v5108, %v5050
        %v5125 = vmul.f32 %v5108, %v5051
        %v5126 = vmul.f32 %v5108, %v5052
        %v5127 = vmul.f32 %v5108, %v5053
        %v5128 = vmul.f32 %v5108, %v5054
        %v5129 = vmul.f32 %v5108, %v5055
        %v5130 = vmul.f32 %v5108, %v5056
        %v5131 = vmul.f32 %v5108, %v5057
        %v5132 = vmul.f32 %v5108, %v5058
        %v5133 = vmul.f32 %v5108, %v5059
        %v5134 = vmul.f32 %v5108, %v5060
        %v5135 = vmul.f32 %v5108, %v5061
        %v5136 = vmul.f32 %v5108, %v5062
        %v5137 = vmul.f32 %v5108, %v5063
        %v5138 = vmul.f32 %v5108, %v5064
        %v5139 = vmul.f32 %v5108, %v5065
        %v5140 = vmul.f32 %v5108, %v5066
        %v5141 = vmul.f32 %v5108, %v5067
        %v5142 = vmul.f32 %v5108, %v5068
        %v5143 = vmul.f32 %v5108, %v5069
        %v5144 = vmul.f32 %v5108, %v5070
        %v5145 = vsel %vm5072, %v5035, %v5109
        %v5146 = vsel %vm5073, %v5036, %v5110
        %v5147 = vsel %vm5074, %v5037, %v5111
        %v5148 = vsel %vm5075, %v5038, %v5112
        %v5149 = vsel %vm5076, %v5039, %v5113
        %v5150 = vsel %vm5077, %v5040, %v5114
        %v5151 = vsel %vm5078, %v5041, %v5115
        %v5152 = vsel %vm5079, %v5042, %v5116
        %v5153 = vsel %vm5080, %v5043, %v5117
        %v5154 = vsel %vm5081, %v5044, %v5118
        %v5155 = vsel %vm5082, %v5045, %v5119
        %v5156 = vsel %vm5083, %v5046, %v5120
        %v5157 = vsel %vm5084, %v5047, %v5121
        %v5158 = vsel %vm5085, %v5048, %v5122
        %v5159 = vsel %vm5086, %v5049, %v5123
        %v5160 = vsel %vm5087, %v5050, %v5124
        %v5161 = vsel %vm5088, %v5051, %v5125
        %v5162 = vsel %vm5089, %v5052, %v5126
        %v5163 = vsel %vm5090, %v5053, %v5127
        %v5164 = vsel %vm5091, %v5054, %v5128
        %v5165 = vsel %vm5092, %v5055, %v5129
        %v5166 = vsel %vm5093, %v5056, %v5130
        %v5167 = vsel %vm5094, %v5057, %v5131
        %v5168 = vsel %vm5095, %v5058, %v5132
        %v5169 = vsel %vm5096, %v5059, %v5133
        %v5170 = vsel %vm5097, %v5060, %v5134
        %v5171 = vsel %vm5098, %v5061, %v5135
        %v5172 = vsel %vm5099, %v5062, %v5136
        %v5173 = vsel %vm5100, %v5063, %v5137
        %v5174 = vsel %vm5101, %v5064, %v5138
        %v5175 = vsel %vm5102, %v5065, %v5139
        %v5176 = vsel %vm5103, %v5066, %v5140
        %v5177 = vsel %vm5104, %v5067, %v5141
        %v5178 = vsel %vm5105, %v5068, %v5142
        %v5179 = vsel %vm5106, %v5069, %v5143
        %v5180 = vsel %vm5107, %v5070, %v5144
        %5181 = vst [vmem:[%s292] sm:$0xff] %v5145
        %5182 = vst [vmem:[%s292 + $0x8] sm:$0xff] %v5146
        %5183 = vst [vmem:[%s292 + $0x10] sm:$0xff] %v5147
        %5184 = vst [vmem:[%s292 + $0x18] sm:$0xff] %v5148
        %5185 = vst [vmem:[%s292 + $0x20] sm:$0xff] %v5149
        %5186 = vst [vmem:[%s292 + $0x28] sm:$0xff] %v5150
        %5187 = vst [vmem:[%s292 + $0x30] sm:$0xff] %v5151
        %5188 = vst [vmem:[%s292 + $0x38] sm:$0xff] %v5152
        %5189 = vst [vmem:[%s292 + $0x40] sm:$0xff] %v5153
        %5190 = vst [vmem:[%s292 + $0x48] sm:$0xff] %v5154
        %5191 = vst [vmem:[%s292 + $0x50] sm:$0xff] %v5155
        %5192 = vst [vmem:[%s292 + $0x58] sm:$0xff] %v5156
        %5193 = vst [vmem:[%s292 + $0x60] sm:$0xff] %v5157
        %5194 = vst [vmem:[%s292 + $0x68] sm:$0xff] %v5158
        %5195 = vst [vmem:[%s292 + $0x70] sm:$0xff] %v5159
        %5196 = vst [vmem:[%s292 + $0x78] sm:$0xff] %v5160
        %5197 = vst [vmem:[%s292 + $0x80] sm:$0xff] %v5161
        %5198 = vst [vmem:[%s292 + $0x88] sm:$0xff] %v5162
        %5199 = vst [vmem:[%s292 + $0x90] sm:$0xff] %v5163
        %5200 = vst [vmem:[%s292 + $0x98] sm:$0xff] %v5164
        %5201 = vst [vmem:[%s292 + $0xa0] sm:$0xff] %v5165
        %5202 = vst [vmem:[%s292 + $0xa8] sm:$0xff] %v5166
        %5203 = vst [vmem:[%s292 + $0xb0] sm:$0xff] %v5167
        %5204 = vst [vmem:[%s292 + $0xb8] sm:$0xff] %v5168
        %5205 = vst [vmem:[%s292 + $0xc0] sm:$0xff] %v5169
        %5206 = vst [vmem:[%s292 + $0xc8] sm:$0xff] %v5170
        %5207 = vst [vmem:[%s292 + $0xd0] sm:$0xff] %v5171
        %5208 = vst [vmem:[%s292 + $0xd8] sm:$0xff] %v5172
        %5209 = vst [vmem:[%s292 + $0xe0] sm:$0xff] %v5173
        %5210 = vst [vmem:[%s292 + $0xe8] sm:$0xff] %v5174
        %5211 = vst [vmem:[%s292 + $0xf0] sm:$0xff] %v5175
        %5212 = vst [vmem:[%s292 + $0xf8] sm:$0xff] %v5176
        %5213 = vst [vmem:[%s292 + $0x100] sm:$0xff] %v5177
        %5214 = vst [vmem:[%s292 + $0x108] sm:$0xff] %v5178
        %5215 = vst [vmem:[%s292 + $0x110] sm:$0xff] %v5179
        %5216 = vst [vmem:[%s292 + $0x118] sm:$0xff] %v5180
        %p5217 = scmp.lt.s32.totalorder %s19, 1
        %s5218 = scalar_select %p5217, %s19, 1
        %s5219 = smul.addr %s5218, 36
        %s5220 = smul.addr %s5219, 8
        %s5221 = scalar_lea.vmem %s7, %s5220
        // Predicated region
        $region53: #{_lambda_.1} parent=47 // pred_check
          %p5222 = pneg %p189
        $region54: #{_lambda_.1} parent=47 // pred_check_branch
          %5224 = sbr.rel (%p5222) target = $region56
        $region55: #{_lambda_.1} parent=47 // pred_region
          _
        $region56: #{_lambda_.1} parent=47 // pred_fallthru
          _
      $region48: #{_lambda_.1} parent=5 // pred_fallthru
        _
      %p5225 = scmp.le.s32.totalorder 2, %s14
      // Predicated region
      $region57: #{_lambda_.1} parent=5 // pred_check
        %p5226 = pneg %p5225
      $region58: #{_lambda_.1} parent=5 // pred_check_branch
        %5228 = sbr.rel (%p5226) target = $region60
      $region59: #{_lambda_.1} parent=5 // pred_region
        %s5229 = ssub.s32 %s14, 2
        // Predicated region
        $region61: #{_lambda_.1} parent=59 // pred_check
          %p5230 = pneg %p195
        $region62: #{_lambda_.1} parent=59 // pred_check_branch
          %5232 = sbr.rel (%p5230) target = $region64
        $region63: #{_lambda_.1} parent=59 // pred_region
          %p5233 = scmp.lt.s32.totalorder %s20, 1
          %s5234 = scalar_select %p5233, %s20, 1
          %s5235 = smul.addr %s5234, 36
          %s5236 = smul.addr %s5235, 8
          %s5237 = scalar_lea.vmem %s7, %s5236
        $region64: #{_lambda_.1} parent=59 // pred_fallthru
          _
      $region60: #{_lambda_.1} parent=5 // pred_fallthru
        _
    $region6: #{_lambda_.1} parent=1 // loop_footer
      %s18 = sadd.s32 1, %s14
    $region7: #{_lambda_.1} parent=1 // loop_footer_branch
      %13 = sbr.rel target = $region3
    $region8: #{_lambda_.1} parent=1 // loop_exit
      _
    %5238 = vsyncpa [#allocation4], 1
    %s5239 = scalar_lea.sflag [#allocation4], 1
    %5240 = vsyncpa %s5239, 1

</llo_original>
